<compile_context>
chip_gen: v7x
topology: tpu7x:2x2x1
jax: 0.10.0
libtpu: 0.0.40
codegen_flags: <defaults>
</compile_context>

<pallas_src>
import functools
import numpy as np
import jax
import jax.numpy as jnp
from jax.experimental import pallas as pl
from jax.experimental.pallas import tpu as pltpu

LN_EPS = 1e-5  # torch.nn.LayerNorm default


def _layernorm(v, g, b):
    mu = jnp.mean(v, axis=-1, keepdims=True)
    var = jnp.mean((v - mu) ** 2, axis=-1, keepdims=True)
    return (v - mu) * jax.lax.rsqrt(var + LN_EPS) * g + b


def _erf_poly(x):
    # Abramowitz & Stegun 7.1.26, |error| < 1.5e-7.  Elementwise exp/div only,
    # so it lowers cleanly on every TPU generation.
    p = 0.3275911
    a1, a2, a3, a4, a5 = (0.254829592, -0.284496736, 1.421413741,
                          -1.453152027, 1.061405429)
    ax = jnp.abs(x)
    t = 1.0 / (1.0 + p * ax)
    poly = ((((a5 * t + a4) * t + a3) * t + a2) * t + a1) * t
    y = 1.0 - poly * jnp.exp(-ax * ax)
    return jnp.where(x < 0.0, -y, y)


def _gelu_exact(x):
    # PyTorch nn.GELU default (exact erf form).
    return 0.5 * x * (1.0 + _erf_poly(x * 0.7071067811865476))


def _trans_depth_kernel(x_ref, h_ref, wqkv_ref, wo_ref, w1_ref, w2_ref,
                        vec_ref, o_ref, *, batch, seq, heads, dhp, dim,
                        mlp_dim, scale):
    d = pl.program_id(0)

    # Output block index is constant across the depth axis -> the running
    # activation stays resident in VMEM for the whole stack (accumulator
    # pattern); HBM writeback only happens once at the end.
    @pl.when(d == 0)
    def _():
        o_ref[...] = x_ref[...]

    bn = batch * seq
    x = o_ref[...].reshape(bn, dim)          # (B*N, dim) f32 running state
    h = h_ref[...].reshape(bn, dim)          # (B*N, dim) f32 shared residual

    # Packed per-layer vector slab: rows are [bo, ln1_g, ln1_b, b1, b2,
    # ln2_g, ln2_b, pad], lane-padded to KMAX.
    vec = vec_ref[0]                          # (8, KMAX) f32
    bo = vec[0:1, :dim]
    ln1g = vec[1:2, :dim]
    ln1b = vec[2:3, :dim]
    b1 = vec[3:4, :mlp_dim]
    b2 = vec[4:5, :dim]
    ln2g = vec[5:6, :dim]
    ln2b = vec[6:7, :dim]

    xb = x.astype(jnp.bfloat16)

    # ---- ConvAttention (implemented as Linear-QKV MHA, no qkv bias) --------
    # qkv columns are laid out head-major as [q_h | k_h | v_h], each padded to
    # dhp = 128 lanes, so every slice below is 128-lane aligned.
    qkv = jnp.dot(xb, wqkv_ref[0], preferred_element_type=jnp.float32)

    att_rows = []
    for b in range(batch):                    # attention is per-sample
        qkv_b = qkv[b * seq:(b + 1) * seq, :]
        head_outs = []
        # TODO(synk): for heads >> 2 switch to lax.fori_loop(unroll=small) to
        # bound vreg pressure; fully unrolled is fine for heads == 2.
        for hh in range(heads):
            base = hh * 3 * dhp
            q = qkv_b[:, base:base + dhp].astype(jnp.bfloat16)
            k = qkv_b[:, base + dhp:base + 2 * dhp].astype(jnp.bfloat16)
            v = qkv_b[:, base + 2 * dhp:base + 3 * dhp].astype(jnp.bfloat16)
            # NT contraction: K is never transposed.
            s = jnp.einsum('nd,md->nm', q, k,
                           preferred_element_type=jnp.float32) * scale
            s = s - jnp.max(s, axis=-1, keepdims=True)
            p = jnp.exp(s)
            p = p * pl.reciprocal(jnp.sum(p, axis=-1, keepdims=True),
                                  approx=True)
            head_outs.append(jnp.dot(p.astype(jnp.bfloat16), v,
                                     preferred_element_type=jnp.float32))
        # 128-wide, lane-aligned pieces -> whole-vreg concat.
        att_rows.append(jnp.concatenate(head_outs, axis=-1))
    att = jnp.concatenate(att_rows, axis=0)   # (B*N, heads*dhp) f32

    # Out-projection over all B*N rows (padded rows of wo are zero).
    proj = jnp.dot(att.astype(jnp.bfloat16), wo_ref[0],
                   preferred_element_type=jnp.float32) + bo
    x = _layernorm(proj, ln1g, ln1b) + x + h  # Dropout == identity (eval)

    # ---- MLP: Linear -> exact GELU -> Linear -------------------------------
    mid = jnp.dot(x.astype(jnp.bfloat16), w1_ref[0],
                  preferred_element_type=jnp.float32) + b1
    mid = _gelu_exact(mid)
    mlp = jnp.dot(mid.astype(jnp.bfloat16), w2_ref[0],
                  preferred_element_type=jnp.float32) + b2
    x = _layernorm(mlp, ln2g, ln2b) + x

    o_ref[...] = x.reshape(batch, seq, dim).astype(o_ref.dtype)


def trans_depth_forward(xh, kp):
    """xh: (B, N, 2*dim) float32.  kp: packed kernel params.  -> (B, N, dim)."""
    B, N, dim2 = xh.shape
    dim = dim2 // 2
    heads, dim_head, dhp = kp["heads"], kp["dim_head"], kp["dhp"]
    mlp_dim = kp["w1"].shape[-1]
    depth = kp["wqkv_p"].shape[0]
    scale = float(dim_head) ** -0.5

    # torch.chunk(x, 2, dim=2) — plain-JAX glue.
    x, h = jnp.split(xh, 2, axis=2)

    # Whole batch in one block -> every linear matmul sees M = B*N rows.
    tok_spec = pl.BlockSpec((B, N, dim), lambda d: (0, 0, 0))

    def layer_spec(arr):   # one layer's weights per depth step (fetched once)
        return pl.BlockSpec((1,) + arr.shape[1:], lambda d: (d, 0, 0))

    kernel = functools.partial(_trans_depth_kernel, batch=B, seq=N,
                               heads=heads, dhp=dhp, dim=dim,
                               mlp_dim=mlp_dim, scale=scale)

    return pl.pallas_call(
        kernel,
        out_shape=jax.ShapeDtypeStruct((B, N, dim), jnp.float32),
        grid=(depth,),
        in_specs=[tok_spec, tok_spec,
                  layer_spec(kp["wqkv_p"]), layer_spec(kp["wo_p"]),
                  layer_spec(kp["w1"]), layer_spec(kp["w2"]),
                  layer_spec(kp["vecs"])],
        out_specs=tok_spec,
        compiler_params=pltpu.CompilerParams(
            dimension_semantics=("arbitrary",),      # depth is sequential
            vmem_limit_bytes=64 * 1024 * 1024),      # explicit budget (v7x-safe)
    )(x, h, kp["wqkv_p"], kp["wo_p"], kp["w1"], kp["w2"], kp["vecs"])


# ----------------------------------------------------------------------------
# Parameters: canonical (reference) layout + lane-aligned packed kernel layout
# ----------------------------------------------------------------------------
def init_params(key, dim, depth, heads, dim_head, mlp_dim):
    inner = heads * dim_head
    ks = iter(jax.random.split(key, 11 * depth))

    def mat(fin, fout):
        w = jax.random.normal(next(ks), (fin, fout), jnp.float32) / np.sqrt(fin)
        # Round-trip through bf16 so kernel (bf16 MXU operands) and f32
        # reference see identical weight values.
        return w.astype(jnp.bfloat16).astype(jnp.float32)

    def vec(n, s=0.02):
        return s * jax.random.normal(next(ks), (n,), jnp.float32)

    wqkv, wo, w1, w2 = [], [], [], []
    bo, b1, b2 = [], [], []
    ln1_g, ln1_b, ln2_g, ln2_b = [], [], [], []
    for _ in range(depth):
        wqkv.append(mat(dim, 3 * inner))
        wo.append(mat(inner, dim))
        w1.append(mat(dim, mlp_dim))
        w2.append(mat(mlp_dim, dim))
        bo.append(vec(dim))
        b1.append(vec(mlp_dim))
        b2.append(vec(dim))
        ln1_g.append(1.0 + vec(dim, 0.05))
        ln1_b.append(vec(dim))
        ln2_g.append(1.0 + vec(dim, 0.05))
        ln2_b.append(vec(dim))

    stack = lambda xs: jnp.stack(xs, axis=0)
    return dict(
        heads=heads, dim_head=dim_head,
        wqkv=stack(wqkv), wo=stack(wo), w1=stack(w1), w2=stack(w2),
        bo=stack(bo), b1=stack(b1), b2=stack(b2),
        ln1_g=stack(ln1_g), ln1_b=stack(ln1_b),
        ln2_g=stack(ln2_g), ln2_b=stack(ln2_b),
    )


def pack_params(params):
    """Host-side repack into the lane-aligned kernel layout (run once)."""
    heads, dim_head = params["heads"], params["dim_head"]
    depth, dim, _ = params["wqkv"].shape
    mlp_dim = params["w1"].shape[-1]
    dhp = max(128, ((dim_head + 127) // 128) * 128)   # per-head lane padding
    kmax = ((max(dim, mlp_dim) + 127) // 128) * 128

    # qkv: (depth, dim, 3*inner) -> head-major [q_h | k_h | v_h] blocks, each
    # padded to dhp lanes so in-kernel slices are 128-aligned.
    w = params["wqkv"].reshape(depth, dim, 3, heads, dim_head)
    w = jnp.transpose(w, (0, 1, 3, 2, 4))             # (depth, dim, heads, 3, dh)
    wqkv_p = jnp.zeros((depth, dim, heads, 3, dhp), jnp.float32)
    wqkv_p = wqkv_p.at[..., :dim_head].set(w)
    wqkv_p = wqkv_p.reshape(depth, dim, heads * 3 * dhp).astype(jnp.bfloat16)

    # wo: (depth, inner, dim) -> rows padded to dhp per head (padding rows=0).
    wo = params["wo"].reshape(depth, heads, dim_head, dim)
    wo_p = jnp.zeros((depth, heads, dhp, dim), jnp.float32)
    wo_p = wo_p.at[:, :, :dim_head, :].set(wo)
    wo_p = wo_p.reshape(depth, heads * dhp, dim).astype(jnp.bfloat16)

    # Eight tiny per-layer vectors packed into one slab (one DMA per step).
    vecs = jnp.zeros((depth, 8, kmax), jnp.float32)
    vecs = vecs.at[:, 0, :dim].set(params["bo"])
    vecs = vecs.at[:, 1, :dim].set(params["ln1_g"])
    vecs = vecs.at[:, 2, :dim].set(params["ln1_b"])
    vecs = vecs.at[:, 3, :mlp_dim].set(params["b1"])
    vecs = vecs.at[:, 4, :dim].set(params["b2"])
    vecs = vecs.at[:, 5, :dim].set(params["ln2_g"])
    vecs = vecs.at[:, 6, :dim].set(params["ln2_b"])

    return dict(
        heads=heads, dim_head=dim_head, dhp=dhp,
        wqkv_p=wqkv_p, wo_p=wo_p,
        w1=params["w1"].astype(jnp.bfloat16),
        w2=params["w2"].astype(jnp.bfloat16),
        vecs=vecs,
    )


# ----------------------------------------------------------------------------
# Pure-JAX f32 reference (canonical layout) for validation
# ----------------------------------------------------------------------------
def trans_depth_reference(xh, params):
    heads, dh = params["heads"], params["dim_head"]
    inner = heads * dh
    scale = float(dh) ** -0.5
    depth = params["wqkv"].shape[0]
    x, h = jnp.split(xh, 2, axis=2)

    def ln(v, g, b):
        mu = v.mean(-1, keepdims=True)
        var = ((v - mu) ** 2).mean(-1, keepdims=True)
        return (v - mu) / jnp.sqrt(var + LN_EPS) * g + b

    for d in range(depth):
        qkv = x @ params["wqkv"][d]
        q, k, v = jnp.split(qkv, 3, axis=-1)
        B, N, _ = q.shape
        q = q.reshape(B, N, heads, dh).transpose(0, 2, 1, 3)
        k = k.reshape(B, N, heads, dh).transpose(0, 2, 1, 3)
        v = v.reshape(B, N, heads, dh).transpose(0, 2, 1, 3)
        s = jnp.einsum('bhnd,bhmd->bhnm', q, k) * scale
        p = jax.nn.softmax(s, axis=-1)
        att = jnp.einsum('bhnm,bhmd->bhnd', p, v)
        att = att.transpose(0, 2, 1, 3).reshape(B, N, inner)
        proj = att @ params["wo"][d] + params["bo"][d]
        x = ln(proj, params["ln1_g"][d], params["ln1_b"][d]) + x + h
        mid = jax.nn.gelu(x @ params["w1"][d] + params["b1"][d],
                          approximate=False)
        mlp = mid @ params["w2"][d] + params["b2"][d]
        x = ln(mlp, params["ln2_g"][d], params["ln2_b"][d]) + x
    return x


if __name__ == "__main__":
    # Module-consistent small shapes: dim=128, img_size=8 -> N=64 tokens,
    # depth=2, heads=2, dim_head=64, mlp_dim=256.  Trans_depth input is the
    # concatenation [x | h] along dim=2 -> (B, N, 2*dim).
    B, IMG, DIM, DEPTH, HEADS, DIM_HEAD, MLP_DIM = 2, 8, 128, 2, 2, 64, 256
    N = IMG * IMG

    key = jax.random.PRNGKey(0)
    k_in, k_par = jax.random.split(key)
    xh = jax.random.normal(k_in, (B, N, 2 * DIM), jnp.float32)

    params = init_params(k_par, DIM, DEPTH, HEADS, DIM_HEAD, MLP_DIM)
    kp = pack_params(params)

    out = jax.block_until_ready(trans_depth_forward(xh, kp))
    assert out.shape == (B, N, DIM), out.shape
    assert bool(jnp.all(jnp.isfinite(out)))

    ref = trans_depth_reference(xh, params)
    max_err = float(jnp.max(jnp.abs(out - ref)))
    max_ref = float(jnp.max(jnp.abs(ref)))
    # Relative tolerance for bf16 MXU operands + approx softmax reciprocal.
    assert max_err <= 2e-2 * max(1.0, max_ref), (max_err, max_ref)
    print("KERNEL_OK")
</pallas_src>

<mosaic_0001>
module attributes {stable_mosaic.version = 11 : i64} {
  func.func @_trans_depth_kernel(%arg0: i32, %arg1: memref<2x64x128xf32, #tpu.memory_space<vmem>>, %arg2: memref<2x64x128xf32, #tpu.memory_space<vmem>>, %arg3: memref<1x128x768xbf16, #tpu.memory_space<vmem>>, %arg4: memref<1x256x128xbf16, #tpu.memory_space<vmem>>, %arg5: memref<1x128x256xbf16, #tpu.memory_space<vmem>>, %arg6: memref<1x256x128xbf16, #tpu.memory_space<vmem>>, %arg7: memref<1x8x256xf32, #tpu.memory_space<vmem>>, %arg8: memref<2x64x128xf32, #tpu.memory_space<vmem>>) attributes {dimension_semantics = [#tpu.dimension_semantics<arbitrary>], iteration_bounds = array<i64: 2>, scalar_prefetch = 0 : i64, scratch_operands = 0 : i64, tpu.core_type = #tpu.core_type<tc>, window_params = [{pipeline_mode = #tpu.pipeline_mode<synchronous>, transform_indices = @transform_0, window_bounds = array<i64: 2, 64, 128>}, {pipeline_mode = #tpu.pipeline_mode<synchronous>, transform_indices = @transform_1, window_bounds = array<i64: 2, 64, 128>}, {transform_indices = @transform_2, window_bounds = array<i64: 1, 128, 768>}, {transform_indices = @transform_3, window_bounds = array<i64: 1, 256, 128>}, {transform_indices = @transform_4, window_bounds = array<i64: 1, 128, 256>}, {transform_indices = @transform_5, window_bounds = array<i64: 1, 256, 128>}, {transform_indices = @transform_6, window_bounds = array<i64: 1, 8, 256>}, {pipeline_mode = #tpu.pipeline_mode<synchronous>, transform_indices = @transform_7, window_bounds = array<i64: 2, 64, 128>}]} {
    %c0_i32 = arith.constant 0 : i32
    %0 = arith.cmpi eq, %arg0, %c0_i32 : i32
    %1 = arith.extui %0 : i1 to i32
    %c0_i32_0 = arith.constant 0 : i32
    %2 = arith.cmpi ne, %1, %c0_i32_0 : i32
    scf.if %2 {
      %c0_72 = arith.constant 0 : index
      %c0_73 = arith.constant 0 : index
      %c0_74 = arith.constant 0 : index
      %216 = vector.load %arg1[%c0_72, %c0_73, %c0_74] : memref<2x64x128xf32, #tpu.memory_space<vmem>>, vector<2x64x128xf32>
      %c0_75 = arith.constant 0 : index
      %c0_76 = arith.constant 0 : index
      %c0_77 = arith.constant 0 : index
      %217 = vector.load %arg8[%c0_75, %c0_76, %c0_77] : memref<2x64x128xf32, #tpu.memory_space<vmem>>, vector<2x64x128xf32>
      tpu.vector_store %arg8[%c0_75, %c0_76, %c0_77], %216 {strides = array<i32>} : memref<2x64x128xf32, #tpu.memory_space<vmem>>, vector<2x64x128xf32>,
    } else {
    }
    %c0 = arith.constant 0 : index
    %c0_1 = arith.constant 0 : index
    %c0_2 = arith.constant 0 : index
    %3 = vector.load %arg8[%c0, %c0_1, %c0_2] : memref<2x64x128xf32, #tpu.memory_space<vmem>>, vector<2x64x128xf32>
    %4 = vector.shape_cast %3 : vector<2x64x128xf32> to vector<128x128xf32>
    %c0_3 = arith.constant 0 : index
    %c0_4 = arith.constant 0 : index
    %c0_5 = arith.constant 0 : index
    %5 = vector.load %arg2[%c0_3, %c0_4, %c0_5] : memref<2x64x128xf32, #tpu.memory_space<vmem>>, vector<2x64x128xf32>
    %6 = vector.shape_cast %5 : vector<2x64x128xf32> to vector<128x128xf32>
    %c0_6 = arith.constant 0 : index
    %c0_7 = arith.constant 0 : index
    %c0_8 = arith.constant 0 : index
    %7 = vector.load %arg7[%c0_6, %c0_7, %c0_8] : memref<1x8x256xf32, #tpu.memory_space<vmem>>, vector<1x8x256xf32>
    %8 = vector.shape_cast %7 : vector<1x8x256xf32> to vector<8x256xf32>
    %9 = vector.extract_strided_slice %8 {offsets = [0, 0], sizes = [1, 128], strides = [1, 1]} : vector<8x256xf32> to vector<1x128xf32>
    %10 = vector.extract_strided_slice %8 {offsets = [1, 0], sizes = [1, 128], strides = [1, 1]} : vector<8x256xf32> to vector<1x128xf32>
    %11 = vector.extract_strided_slice %8 {offsets = [2, 0], sizes = [1, 128], strides = [1, 1]} : vector<8x256xf32> to vector<1x128xf32>
    %12 = vector.extract_strided_slice %8 {offsets = [3, 0], sizes = [1, 256], strides = [1, 1]} : vector<8x256xf32> to vector<1x256xf32>
    %13 = vector.extract_strided_slice %8 {offsets = [4, 0], sizes = [1, 128], strides = [1, 1]} : vector<8x256xf32> to vector<1x128xf32>
    %14 = vector.extract_strided_slice %8 {offsets = [5, 0], sizes = [1, 128], strides = [1, 1]} : vector<8x256xf32> to vector<1x128xf32>
    %15 = vector.extract_strided_slice %8 {offsets = [6, 0], sizes = [1, 128], strides = [1, 1]} : vector<8x256xf32> to vector<1x128xf32>
    %16 = arith.truncf %4 : vector<128x128xf32> to vector<128x128xbf16>
    %c0_9 = arith.constant 0 : index
    %c0_10 = arith.constant 0 : index
    %c0_11 = arith.constant 0 : index
    %17 = vector.load %arg3[%c0_9, %c0_10, %c0_11] : memref<1x128x768xbf16, #tpu.memory_space<vmem>>, vector<1x128x768xbf16>
    %18 = vector.shape_cast %17 : vector<1x128x768xbf16> to vector<128x768xbf16>
    %cst = arith.constant dense<0.000000e+00> : vector<128x768xf32>
    %19 = tpu.matmul %16, %18, %cst {dimension_numbers = #tpu.dot_dimension_numbers<[1], [0], [0], [1], [0, 0, 1, 1], [], []>} : vector<128x128xbf16>, vector<128x768xbf16>, vector<128x768xf32> -> vector<128x768xf32>
    %20 = vector.extract_strided_slice %19 {offsets = [0, 0], sizes = [64, 768], strides = [1, 1]} : vector<128x768xf32> to vector<64x768xf32>
    %21 = vector.extract_strided_slice %20 {offsets = [0, 0], sizes = [64, 128], strides = [1, 1]} : vector<64x768xf32> to vector<64x128xf32>
    %22 = arith.truncf %21 : vector<64x128xf32> to vector<64x128xbf16>
    %23 = vector.extract_strided_slice %20 {offsets = [0, 128], sizes = [64, 128], strides = [1, 1]} : vector<64x768xf32> to vector<64x128xf32>
    %24 = arith.truncf %23 : vector<64x128xf32> to vector<64x128xbf16>
    %25 = vector.extract_strided_slice %20 {offsets = [0, 256], sizes = [64, 128], strides = [1, 1]} : vector<64x768xf32> to vector<64x128xf32>
    %26 = arith.truncf %25 : vector<64x128xf32> to vector<64x128xbf16>
    "tpu.trace_start"() <{level = 10 : i32, message = "nd,md->nm"}> : () -> ()
    %cst_12 = arith.constant dense<0.000000e+00> : vector<64x64xf32>
    %27 = tpu.matmul %22, %24, %cst_12 {dimension_numbers = #tpu.dot_dimension_numbers<[1], [1], [0], [0], [0, 0, 1, 0], [], []>} : vector<64x128xbf16>, vector<64x128xbf16>, vector<64x64xf32> -> vector<64x64xf32>
    "tpu.trace_stop"() : () -> ()
    %cst_13 = arith.constant 1.250000e-01 : f32
    %28 = vector.broadcast %cst_13 : f32 to vector<64x64xf32>
    %29 = arith.mulf %27, %28 : vector<64x64xf32>
    %cst_14 = arith.constant dense<0xFF800000> : vector<64xf32>
    %30 = vector.multi_reduction <maximumf>, %29, %cst_14 [1] : vector<64x64xf32> to vector<64xf32>
    %31 = vector.shape_cast %30 : vector<64xf32> to vector<64x1xf32>
    %32 = vector.broadcast %31 : vector<64x1xf32> to vector<64x64xf32>
    %33 = arith.subf %29, %32 : vector<64x64xf32>
    %34 = math.exp %33 : vector<64x64xf32>
    %cst_15 = arith.constant dense<0.000000e+00> : vector<64xf32>
    %35 = vector.multi_reduction <add>, %34, %cst_15 [1] : vector<64x64xf32> to vector<64xf32>
    %36 = vector.shape_cast %35 : vector<64xf32> to vector<64x1xf32>
    %37 = tpu.reciprocal %36 {approx = true} : vector<64x1xf32> -> vector<64x1xf32>
    %38 = vector.broadcast %37 : vector<64x1xf32> to vector<64x64xf32>
    %39 = arith.mulf %34, %38 : vector<64x64xf32>
    %40 = arith.truncf %39 : vector<64x64xf32> to vector<64x64xbf16>
    %cst_16 = arith.constant dense<0.000000e+00> : vector<64x128xf32>
    %41 = tpu.matmul %40, %26, %cst_16 {dimension_numbers = #tpu.dot_dimension_numbers<[1], [0], [0], [1], [0, 0, 1, 1], [], []>} : vector<64x64xbf16>, vector<64x128xbf16>, vector<64x128xf32> -> vector<64x128xf32>
    %42 = vector.extract_strided_slice %20 {offsets = [0, 384], sizes = [64, 128], strides = [1, 1]} : vector<64x768xf32> to vector<64x128xf32>
    %43 = arith.truncf %42 : vector<64x128xf32> to vector<64x128xbf16>
    %44 = vector.extract_strided_slice %20 {offsets = [0, 512], sizes = [64, 128], strides = [1, 1]} : vector<64x768xf32> to vector<64x128xf32>
    %45 = arith.truncf %44 : vector<64x128xf32> to vector<64x128xbf16>
    %46 = vector.extract_strided_slice %20 {offsets = [0, 640], sizes = [64, 128], strides = [1, 1]} : vector<64x768xf32> to vector<64x128xf32>
    %47 = arith.truncf %46 : vector<64x128xf32> to vector<64x128xbf16>
    "tpu.trace_start"() <{level = 10 : i32, message = "nd,md->nm"}> : () -> ()
    %cst_17 = arith.constant dense<0.000000e+00> : vector<64x64xf32>
    %48 = tpu.matmul %43, %45, %cst_17 {dimension_numbers = #tpu.dot_dimension_numbers<[1], [1], [0], [0], [0, 0, 1, 0], [], []>} : vector<64x128xbf16>, vector<64x128xbf16>, vector<64x64xf32> -> vector<64x64xf32>
    "tpu.trace_stop"() : () -> ()
    %cst_18 = arith.constant 1.250000e-01 : f32
    %49 = vector.broadcast %cst_18 : f32 to vector<64x64xf32>
    %50 = arith.mulf %48, %49 : vector<64x64xf32>
    %cst_19 = arith.constant dense<0xFF800000> : vector<64xf32>
    %51 = vector.multi_reduction <maximumf>, %50, %cst_19 [1] : vector<64x64xf32> to vector<64xf32>
    %52 = vector.shape_cast %51 : vector<64xf32> to vector<64x1xf32>
    %53 = vector.broadcast %52 : vector<64x1xf32> to vector<64x64xf32>
    %54 = arith.subf %50, %53 : vector<64x64xf32>
    %55 = math.exp %54 : vector<64x64xf32>
    %cst_20 = arith.constant dense<0.000000e+00> : vector<64xf32>
    %56 = vector.multi_reduction <add>, %55, %cst_20 [1] : vector<64x64xf32> to vector<64xf32>
    %57 = vector.shape_cast %56 : vector<64xf32> to vector<64x1xf32>
    %58 = tpu.reciprocal %57 {approx = true} : vector<64x1xf32> -> vector<64x1xf32>
    %59 = vector.broadcast %58 : vector<64x1xf32> to vector<64x64xf32>
    %60 = arith.mulf %55, %59 : vector<64x64xf32>
    %61 = arith.truncf %60 : vector<64x64xf32> to vector<64x64xbf16>
    %cst_21 = arith.constant dense<0.000000e+00> : vector<64x128xf32>
    %62 = tpu.matmul %61, %47, %cst_21 {dimension_numbers = #tpu.dot_dimension_numbers<[1], [0], [0], [1], [0, 0, 1, 1], [], []>} : vector<64x64xbf16>, vector<64x128xbf16>, vector<64x128xf32> -> vector<64x128xf32>
    %63 = tpu.concatenate %41, %62 in 1 : vector<64x128xf32>, vector<64x128xf32> -> vector<64x256xf32>
    %64 = vector.extract_strided_slice %19 {offsets = [64, 0], sizes = [64, 768], strides = [1, 1]} : vector<128x768xf32> to vector<64x768xf32>
    %65 = vector.extract_strided_slice %64 {offsets = [0, 0], sizes = [64, 128], strides = [1, 1]} : vector<64x768xf32> to vector<64x128xf32>
    %66 = arith.truncf %65 : vector<64x128xf32> to vector<64x128xbf16>
    %67 = vector.extract_strided_slice %64 {offsets = [0, 128], sizes = [64, 128], strides = [1, 1]} : vector<64x768xf32> to vector<64x128xf32>
    %68 = arith.truncf %67 : vector<64x128xf32> to vector<64x128xbf16>
    %69 = vector.extract_strided_slice %64 {offsets = [0, 256], sizes = [64, 128], strides = [1, 1]} : vector<64x768xf32> to vector<64x128xf32>
    %70 = arith.truncf %69 : vector<64x128xf32> to vector<64x128xbf16>
    "tpu.trace_start"() <{level = 10 : i32, message = "nd,md->nm"}> : () -> ()
    %cst_22 = arith.constant dense<0.000000e+00> : vector<64x64xf32>
    %71 = tpu.matmul %66, %68, %cst_22 {dimension_numbers = #tpu.dot_dimension_numbers<[1], [1], [0], [0], [0, 0, 1, 0], [], []>} : vector<64x128xbf16>, vector<64x128xbf16>, vector<64x64xf32> -> vector<64x64xf32>
    "tpu.trace_stop"() : () -> ()
    %cst_23 = arith.constant 1.250000e-01 : f32
    %72 = vector.broadcast %cst_23 : f32 to vector<64x64xf32>
    %73 = arith.mulf %71, %72 : vector<64x64xf32>
    %cst_24 = arith.constant dense<0xFF800000> : vector<64xf32>
    %74 = vector.multi_reduction <maximumf>, %73, %cst_24 [1] : vector<64x64xf32> to vector<64xf32>
    %75 = vector.shape_cast %74 : vector<64xf32> to vector<64x1xf32>
    %76 = vector.broadcast %75 : vector<64x1xf32> to vector<64x64xf32>
    %77 = arith.subf %73, %76 : vector<64x64xf32>
    %78 = math.exp %77 : vector<64x64xf32>
    %cst_25 = arith.constant dense<0.000000e+00> : vector<64xf32>
    %79 = vector.multi_reduction <add>, %78, %cst_25 [1] : vector<64x64xf32> to vector<64xf32>
    %80 = vector.shape_cast %79 : vector<64xf32> to vector<64x1xf32>
    %81 = tpu.reciprocal %80 {approx = true} : vector<64x1xf32> -> vector<64x1xf32>
    %82 = vector.broadcast %81 : vector<64x1xf32> to vector<64x64xf32>
    %83 = arith.mulf %78, %82 : vector<64x64xf32>
    %84 = arith.truncf %83 : vector<64x64xf32> to vector<64x64xbf16>
    %cst_26 = arith.constant dense<0.000000e+00> : vector<64x128xf32>
    %85 = tpu.matmul %84, %70, %cst_26 {dimension_numbers = #tpu.dot_dimension_numbers<[1], [0], [0], [1], [0, 0, 1, 1], [], []>} : vector<64x64xbf16>, vector<64x128xbf16>, vector<64x128xf32> -> vector<64x128xf32>
    %86 = vector.extract_strided_slice %64 {offsets = [0, 384], sizes = [64, 128], strides = [1, 1]} : vector<64x768xf32> to vector<64x128xf32>
    %87 = arith.truncf %86 : vector<64x128xf32> to vector<64x128xbf16>
    %88 = vector.extract_strided_slice %64 {offsets = [0, 512], sizes = [64, 128], strides = [1, 1]} : vector<64x768xf32> to vector<64x128xf32>
    %89 = arith.truncf %88 : vector<64x128xf32> to vector<64x128xbf16>
    %90 = vector.extract_strided_slice %64 {offsets = [0, 640], sizes = [64, 128], strides = [1, 1]} : vector<64x768xf32> to vector<64x128xf32>
    %91 = arith.truncf %90 : vector<64x128xf32> to vector<64x128xbf16>
    "tpu.trace_start"() <{level = 10 : i32, message = "nd,md->nm"}> : () -> ()
    %cst_27 = arith.constant dense<0.000000e+00> : vector<64x64xf32>
    %92 = tpu.matmul %87, %89, %cst_27 {dimension_numbers = #tpu.dot_dimension_numbers<[1], [1], [0], [0], [0, 0, 1, 0], [], []>} : vector<64x128xbf16>, vector<64x128xbf16>, vector<64x64xf32> -> vector<64x64xf32>
    "tpu.trace_stop"() : () -> ()
    %cst_28 = arith.constant 1.250000e-01 : f32
    %93 = vector.broadcast %cst_28 : f32 to vector<64x64xf32>
    %94 = arith.mulf %92, %93 : vector<64x64xf32>
    %cst_29 = arith.constant dense<0xFF800000> : vector<64xf32>
    %95 = vector.multi_reduction <maximumf>, %94, %cst_29 [1] : vector<64x64xf32> to vector<64xf32>
    %96 = vector.shape_cast %95 : vector<64xf32> to vector<64x1xf32>
    %97 = vector.broadcast %96 : vector<64x1xf32> to vector<64x64xf32>
    %98 = arith.subf %94, %97 : vector<64x64xf32>
    %99 = math.exp %98 : vector<64x64xf32>
    %cst_30 = arith.constant dense<0.000000e+00> : vector<64xf32>
    %100 = vector.multi_reduction <add>, %99, %cst_30 [1] : vector<64x64xf32> to vector<64xf32>
    %101 = vector.shape_cast %100 : vector<64xf32> to vector<64x1xf32>
    %102 = tpu.reciprocal %101 {approx = true} : vector<64x1xf32> -> vector<64x1xf32>
    %103 = vector.broadcast %102 : vector<64x1xf32> to vector<64x64xf32>
    %104 = arith.mulf %99, %103 : vector<64x64xf32>
    %105 = arith.truncf %104 : vector<64x64xf32> to vector<64x64xbf16>
    %cst_31 = arith.constant dense<0.000000e+00> : vector<64x128xf32>
    %106 = tpu.matmul %105, %91, %cst_31 {dimension_numbers = #tpu.dot_dimension_numbers<[1], [0], [0], [1], [0, 0, 1, 1], [], []>} : vector<64x64xbf16>, vector<64x128xbf16>, vector<64x128xf32> -> vector<64x128xf32>
    %107 = tpu.concatenate %85, %106 in 1 : vector<64x128xf32>, vector<64x128xf32> -> vector<64x256xf32>
    %108 = tpu.concatenate %63, %107 in 0 : vector<64x256xf32>, vector<64x256xf32> -> vector<128x256xf32>
    %109 = arith.truncf %108 : vector<128x256xf32> to vector<128x256xbf16>
    %c0_32 = arith.constant 0 : index
    %c0_33 = arith.constant 0 : index
    %c0_34 = arith.constant 0 : index
    %110 = vector.load %arg4[%c0_32, %c0_33, %c0_34] : memref<1x256x128xbf16, #tpu.memory_space<vmem>>, vector<1x256x128xbf16>
    %111 = vector.shape_cast %110 : vector<1x256x128xbf16> to vector<256x128xbf16>
    %cst_35 = arith.constant dense<0.000000e+00> : vector<128x128xf32>
    %112 = tpu.matmul %109, %111, %cst_35 {dimension_numbers = #tpu.dot_dimension_numbers<[1], [0], [0], [1], [0, 0, 1, 1], [], []>} : vector<128x256xbf16>, vector<256x128xbf16>, vector<128x128xf32> -> vector<128x128xf32>
    %113 = vector.broadcast %9 : vector<1x128xf32> to vector<128x128xf32>
    %114 = arith.addf %112, %113 : vector<128x128xf32>
    %cst_36 = arith.constant dense<0.000000e+00> : vector<128xf32>
    %115 = vector.multi_reduction <add>, %114, %cst_36 [1] : vector<128x128xf32> to vector<128xf32>
    %116 = vector.shape_cast %115 : vector<128xf32> to vector<128x1xf32>
    %cst_37 = arith.constant 1.280000e+02 : f32
    %117 = vector.broadcast %cst_37 : f32 to vector<128x1xf32>
    %118 = arith.divf %116, %117 : vector<128x1xf32>
    %119 = vector.broadcast %118 : vector<128x1xf32> to vector<128x128xf32>
    %120 = arith.subf %114, %119 : vector<128x128xf32>
    %121 = arith.mulf %120, %120 : vector<128x128xf32>
    %cst_38 = arith.constant dense<0.000000e+00> : vector<128xf32>
    %122 = vector.multi_reduction <add>, %121, %cst_38 [1] : vector<128x128xf32> to vector<128xf32>
    %123 = vector.shape_cast %122 : vector<128xf32> to vector<128x1xf32>
    %cst_39 = arith.constant 1.280000e+02 : f32
    %124 = vector.broadcast %cst_39 : f32 to vector<128x1xf32>
    %125 = arith.divf %123, %124 : vector<128x1xf32>
    %126 = vector.broadcast %118 : vector<128x1xf32> to vector<128x128xf32>
    %127 = arith.subf %114, %126 : vector<128x128xf32>
    %cst_40 = arith.constant 9.99999974E-6 : f32
    %128 = vector.broadcast %cst_40 : f32 to vector<128x1xf32>
    %129 = arith.addf %125, %128 : vector<128x1xf32>
    %130 = math.rsqrt %129 : vector<128x1xf32>
    %131 = vector.broadcast %130 : vector<128x1xf32> to vector<128x128xf32>
    %132 = arith.mulf %127, %131 : vector<128x128xf32>
    %133 = vector.broadcast %10 : vector<1x128xf32> to vector<128x128xf32>
    %134 = arith.mulf %132, %133 : vector<128x128xf32>
    %135 = vector.broadcast %11 : vector<1x128xf32> to vector<128x128xf32>
    %136 = arith.addf %134, %135 : vector<128x128xf32>
    %137 = arith.addf %136, %4 : vector<128x128xf32>
    %138 = arith.addf %137, %6 : vector<128x128xf32>
    %139 = arith.truncf %138 : vector<128x128xf32> to vector<128x128xbf16>
    %c0_41 = arith.constant 0 : index
    %c0_42 = arith.constant 0 : index
    %c0_43 = arith.constant 0 : index
    %140 = vector.load %arg5[%c0_41, %c0_42, %c0_43] : memref<1x128x256xbf16, #tpu.memory_space<vmem>>, vector<1x128x256xbf16>
    %141 = vector.shape_cast %140 : vector<1x128x256xbf16> to vector<128x256xbf16>
    %cst_44 = arith.constant dense<0.000000e+00> : vector<128x256xf32>
    %142 = tpu.matmul %139, %141, %cst_44 {dimension_numbers = #tpu.dot_dimension_numbers<[1], [0], [0], [1], [0, 0, 1, 1], [], []>} : vector<128x128xbf16>, vector<128x256xbf16>, vector<128x256xf32> -> vector<128x256xf32>
    %143 = vector.broadcast %12 : vector<1x256xf32> to vector<128x256xf32>
    %144 = arith.addf %142, %143 : vector<128x256xf32>
    %cst_45 = arith.constant 5.000000e-01 : f32
    %145 = vector.broadcast %cst_45 : f32 to vector<128x256xf32>
    %146 = arith.mulf %145, %144 : vector<128x256xf32>
    %cst_46 = arith.constant 0.707106769 : f32
    %147 = vector.broadcast %cst_46 : f32 to vector<128x256xf32>
    %148 = arith.mulf %144, %147 : vector<128x256xf32>
    %149 = math.absf %148 : vector<128x256xf32>
    %cst_47 = arith.constant 0.327591091 : f32
    %150 = vector.broadcast %cst_47 : f32 to vector<128x256xf32>
    %151 = arith.mulf %150, %149 : vector<128x256xf32>
    %cst_48 = arith.constant 1.000000e+00 : f32
    %152 = vector.broadcast %cst_48 : f32 to vector<128x256xf32>
    %153 = arith.addf %152, %151 : vector<128x256xf32>
    %cst_49 = arith.constant 1.000000e+00 : f32
    %154 = vector.broadcast %cst_49 : f32 to vector<128x256xf32>
    %155 = arith.divf %154, %153 : vector<128x256xf32>
    %cst_50 = arith.constant 1.06140542 : f32
    %156 = vector.broadcast %cst_50 : f32 to vector<128x256xf32>
    %157 = arith.mulf %156, %155 : vector<128x256xf32>
    %cst_51 = arith.constant -1.45315206 : f32
    %158 = vector.broadcast %cst_51 : f32 to vector<128x256xf32>
    %159 = arith.addf %157, %158 : vector<128x256xf32>
    %160 = arith.mulf %159, %155 : vector<128x256xf32>
    %cst_52 = arith.constant 1.42141378 : f32
    %161 = vector.broadcast %cst_52 : f32 to vector<128x256xf32>
    %162 = arith.addf %160, %161 : vector<128x256xf32>
    %163 = arith.mulf %162, %155 : vector<128x256xf32>
    %cst_53 = arith.constant -0.284496725 : f32
    %164 = vector.broadcast %cst_53 : f32 to vector<128x256xf32>
    %165 = arith.addf %163, %164 : vector<128x256xf32>
    %166 = arith.mulf %165, %155 : vector<128x256xf32>
    %cst_54 = arith.constant 0.254829586 : f32
    %167 = vector.broadcast %cst_54 : f32 to vector<128x256xf32>
    %168 = arith.addf %166, %167 : vector<128x256xf32>
    %169 = arith.mulf %168, %155 : vector<128x256xf32>
    %cst_55 = arith.constant 0.000000e+00 : f32
    %170 = vector.broadcast %cst_55 : f32 to vector<128x256xf32>
    %171 = arith.subf %170, %149 : vector<128x256xf32>
    %172 = arith.mulf %171, %149 : vector<128x256xf32>
    %173 = math.exp %172 : vector<128x256xf32>
    %174 = arith.mulf %169, %173 : vector<128x256xf32>
    %cst_56 = arith.constant 1.000000e+00 : f32
    %175 = vector.broadcast %cst_56 : f32 to vector<128x256xf32>
    %176 = arith.subf %175, %174 : vector<128x256xf32>
    %cst_57 = arith.constant 0.000000e+00 : f32
    %177 = vector.broadcast %cst_57 : f32 to vector<128x256xf32>
    %178 = arith.cmpf olt, %148, %177 : vector<128x256xf32>
    %cst_58 = arith.constant 0.000000e+00 : f32
    %179 = vector.broadcast %cst_58 : f32 to vector<128x256xf32>
    %180 = arith.subf %179, %176 : vector<128x256xf32>
    %181 = arith.select %178, %180, %176 : vector<128x256xi1>, vector<128x256xf32>
    %cst_59 = arith.constant 1.000000e+00 : f32
    %182 = vector.broadcast %cst_59 : f32 to vector<128x256xf32>
    %183 = arith.addf %182, %181 : vector<128x256xf32>
    %184 = arith.mulf %146, %183 : vector<128x256xf32>
    %185 = arith.truncf %184 : vector<128x256xf32> to vector<128x256xbf16>
    %c0_60 = arith.constant 0 : index
    %c0_61 = arith.constant 0 : index
    %c0_62 = arith.constant 0 : index
    %186 = vector.load %arg6[%c0_60, %c0_61, %c0_62] : memref<1x256x128xbf16, #tpu.memory_space<vmem>>, vector<1x256x128xbf16>
    %187 = vector.shape_cast %186 : vector<1x256x128xbf16> to vector<256x128xbf16>
    %cst_63 = arith.constant dense<0.000000e+00> : vector<128x128xf32>
    %188 = tpu.matmul %185, %187, %cst_63 {dimension_numbers = #tpu.dot_dimension_numbers<[1], [0], [0], [1], [0, 0, 1, 1], [], []>} : vector<128x256xbf16>, vector<256x128xbf16>, vector<128x128xf32> -> vector<128x128xf32>
    %189 = vector.broadcast %13 : vector<1x128xf32> to vector<128x128xf32>
    %190 = arith.addf %188, %189 : vector<128x128xf32>
    %cst_64 = arith.constant dense<0.000000e+00> : vector<128xf32>
    %191 = vector.multi_reduction <add>, %190, %cst_64 [1] : vector<128x128xf32> to vector<128xf32>
    %192 = vector.shape_cast %191 : vector<128xf32> to vector<128x1xf32>
    %cst_65 = arith.constant 1.280000e+02 : f32
    %193 = vector.broadcast %cst_65 : f32 to vector<128x1xf32>
    %194 = arith.divf %192, %193 : vector<128x1xf32>
    %195 = vector.broadcast %194 : vector<128x1xf32> to vector<128x128xf32>
    %196 = arith.subf %190, %195 : vector<128x128xf32>
    %197 = arith.mulf %196, %196 : vector<128x128xf32>
    %cst_66 = arith.constant dense<0.000000e+00> : vector<128xf32>
    %198 = vector.multi_reduction <add>, %197, %cst_66 [1] : vector<128x128xf32> to vector<128xf32>
    %199 = vector.shape_cast %198 : vector<128xf32> to vector<128x1xf32>
    %cst_67 = arith.constant 1.280000e+02 : f32
    %200 = vector.broadcast %cst_67 : f32 to vector<128x1xf32>
    %201 = arith.divf %199, %200 : vector<128x1xf32>
    %202 = vector.broadcast %194 : vector<128x1xf32> to vector<128x128xf32>
    %203 = arith.subf %190, %202 : vector<128x128xf32>
    %cst_68 = arith.constant 9.99999974E-6 : f32
    %204 = vector.broadcast %cst_68 : f32 to vector<128x1xf32>
    %205 = arith.addf %201, %204 : vector<128x1xf32>
    %206 = math.rsqrt %205 : vector<128x1xf32>
    %207 = vector.broadcast %206 : vector<128x1xf32> to vector<128x128xf32>
    %208 = arith.mulf %203, %207 : vector<128x128xf32>
    %209 = vector.broadcast %14 : vector<1x128xf32> to vector<128x128xf32>
    %210 = arith.mulf %208, %209 : vector<128x128xf32>
    %211 = vector.broadcast %15 : vector<1x128xf32> to vector<128x128xf32>
    %212 = arith.addf %210, %211 : vector<128x128xf32>
    %213 = arith.addf %212, %138 : vector<128x128xf32>
    %214 = vector.shape_cast %213 : vector<128x128xf32> to vector<2x64x128xf32>
    %c0_69 = arith.constant 0 : index
    %c0_70 = arith.constant 0 : index
    %c0_71 = arith.constant 0 : index
    %215 = vector.load %arg8[%c0_69, %c0_70, %c0_71] : memref<2x64x128xf32, #tpu.memory_space<vmem>>, vector<2x64x128xf32>
    tpu.vector_store %arg8[%c0_69, %c0_70, %c0_71], %214 {strides = array<i32>} : memref<2x64x128xf32, #tpu.memory_space<vmem>>, vector<2x64x128xf32>,
    return
  }
  func.func @transform_0(%arg0: i32) -> (i32, i32, i32) {
    %c0_i32 = arith.constant 0 : i32
    %c0_i32_0 = arith.constant 0 : i32
    %c0_i32_1 = arith.constant 0 : i32
    %c0_i32_2 = arith.constant 0 : i32
    return %c0_i32, %c0_i32_0, %c0_i32_1 : i32, i32, i32
  }
  func.func @transform_1(%arg0: i32) -> (i32, i32, i32) {
    %c0_i32 = arith.constant 0 : i32
    %c0_i32_0 = arith.constant 0 : i32
    %c0_i32_1 = arith.constant 0 : i32
    %c0_i32_2 = arith.constant 0 : i32
    return %c0_i32, %c0_i32_0, %c0_i32_1 : i32, i32, i32
  }
  func.func @transform_2(%arg0: i32) -> (i32, i32, i32) {
    %c0_i32 = arith.constant 0 : i32
    %c0_i32_0 = arith.constant 0 : i32
    %c0_i32_1 = arith.constant 0 : i32
    return %arg0, %c0_i32, %c0_i32_0 : i32, i32, i32
  }
  func.func @transform_3(%arg0: i32) -> (i32, i32, i32) {
    %c0_i32 = arith.constant 0 : i32
    %c0_i32_0 = arith.constant 0 : i32
    %c0_i32_1 = arith.constant 0 : i32
    return %arg0, %c0_i32, %c0_i32_0 : i32, i32, i32
  }
  func.func @transform_4(%arg0: i32) -> (i32, i32, i32) {
    %c0_i32 = arith.constant 0 : i32
    %c0_i32_0 = arith.constant 0 : i32
    %c0_i32_1 = arith.constant 0 : i32
    return %arg0, %c0_i32, %c0_i32_0 : i32, i32, i32
  }
  func.func @transform_5(%arg0: i32) -> (i32, i32, i32) {
    %c0_i32 = arith.constant 0 : i32
    %c0_i32_0 = arith.constant 0 : i32
    %c0_i32_1 = arith.constant 0 : i32
    return %arg0, %c0_i32, %c0_i32_0 : i32, i32, i32
  }
  func.func @transform_6(%arg0: i32) -> (i32, i32, i32) {
    %c0_i32 = arith.constant 0 : i32
    %c0_i32_0 = arith.constant 0 : i32
    %c0_i32_1 = arith.constant 0 : i32
    return %arg0, %c0_i32, %c0_i32_0 : i32, i32, i32
  }
  func.func @transform_7(%arg0: i32) -> (i32, i32, i32) {
    %c0_i32 = arith.constant 0 : i32
    %c0_i32_0 = arith.constant 0 : i32
    %c0_i32_1 = arith.constant 0 : i32
    %c0_i32_2 = arith.constant 0 : i32
    return %c0_i32, %c0_i32_0, %c0_i32_1 : i32, i32, i32
  }
}

</mosaic_0001>

<llo_original>
// kernel: tpu_custom_call.1
$region0: #{tpu_custom_call.1}
  #allocation0 [shape = 'u32[]', space=smem, size = 0x4, offset = 0x4, fixed_abs, tag = 'smem constant byte address 0x4 - core index']
  #allocation1 [shape = 'u32[144,128]{1,0:T(1,128)}', space=vmem, size = 0x12000, scoped, tag = 'internal scratch']
  %s0 = inlined_call_operand.hbm [shape: f32[2,64,128], index: 0, kind: input, shape index: {}]
  %s1 = inlined_call_operand.hbm [shape: f32[2,64,128], index: 1, kind: input, shape index: {}]
  %s2 = inlined_call_operand.hbm [shape: bf16[2,128,768], index: 2, kind: input, shape index: {}]
  %s3 = inlined_call_operand.hbm [shape: bf16[2,256,128], index: 3, kind: input, shape index: {}]
  %s4 = inlined_call_operand.hbm [shape: bf16[2,128,256], index: 4, kind: input, shape index: {}]
  %s5 = inlined_call_operand.hbm [shape: bf16[2,256,128], index: 5, kind: input, shape index: {}]
  %s6 = inlined_call_operand.hbm [shape: f32[2,8,256], index: 6, kind: input, shape index: {}]
  %s7 = inlined_call_operand.hbm [shape: f32[2,64,128], index: 7, kind: output, shape index: {}]
  %s8 = sld [smem:[#allocation0]]
  $region93: #{tpu_custom_call.1} parent=0
    _
  %s10 = ssub.s32 1, %s8
  %s11 = scalar_select 0, %s10, %s8
  $region1: #{tpu_custom_call.1} parent=0
    #allocation2 [shape = 'u8[65536]{0}', space=vmem, size = 0x10000, scoped, tag = 'input window, operand 0, single buffered']
    #allocation3 [shape = 's32[2]{0}', space=sflag, size = 0x8, scoped, tag = 'scoped memory for tpu_custom_call.1']
    #allocation4 [shape = 's32[2]{0}', space=sflag, size = 0x8, scoped, tag = 'scoped memory for tpu_custom_call.1']
    #allocation5 [shape = 'u8[65536]{0}', space=vmem, size = 0x10000, scoped, tag = 'input window, operand 1, single buffered']
    #allocation6 [shape = 's32[1]{0}', space=sflag, size = 0x4, scoped, tag = 'scoped memory for tpu_custom_call.1']
    #allocation7 [shape = 'u8[393216]{0}', space=vmem, size = 0x60000, scoped, tag = 'input window, operand 2']
    #allocation8 [shape = 'u8[131072]{0}', space=vmem, size = 0x20000, scoped, tag = 'input window, operand 3']
    #allocation9 [shape = 'u8[131072]{0}', space=vmem, size = 0x20000, scoped, tag = 'input window, operand 4']
    #allocation10 [shape = 'u8[131072]{0}', space=vmem, size = 0x20000, scoped, tag = 'input window, operand 5']
    #allocation11 [shape = 'u8[16384]{0}', space=vmem, size = 0x4000, scoped, tag = 'input window, operand 6']
    #allocation12 [shape = 'u8[65536]{0}', space=vmem, size = 0x10000, scoped, tag = 'output window, operand 0, single buffered']
    %12 = vsyncpa [#allocation3], 0
    %13 = vsyncpa [#allocation6], 0
    %14 = vsyncpa [#allocation4], 0
    loop: start=0, step=1, limit=4
    $region2: #{tpu_custom_call.1} parent=1 // loop_pre_header
      _
    $region3: #{tpu_custom_call.1} parent=1 // loop_header
      %s16 = sphi 0, %s20
      %p17 = scmp.ge.s32.totalorder %s16, 4
      %s24 = sphi 0, %s24
      %s26 = sphi 0, %s24
      %s27 = sphi 0, %s26
      %s41 = sphi 0, %s27
      %s45 = sphi 0, %s45
      %s47 = sphi 0, %s45
      %s48 = sphi 0, %s47
      %s62 = sphi 0, %s48
      %s68 = sphi 0, %s70
      %s71 = sphi 0, %s68
      %s72 = sphi 0, %s71
      %s88 = sphi 0, %s72
      %s94 = sphi 0, %s96
      %s97 = sphi 0, %s94
      %s98 = sphi 0, %s97
      %s114 = sphi 0, %s98
      %s120 = sphi 0, %s122
      %s123 = sphi 0, %s120
      %s124 = sphi 0, %s123
      %s140 = sphi 0, %s124
      %s146 = sphi 0, %s148
      %s149 = sphi 0, %s146
      %s150 = sphi 0, %s149
      %s166 = sphi 0, %s150
      %s172 = sphi 0, %s174
      %s175 = sphi 0, %s172
      %s176 = sphi 0, %s175
      %s192 = sphi 0, %s176
      %s196 = sphi 0, %s196
      %s198 = sphi 0, %s196
      %s199 = sphi 0, %s198
      %s213 = sphi 0, %s199
    $region4: #{tpu_custom_call.1} parent=1 // loop_header_branch
      %19 = sbr.rel (%p17) target = $region8
    $region5: #{tpu_custom_call.1} parent=1 // loop_body
      %s21 = ssub.s32 %s16, 1
      %s22 = ssub.s32 %s16, 2
      %s23 = sadd.s32 %s16, 1
      %s25 = sadd.s32 %s24, 1
      %p28 = scmp.eq.s32.totalorder %s16, 1
      %p29 = scmp.ne.s32.totalorder %s24, %s26
      %p30 = scmp.eq.s32.totalorder %s16, 0
      %p31 = por %p29, %p30
      %p32 = scmp.ne.s32.totalorder %s24, %s26
      %p33 = scmp.eq.s32.totalorder %s21, 1
      %p34 = por %p32, %p33
      %p35 = scmp.ne.s32.totalorder %s26, %s27
      %p36 = scmp.eq.s32.totalorder %s21, 0
      %p37 = por %p35, %p36
      %p38 = scmp.ne.s32.totalorder %s26, %s27
      %p39 = scmp.eq.s32.totalorder %s22, 1
      %p40 = por %p38, %p39
      %p42 = scmp.ne.s32.totalorder %s27, %s41
      %p43 = scmp.eq.s32.totalorder %s22, 0
      %p44 = por %p42, %p43
      %s46 = sadd.s32 %s45, 1
      %p49 = scmp.eq.s32.totalorder %s16, 1
      %p50 = scmp.ne.s32.totalorder %s45, %s47
      %p51 = scmp.eq.s32.totalorder %s16, 0
      %p52 = por %p50, %p51
      %p53 = scmp.ne.s32.totalorder %s45, %s47
      %p54 = scmp.eq.s32.totalorder %s21, 1
      %p55 = por %p53, %p54
      %p56 = scmp.ne.s32.totalorder %s47, %s48
      %p57 = scmp.eq.s32.totalorder %s21, 0
      %p58 = por %p56, %p57
      %p59 = scmp.ne.s32.totalorder %s47, %s48
      %p60 = scmp.eq.s32.totalorder %s22, 1
      %p61 = por %p59, %p60
      %p63 = scmp.ne.s32.totalorder %s48, %s62
      %p64 = scmp.eq.s32.totalorder %s22, 0
      %p65 = por %p63, %p64
      %s66 = ssub.s32 %s16, %s23
      %p67 = scmp.eq.s32.totalorder %s66, 0
      %s69 = sadd.s32 %s68, 1
      %s70 = scalar_select %p67, %s68, %s69
      %p73 = pneg %p67
      %p74 = scmp.eq.s32.totalorder %s16, 1
      %p75 = por %p73, %p74
      %p76 = scmp.ne.s32.totalorder %s68, %s71
      %p77 = scmp.eq.s32.totalorder %s16, 0
      %p78 = por %p76, %p77
      %p79 = scmp.ne.s32.totalorder %s68, %s71
      %p80 = scmp.eq.s32.totalorder %s21, 1
      %p81 = por %p79, %p80
      %p82 = scmp.ne.s32.totalorder %s71, %s72
      %p83 = scmp.eq.s32.totalorder %s21, 0
      %p84 = por %p82, %p83
      %p85 = scmp.ne.s32.totalorder %s71, %s72
      %p86 = scmp.eq.s32.totalorder %s22, 1
      %p87 = por %p85, %p86
      %p89 = scmp.ne.s32.totalorder %s72, %s88
      %p90 = scmp.eq.s32.totalorder %s22, 0
      %p91 = por %p89, %p90
      %s92 = ssub.s32 %s16, %s23
      %p93 = scmp.eq.s32.totalorder %s92, 0
      %s95 = sadd.s32 %s94, 1
      %s96 = scalar_select %p93, %s94, %s95
      %p99 = pneg %p93
      %p100 = scmp.eq.s32.totalorder %s16, 1
      %p101 = por %p99, %p100
      %p102 = scmp.ne.s32.totalorder %s94, %s97
      %p103 = scmp.eq.s32.totalorder %s16, 0
      %p104 = por %p102, %p103
      %p105 = scmp.ne.s32.totalorder %s94, %s97
      %p106 = scmp.eq.s32.totalorder %s21, 1
      %p107 = por %p105, %p106
      %p108 = scmp.ne.s32.totalorder %s97, %s98
      %p109 = scmp.eq.s32.totalorder %s21, 0
      %p110 = por %p108, %p109
      %p111 = scmp.ne.s32.totalorder %s97, %s98
      %p112 = scmp.eq.s32.totalorder %s22, 1
      %p113 = por %p111, %p112
      %p115 = scmp.ne.s32.totalorder %s98, %s114
      %p116 = scmp.eq.s32.totalorder %s22, 0
      %p117 = por %p115, %p116
      %s118 = ssub.s32 %s16, %s23
      %p119 = scmp.eq.s32.totalorder %s118, 0
      %s121 = sadd.s32 %s120, 1
      %s122 = scalar_select %p119, %s120, %s121
      %p125 = pneg %p119
      %p126 = scmp.eq.s32.totalorder %s16, 1
      %p127 = por %p125, %p126
      %p128 = scmp.ne.s32.totalorder %s120, %s123
      %p129 = scmp.eq.s32.totalorder %s16, 0
      %p130 = por %p128, %p129
      %p131 = scmp.ne.s32.totalorder %s120, %s123
      %p132 = scmp.eq.s32.totalorder %s21, 1
      %p133 = por %p131, %p132
      %p134 = scmp.ne.s32.totalorder %s123, %s124
      %p135 = scmp.eq.s32.totalorder %s21, 0
      %p136 = por %p134, %p135
      %p137 = scmp.ne.s32.totalorder %s123, %s124
      %p138 = scmp.eq.s32.totalorder %s22, 1
      %p139 = por %p137, %p138
      %p141 = scmp.ne.s32.totalorder %s124, %s140
      %p142 = scmp.eq.s32.totalorder %s22, 0
      %p143 = por %p141, %p142
      %s144 = ssub.s32 %s16, %s23
      %p145 = scmp.eq.s32.totalorder %s144, 0
      %s147 = sadd.s32 %s146, 1
      %s148 = scalar_select %p145, %s146, %s147
      %p151 = pneg %p145
      %p152 = scmp.eq.s32.totalorder %s16, 1
      %p153 = por %p151, %p152
      %p154 = scmp.ne.s32.totalorder %s146, %s149
      %p155 = scmp.eq.s32.totalorder %s16, 0
      %p156 = por %p154, %p155
      %p157 = scmp.ne.s32.totalorder %s146, %s149
      %p158 = scmp.eq.s32.totalorder %s21, 1
      %p159 = por %p157, %p158
      %p160 = scmp.ne.s32.totalorder %s149, %s150
      %p161 = scmp.eq.s32.totalorder %s21, 0
      %p162 = por %p160, %p161
      %p163 = scmp.ne.s32.totalorder %s149, %s150
      %p164 = scmp.eq.s32.totalorder %s22, 1
      %p165 = por %p163, %p164
      %p167 = scmp.ne.s32.totalorder %s150, %s166
      %p168 = scmp.eq.s32.totalorder %s22, 0
      %p169 = por %p167, %p168
      %s170 = ssub.s32 %s16, %s23
      %p171 = scmp.eq.s32.totalorder %s170, 0
      %s173 = sadd.s32 %s172, 1
      %s174 = scalar_select %p171, %s172, %s173
      %p177 = pneg %p171
      %p178 = scmp.eq.s32.totalorder %s16, 1
      %p179 = por %p177, %p178
      %p180 = scmp.ne.s32.totalorder %s172, %s175
      %p181 = scmp.eq.s32.totalorder %s16, 0
      %p182 = por %p180, %p181
      %p183 = scmp.ne.s32.totalorder %s172, %s175
      %p184 = scmp.eq.s32.totalorder %s21, 1
      %p185 = por %p183, %p184
      %p186 = scmp.ne.s32.totalorder %s175, %s176
      %p187 = scmp.eq.s32.totalorder %s21, 0
      %p188 = por %p186, %p187
      %p189 = scmp.ne.s32.totalorder %s175, %s176
      %p190 = scmp.eq.s32.totalorder %s22, 1
      %p191 = por %p189, %p190
      %p193 = scmp.ne.s32.totalorder %s176, %s192
      %p194 = scmp.eq.s32.totalorder %s22, 0
      %p195 = por %p193, %p194
      %s197 = sadd.s32 %s196, 1
      %p200 = scmp.eq.s32.totalorder %s16, 1
      %p201 = scmp.ne.s32.totalorder %s196, %s198
      %p202 = scmp.eq.s32.totalorder %s16, 0
      %p203 = por %p201, %p202
      %p204 = scmp.ne.s32.totalorder %s196, %s198
      %p205 = scmp.eq.s32.totalorder %s21, 1
      %p206 = por %p204, %p205
      %p207 = scmp.ne.s32.totalorder %s198, %s199
      %p208 = scmp.eq.s32.totalorder %s21, 0
      %p209 = por %p207, %p208
      %p210 = scmp.ne.s32.totalorder %s198, %s199
      %p211 = scmp.eq.s32.totalorder %s22, 1
      %p212 = por %p210, %p211
      %p214 = scmp.ne.s32.totalorder %s199, %s213
      %p215 = scmp.eq.s32.totalorder %s22, 0
      %p216 = por %p214, %p215
      %p217 = scmp.le.s32.totalorder 1, %s16
      %p218 = scmp.lt.s32.totalorder %s16, 3
      %p219 = pnand %p217, %p218
      %p220 = pneg %p219
      // Predicated region
      $region9: #{tpu_custom_call.1} parent=5 // pred_check
        _
      $region10: #{tpu_custom_call.1} parent=5 // pred_check_branch
        %222 = sbr.rel (%p219) target = $region12
      $region11: #{tpu_custom_call.1} parent=5 // pred_region
        %s223 = ssub.s32 %s16, 1
        // Predicated region
        $region13: #{tpu_custom_call.1} parent=11 // pred_check
          %p224 = pneg %p37
        $region14: #{tpu_custom_call.1} parent=11 // pred_check_branch
          %226 = sbr.rel (%p224) target = $region16
        $region15: #{tpu_custom_call.1} parent=11 // pred_region
          %s228 = ssub.s32 2048, 2048
          %229 = vsyncadd [#allocation3], %s228
          %s230 = sshll.u32 [#allocation2], 4
          %s231 = int_to_ptr.vmem [resolvable:$true] %s230
          %236 = dma.hbm_to_vmem [thread:$0]  %s0, 2048, %s231, [#allocation3], 128, 128, 8
        $region16: #{tpu_custom_call.1} parent=11 // pred_fallthru
          _
        // Predicated region
        $region17: #{tpu_custom_call.1} parent=11 // pred_check
          %p237 = pneg %p58
        $region18: #{tpu_custom_call.1} parent=11 // pred_check_branch
          %239 = sbr.rel (%p237) target = $region20
        $region19: #{tpu_custom_call.1} parent=11 // pred_region
          %s241 = ssub.s32 2048, 2048
          %242 = vsyncadd [#allocation6], %s241
          %s243 = sshll.u32 [#allocation5], 4
          %s244 = int_to_ptr.vmem [resolvable:$true] %s243
          %249 = dma.hbm_to_vmem [thread:$0]  %s1, 2048, %s244, [#allocation6], 128, 128, 8
        $region20: #{tpu_custom_call.1} parent=11 // pred_fallthru
          _
      $region12: #{tpu_custom_call.1} parent=5 // pred_fallthru
        _
      %p250 = scmp.lt.s32.totalorder %s16, 2
      // Predicated region
      $region21: #{tpu_custom_call.1} parent=5 // pred_check
        %p251 = pneg %p250
      $region22: #{tpu_custom_call.1} parent=5 // pred_check_branch
        %253 = sbr.rel (%p251) target = $region24
      $region23: #{tpu_custom_call.1} parent=5 // pred_region
        // Predicated region
        $region25: #{tpu_custom_call.1} parent=23 // pred_check
          %p254 = pneg %p78
        $region26: #{tpu_custom_call.1} parent=23 // pred_check_branch
          %256 = sbr.rel (%p254) target = $region28
        $region27: #{tpu_custom_call.1} parent=23 // pred_region
          %s257 = sand.u32 %s16, 1
          %s258 = scalar_lea.sflag [#allocation3], %s257
          %s259 = sand.u32 %s68, 1
          %s260 = smul.addr %s259, 384
          %s261 = scalar_lea.vmem [#allocation7], %s260
          %s263 = ssub.s32 6144, 6144
          %264 = vsyncadd %s258, %s263
          %s265 = smul.addr %s16, 96
          %s266 = smul.addr %s265, 64
          %s267 = scalar_lea.hbm %s2, %s266
          %s268 = sshll.u32 %s261, 4
          %s269 = int_to_ptr.vmem [resolvable:$true] %s268
          %274 = dma.hbm_to_vmem [thread:$0]  %s267, 6144, %s269, %s258, 384, 384, 24
        $region28: #{tpu_custom_call.1} parent=23 // pred_fallthru
          _
        // Predicated region
        $region29: #{tpu_custom_call.1} parent=23 // pred_check
          %p275 = pneg %p104
        $region30: #{tpu_custom_call.1} parent=23 // pred_check_branch
          %277 = sbr.rel (%p275) target = $region32
        $region31: #{tpu_custom_call.1} parent=23 // pred_region
          %s278 = sand.u32 %s16, 1
          %s279 = scalar_lea.sflag [#allocation3], %s278
          %s280 = sand.u32 %s94, 1
          %s281 = smul.addr %s280, 128
          %s282 = scalar_lea.vmem [#allocation8], %s281
          %s284 = ssub.s32 2048, 2048
          %285 = vsyncadd %s279, %s284
          %s286 = smul.addr %s16, 32
          %s287 = smul.addr %s286, 64
          %s288 = scalar_lea.hbm %s3, %s287
          %s289 = sshll.u32 %s282, 4
          %s290 = int_to_ptr.vmem [resolvable:$true] %s289
          %295 = dma.hbm_to_vmem [thread:$0]  %s288, 2048, %s290, %s279, 64, 64, 4
        $region32: #{tpu_custom_call.1} parent=23 // pred_fallthru
          _
        // Predicated region
        $region33: #{tpu_custom_call.1} parent=23 // pred_check
          %p296 = pneg %p130
        $region34: #{tpu_custom_call.1} parent=23 // pred_check_branch
          %298 = sbr.rel (%p296) target = $region36
        $region35: #{tpu_custom_call.1} parent=23 // pred_region
          %s299 = sand.u32 %s16, 1
          %s300 = scalar_lea.sflag [#allocation3], %s299
          %s301 = sand.u32 %s120, 1
          %s302 = smul.addr %s301, 128
          %s303 = scalar_lea.vmem [#allocation9], %s302
          %s305 = ssub.s32 2048, 2048
          %306 = vsyncadd %s300, %s305
          %s307 = smul.addr %s16, 32
          %s308 = smul.addr %s307, 64
          %s309 = scalar_lea.hbm %s4, %s308
          %s310 = sshll.u32 %s303, 4
          %s311 = int_to_ptr.vmem [resolvable:$true] %s310
          %316 = dma.hbm_to_vmem [thread:$0]  %s309, 2048, %s311, %s300, 128, 128, 8
        $region36: #{tpu_custom_call.1} parent=23 // pred_fallthru
          _
        // Predicated region
        $region37: #{tpu_custom_call.1} parent=23 // pred_check
          %p317 = pneg %p156
        $region38: #{tpu_custom_call.1} parent=23 // pred_check_branch
          %319 = sbr.rel (%p317) target = $region40
        $region39: #{tpu_custom_call.1} parent=23 // pred_region
          %s320 = sand.u32 %s16, 1
          %s321 = scalar_lea.sflag [#allocation3], %s320
          %s322 = sand.u32 %s146, 1
          %s323 = smul.addr %s322, 128
          %s324 = scalar_lea.vmem [#allocation10], %s323
          %s326 = ssub.s32 2048, 2048
          %327 = vsyncadd %s321, %s326
          %s328 = smul.addr %s16, 32
          %s329 = smul.addr %s328, 64
          %s330 = scalar_lea.hbm %s5, %s329
          %s331 = sshll.u32 %s324, 4
          %s332 = int_to_ptr.vmem [resolvable:$true] %s331
          %337 = dma.hbm_to_vmem [thread:$0]  %s330, 2048, %s332, %s321, 64, 64, 4
        $region40: #{tpu_custom_call.1} parent=23 // pred_fallthru
          _
        // Predicated region
        $region41: #{tpu_custom_call.1} parent=23 // pred_check
          %p338 = pneg %p182
        $region42: #{tpu_custom_call.1} parent=23 // pred_check_branch
          %340 = sbr.rel (%p338) target = $region44
        $region43: #{tpu_custom_call.1} parent=23 // pred_region
          %s341 = sand.u32 %s16, 1
          %s342 = scalar_lea.sflag [#allocation3], %s341
          %s343 = sand.u32 %s172, 1
          %s344 = smul.addr %s343, 16
          %s345 = scalar_lea.vmem [#allocation11], %s344
          %s347 = ssub.s32 256, 256
          %348 = vsyncadd %s342, %s347
          %s349 = smul.addr %s16, 2
          %s350 = smul.addr %s349, 128
          %s351 = scalar_lea.hbm %s6, %s350
          %s353 = sshll.u32 %s345, 4
          %s354 = int_to_ptr.vmem [resolvable:$true] %s353
          %356 = dma.hbm_to_vmem [thread:$0]  %s351, 256, %s354, %s342
        $region44: #{tpu_custom_call.1} parent=23 // pred_fallthru
          _
      $region24: #{tpu_custom_call.1} parent=5 // pred_fallthru
        _
      %p357 = scmp.le.s32.totalorder 1, %s16
      %p358 = scmp.lt.s32.totalorder %s16, 3
      %p359 = pnand %p357, %p358
      %p360 = pneg %p359
      // Predicated region
      $region45: #{tpu_custom_call.1} parent=5 // pred_check
        _
      $region46: #{tpu_custom_call.1} parent=5 // pred_check_branch
        %362 = sbr.rel (%p359) target = $region48
      $region47: #{tpu_custom_call.1} parent=5 // pred_region
        %s363 = ssub.s32 %s16, 1
        // Predicated region
        $region49: #{tpu_custom_call.1} parent=47 // pred_check
          %p364 = pneg %p37
        $region50: #{tpu_custom_call.1} parent=47 // pred_check_branch
          %366 = sbr.rel (%p364) target = $region52
        $region51: #{tpu_custom_call.1} parent=47 // pred_region
          %367 = dma.done [#allocation3], 2048
        $region52: #{tpu_custom_call.1} parent=47 // pred_fallthru
          _
        // Predicated region
        $region53: #{tpu_custom_call.1} parent=47 // pred_check
          %p368 = pneg %p58
        $region54: #{tpu_custom_call.1} parent=47 // pred_check_branch
          %370 = sbr.rel (%p368) target = $region56
        $region55: #{tpu_custom_call.1} parent=47 // pred_region
          %371 = dma.done [#allocation6], 2048
        $region56: #{tpu_custom_call.1} parent=47 // pred_fallthru
          _
        %s372 = sand.u32 %s21, 1
        %s373 = scalar_lea.sflag [#allocation3], %s372
        %s374 = sand.u32 %s71, 1
        %s375 = smul.addr %s374, 384
        %s376 = scalar_lea.vmem [#allocation7], %s375
        // Predicated region
        $region57: #{tpu_custom_call.1} parent=47 // pred_check
          %p377 = pneg %p84
        $region58: #{tpu_custom_call.1} parent=47 // pred_check_branch
          %379 = sbr.rel (%p377) target = $region60
        $region59: #{tpu_custom_call.1} parent=47 // pred_region
          %380 = dma.done %s373, 6144
        $region60: #{tpu_custom_call.1} parent=47 // pred_fallthru
          _
        %s381 = sand.u32 %s21, 1
        %s382 = scalar_lea.sflag [#allocation3], %s381
        %s383 = sand.u32 %s97, 1
        %s384 = smul.addr %s383, 128
        %s385 = scalar_lea.vmem [#allocation8], %s384
        // Predicated region
        $region61: #{tpu_custom_call.1} parent=47 // pred_check
          %p386 = pneg %p110
        $region62: #{tpu_custom_call.1} parent=47 // pred_check_branch
          %388 = sbr.rel (%p386) target = $region64
        $region63: #{tpu_custom_call.1} parent=47 // pred_region
          %389 = dma.done %s382, 2048
        $region64: #{tpu_custom_call.1} parent=47 // pred_fallthru
          _
        %s390 = sand.u32 %s21, 1
        %s391 = scalar_lea.sflag [#allocation3], %s390
        %s392 = sand.u32 %s123, 1
        %s393 = smul.addr %s392, 128
        %s394 = scalar_lea.vmem [#allocation9], %s393
        // Predicated region
        $region65: #{tpu_custom_call.1} parent=47 // pred_check
          %p395 = pneg %p136
        $region66: #{tpu_custom_call.1} parent=47 // pred_check_branch
          %397 = sbr.rel (%p395) target = $region68
        $region67: #{tpu_custom_call.1} parent=47 // pred_region
          %398 = dma.done %s391, 2048
        $region68: #{tpu_custom_call.1} parent=47 // pred_fallthru
          _
        %s399 = sand.u32 %s21, 1
        %s400 = scalar_lea.sflag [#allocation3], %s399
        %s401 = sand.u32 %s149, 1
        %s402 = smul.addr %s401, 128
        %s403 = scalar_lea.vmem [#allocation10], %s402
        // Predicated region
        $region69: #{tpu_custom_call.1} parent=47 // pred_check
          %p404 = pneg %p162
        $region70: #{tpu_custom_call.1} parent=47 // pred_check_branch
          %406 = sbr.rel (%p404) target = $region72
        $region71: #{tpu_custom_call.1} parent=47 // pred_region
          %407 = dma.done %s400, 2048
        $region72: #{tpu_custom_call.1} parent=47 // pred_fallthru
          _
        %s408 = sand.u32 %s21, 1
        %s409 = scalar_lea.sflag [#allocation3], %s408
        %s410 = sand.u32 %s175, 1
        %s411 = smul.addr %s410, 16
        %s412 = scalar_lea.vmem [#allocation11], %s411
        // Predicated region
        $region73: #{tpu_custom_call.1} parent=47 // pred_check
          %p413 = pneg %p188
        $region74: #{tpu_custom_call.1} parent=47 // pred_check_branch
          %415 = sbr.rel (%p413) target = $region76
        $region75: #{tpu_custom_call.1} parent=47 // pred_region
          %416 = dma.done %s409, 256
        $region76: #{tpu_custom_call.1} parent=47 // pred_fallthru
          _
        %p417 = pneg %p37
        %p418 = pneg %p34
        %p419 = pneg %p58
        %p420 = pneg %p55
        %s421 = sand.u32 %s21, 1
        %s422 = scalar_lea.sflag [#allocation3], %s421
        %s423 = sand.u32 %s71, 1
        %s424 = smul.addr %s423, 384
        %s425 = scalar_lea.vmem [#allocation7], %s424
        %p426 = pneg %p84
        %p427 = pneg %p81
        %s428 = sand.u32 %s21, 1
        %s429 = scalar_lea.sflag [#allocation3], %s428
        %s430 = sand.u32 %s97, 1
        %s431 = smul.addr %s430, 128
        %s432 = scalar_lea.vmem [#allocation8], %s431
        %p433 = pneg %p110
        %p434 = pneg %p107
        %s435 = sand.u32 %s21, 1
        %s436 = scalar_lea.sflag [#allocation3], %s435
        %s437 = sand.u32 %s123, 1
        %s438 = smul.addr %s437, 128
        %s439 = scalar_lea.vmem [#allocation9], %s438
        %p440 = pneg %p136
        %p441 = pneg %p133
        %s442 = sand.u32 %s21, 1
        %s443 = scalar_lea.sflag [#allocation3], %s442
        %s444 = sand.u32 %s149, 1
        %s445 = smul.addr %s444, 128
        %s446 = scalar_lea.vmem [#allocation10], %s445
        %p447 = pneg %p162
        %p448 = pneg %p159
        %s449 = sand.u32 %s21, 1
        %s450 = scalar_lea.sflag [#allocation3], %s449
        %s451 = sand.u32 %s175, 1
        %s452 = smul.addr %s451, 16
        %s453 = scalar_lea.vmem [#allocation11], %s452
        %p454 = pneg %p188
        %p455 = pneg %p185
        %p456 = pneg %p209
        %p457 = pneg %p206
        %p459 = scmp.eq.s32.totalorder %s21, 0
        // Predicated region
        $region77: #{tpu_custom_call.1} parent=47 // pred_check
          %p460 = pneg %p459
        $region78: #{tpu_custom_call.1} parent=47 // pred_check_branch
          %462 = sbr.rel (%p460) target = $region80
        $region79: #{tpu_custom_call.1} parent=47 // pred_region
          %v463 = vld [vmem:[#allocation2] sm:$0xff]
          %v464 = vld [vmem:[#allocation2 + $0x8] sm:$0xff]
          %v465 = vld [vmem:[#allocation2 + $0x10] sm:$0xff]
          %v466 = vld [vmem:[#allocation2 + $0x18] sm:$0xff]
          %v467 = vld [vmem:[#allocation2 + $0x20] sm:$0xff]
          %v468 = vld [vmem:[#allocation2 + $0x28] sm:$0xff]
          %v469 = vld [vmem:[#allocation2 + $0x30] sm:$0xff]
          %v470 = vld [vmem:[#allocation2 + $0x38] sm:$0xff]
          %v471 = vld [vmem:[#allocation2 + $0x40] sm:$0xff]
          %v472 = vld [vmem:[#allocation2 + $0x48] sm:$0xff]
          %v473 = vld [vmem:[#allocation2 + $0x50] sm:$0xff]
          %v474 = vld [vmem:[#allocation2 + $0x58] sm:$0xff]
          %v475 = vld [vmem:[#allocation2 + $0x60] sm:$0xff]
          %v476 = vld [vmem:[#allocation2 + $0x68] sm:$0xff]
          %v477 = vld [vmem:[#allocation2 + $0x70] sm:$0xff]
          %v478 = vld [vmem:[#allocation2 + $0x78] sm:$0xff]
          %479 = vst [vmem:[#allocation12] sm:$0xff] %v463
          %480 = vst [vmem:[#allocation12 + $0x8] sm:$0xff] %v464
          %481 = vst [vmem:[#allocation12 + $0x10] sm:$0xff] %v465
          %482 = vst [vmem:[#allocation12 + $0x18] sm:$0xff] %v466
          %483 = vst [vmem:[#allocation12 + $0x20] sm:$0xff] %v467
          %484 = vst [vmem:[#allocation12 + $0x28] sm:$0xff] %v468
          %485 = vst [vmem:[#allocation12 + $0x30] sm:$0xff] %v469
          %486 = vst [vmem:[#allocation12 + $0x38] sm:$0xff] %v470
          %487 = vst [vmem:[#allocation12 + $0x40] sm:$0xff] %v471
          %488 = vst [vmem:[#allocation12 + $0x48] sm:$0xff] %v472
          %489 = vst [vmem:[#allocation12 + $0x50] sm:$0xff] %v473
          %490 = vst [vmem:[#allocation12 + $0x58] sm:$0xff] %v474
          %491 = vst [vmem:[#allocation12 + $0x60] sm:$0xff] %v475
          %492 = vst [vmem:[#allocation12 + $0x68] sm:$0xff] %v476
          %493 = vst [vmem:[#allocation12 + $0x70] sm:$0xff] %v477
          %494 = vst [vmem:[#allocation12 + $0x78] sm:$0xff] %v478
        $region80: #{tpu_custom_call.1} parent=47 // pred_fallthru
          _
        %v495 = vld [vmem:[#allocation12] sm:$0xff]
        %v496 = vld [vmem:[#allocation12 + $0x8] sm:$0xff]
        %v497 = vld [vmem:[#allocation12 + $0x10] sm:$0xff]
        %v498 = vld [vmem:[#allocation12 + $0x18] sm:$0xff]
        %v499 = vld [vmem:[#allocation12 + $0x20] sm:$0xff]
        %v500 = vld [vmem:[#allocation12 + $0x28] sm:$0xff]
        %v501 = vld [vmem:[#allocation12 + $0x30] sm:$0xff]
        %v502 = vld [vmem:[#allocation12 + $0x38] sm:$0xff]
        %v503 = vld [vmem:[#allocation12 + $0x40] sm:$0xff]
        %v504 = vld [vmem:[#allocation12 + $0x48] sm:$0xff]
        %v505 = vld [vmem:[#allocation12 + $0x50] sm:$0xff]
        %v506 = vld [vmem:[#allocation12 + $0x58] sm:$0xff]
        %v507 = vld [vmem:[#allocation12 + $0x60] sm:$0xff]
        %v508 = vld [vmem:[#allocation12 + $0x68] sm:$0xff]
        %v509 = vld [vmem:[#allocation12 + $0x70] sm:$0xff]
        %v510 = vld [vmem:[#allocation12 + $0x78] sm:$0xff]
        %v511 = vld [vmem:[#allocation5] sm:$0xff]
        %v512 = vld [vmem:[#allocation5 + $0x8] sm:$0xff]
        %v513 = vld [vmem:[#allocation5 + $0x10] sm:$0xff]
        %v514 = vld [vmem:[#allocation5 + $0x18] sm:$0xff]
        %v515 = vld [vmem:[#allocation5 + $0x20] sm:$0xff]
        %v516 = vld [vmem:[#allocation5 + $0x28] sm:$0xff]
        %v517 = vld [vmem:[#allocation5 + $0x30] sm:$0xff]
        %v518 = vld [vmem:[#allocation5 + $0x38] sm:$0xff]
        %v519 = vld [vmem:[#allocation5 + $0x40] sm:$0xff]
        %v520 = vld [vmem:[#allocation5 + $0x48] sm:$0xff]
        %v521 = vld [vmem:[#allocation5 + $0x50] sm:$0xff]
        %v522 = vld [vmem:[#allocation5 + $0x58] sm:$0xff]
        %v523 = vld [vmem:[#allocation5 + $0x60] sm:$0xff]
        %v524 = vld [vmem:[#allocation5 + $0x68] sm:$0xff]
        %v525 = vld [vmem:[#allocation5 + $0x70] sm:$0xff]
        %v526 = vld [vmem:[#allocation5 + $0x78] sm:$0xff]
        %v527 = vld [vmem:[%s412] sm:$0xff]
        %v528 = vld [vmem:[%s412 + $0x8] sm:$0xff]
        %v529 = vpack.c.bf16 %v496, %v495
        %v530 = vpack.c.bf16 %v498, %v497
        %v531 = vpack.c.bf16 %v500, %v499
        %v532 = vpack.c.bf16 %v502, %v501
        %v533 = vpack.c.bf16 %v504, %v503
        %v534 = vpack.c.bf16 %v506, %v505
        %v535 = vpack.c.bf16 %v508, %v507
        %v536 = vpack.c.bf16 %v510, %v509
        %v537 = vld [vmem:[%s376] sm:$0xff]
        %v538 = vld [vmem:[%s376 + $0x8] sm:$0xff]
        %v539 = vld [vmem:[%s376 + $0x10] sm:$0xff]
        %v540 = vld [vmem:[%s376 + $0x18] sm:$0xff]
        %v541 = vld [vmem:[%s376 + $0x20] sm:$0xff]
        %v542 = vld [vmem:[%s376 + $0x28] sm:$0xff]
        %v543 = vld [vmem:[%s376 + $0x30] sm:$0xff]
        %v544 = vld [vmem:[%s376 + $0x38] sm:$0xff]
        %v545 = vld [vmem:[%s376 + $0x40] sm:$0xff]
        %v546 = vld [vmem:[%s376 + $0x48] sm:$0xff]
        %v547 = vld [vmem:[%s376 + $0x50] sm:$0xff]
        %v548 = vld [vmem:[%s376 + $0x58] sm:$0xff]
        %v549 = vld [vmem:[%s376 + $0x60] sm:$0xff]
        %v550 = vld [vmem:[%s376 + $0x68] sm:$0xff]
        %v551 = vld [vmem:[%s376 + $0x70] sm:$0xff]
        %v552 = vld [vmem:[%s376 + $0x78] sm:$0xff]
        %v553 = vld [vmem:[%s376 + $0x80] sm:$0xff]
        %v554 = vld [vmem:[%s376 + $0x88] sm:$0xff]
        %v555 = vld [vmem:[%s376 + $0x90] sm:$0xff]
        %v556 = vld [vmem:[%s376 + $0x98] sm:$0xff]
        %v557 = vld [vmem:[%s376 + $0xa0] sm:$0xff]
        %v558 = vld [vmem:[%s376 + $0xa8] sm:$0xff]
        %v559 = vld [vmem:[%s376 + $0xb0] sm:$0xff]
        %v560 = vld [vmem:[%s376 + $0xb8] sm:$0xff]
        %v561 = vld [vmem:[%s376 + $0xc0] sm:$0xff]
        %v562 = vld [vmem:[%s376 + $0xc8] sm:$0xff]
        %v563 = vld [vmem:[%s376 + $0xd0] sm:$0xff]
        %v564 = vld [vmem:[%s376 + $0xd8] sm:$0xff]
        %v565 = vld [vmem:[%s376 + $0xe0] sm:$0xff]
        %v566 = vld [vmem:[%s376 + $0xe8] sm:$0xff]
        %v567 = vld [vmem:[%s376 + $0xf0] sm:$0xff]
        %v568 = vld [vmem:[%s376 + $0xf8] sm:$0xff]
        %v569 = vld [vmem:[%s376 + $0x100] sm:$0xff]
        %v570 = vld [vmem:[%s376 + $0x108] sm:$0xff]
        %v571 = vld [vmem:[%s376 + $0x110] sm:$0xff]
        %v572 = vld [vmem:[%s376 + $0x118] sm:$0xff]
        %v573 = vld [vmem:[%s376 + $0x120] sm:$0xff]
        %v574 = vld [vmem:[%s376 + $0x128] sm:$0xff]
        %v575 = vld [vmem:[%s376 + $0x130] sm:$0xff]
        %v576 = vld [vmem:[%s376 + $0x138] sm:$0xff]
        %v577 = vld [vmem:[%s376 + $0x140] sm:$0xff]
        %v578 = vld [vmem:[%s376 + $0x148] sm:$0xff]
        %v579 = vld [vmem:[%s376 + $0x150] sm:$0xff]
        %v580 = vld [vmem:[%s376 + $0x158] sm:$0xff]
        %v581 = vld [vmem:[%s376 + $0x160] sm:$0xff]
        %v582 = vld [vmem:[%s376 + $0x168] sm:$0xff]
        %v583 = vld [vmem:[%s376 + $0x170] sm:$0xff]
        %v584 = vld [vmem:[%s376 + $0x178] sm:$0xff]
        %v633 = vunpack.c.l.b16 %v537
        %v634 = vunpack.c.h.b16 %v537
        %v635 = vunpack.c.l.b16 %v538
        %v636 = vunpack.c.h.b16 %v538
        %v637 = vunpack.c.l.b16 %v539
        %v638 = vunpack.c.h.b16 %v539
        %v639 = vunpack.c.l.b16 %v540
        %v640 = vunpack.c.h.b16 %v540
        %v641 = vunpack.c.l.b16 %v541
        %v642 = vunpack.c.h.b16 %v541
        %v643 = vunpack.c.l.b16 %v542
        %v644 = vunpack.c.h.b16 %v542
        %v645 = vunpack.c.l.b16 %v543
        %v646 = vunpack.c.h.b16 %v543
        %v647 = vunpack.c.l.b16 %v544
        %v648 = vunpack.c.h.b16 %v544
        %v649 = vunpack.c.l.b16 %v545
        %v650 = vunpack.c.h.b16 %v545
        %v651 = vunpack.c.l.b16 %v546
        %v652 = vunpack.c.h.b16 %v546
        %v653 = vunpack.c.l.b16 %v547
        %v654 = vunpack.c.h.b16 %v547
        %v655 = vunpack.c.l.b16 %v548
        %v656 = vunpack.c.h.b16 %v548
        %v657 = vunpack.c.l.b16 %v549
        %v658 = vunpack.c.h.b16 %v549
        %v659 = vunpack.c.l.b16 %v550
        %v660 = vunpack.c.h.b16 %v550
        %v661 = vunpack.c.l.b16 %v551
        %v662 = vunpack.c.h.b16 %v551
        %v663 = vunpack.c.l.b16 %v552
        %v664 = vunpack.c.h.b16 %v552
        %v665 = vunpack.c.l.b16 %v553
        %v666 = vunpack.c.h.b16 %v553
        %v667 = vunpack.c.l.b16 %v554
        %v668 = vunpack.c.h.b16 %v554
        %v669 = vunpack.c.l.b16 %v555
        %v670 = vunpack.c.h.b16 %v555
        %v671 = vunpack.c.l.b16 %v556
        %v672 = vunpack.c.h.b16 %v556
        %v673 = vunpack.c.l.b16 %v557
        %v674 = vunpack.c.h.b16 %v557
        %v675 = vunpack.c.l.b16 %v558
        %v676 = vunpack.c.h.b16 %v558
        %v677 = vunpack.c.l.b16 %v559
        %v678 = vunpack.c.h.b16 %v559
        %v679 = vunpack.c.l.b16 %v560
        %v680 = vunpack.c.h.b16 %v560
        %v681 = vunpack.c.l.b16 %v561
        %v682 = vunpack.c.h.b16 %v561
        %v683 = vunpack.c.l.b16 %v562
        %v684 = vunpack.c.h.b16 %v562
        %v685 = vunpack.c.l.b16 %v563
        %v686 = vunpack.c.h.b16 %v563
        %v687 = vunpack.c.l.b16 %v564
        %v688 = vunpack.c.h.b16 %v564
        %v689 = vunpack.c.l.b16 %v565
        %v690 = vunpack.c.h.b16 %v565
        %v691 = vunpack.c.l.b16 %v566
        %v692 = vunpack.c.h.b16 %v566
        %v693 = vunpack.c.l.b16 %v567
        %v694 = vunpack.c.h.b16 %v567
        %v695 = vunpack.c.l.b16 %v568
        %v696 = vunpack.c.h.b16 %v568
        %v697 = vunpack.c.l.b16 %v569
        %v698 = vunpack.c.h.b16 %v569
        %v699 = vunpack.c.l.b16 %v570
        %v700 = vunpack.c.h.b16 %v570
        %v701 = vunpack.c.l.b16 %v571
        %v702 = vunpack.c.h.b16 %v571
        %v703 = vunpack.c.l.b16 %v572
        %v704 = vunpack.c.h.b16 %v572
        %v705 = vunpack.c.l.b16 %v573
        %v706 = vunpack.c.h.b16 %v573
        %v707 = vunpack.c.l.b16 %v574
        %v708 = vunpack.c.h.b16 %v574
        %v709 = vunpack.c.l.b16 %v575
        %v710 = vunpack.c.h.b16 %v575
        %v711 = vunpack.c.l.b16 %v576
        %v712 = vunpack.c.h.b16 %v576
        %v713 = vunpack.c.l.b16 %v577
        %v714 = vunpack.c.h.b16 %v577
        %v715 = vunpack.c.l.b16 %v578
        %v716 = vunpack.c.h.b16 %v578
        %v717 = vunpack.c.l.b16 %v579
        %v718 = vunpack.c.h.b16 %v579
        %v719 = vunpack.c.l.b16 %v580
        %v720 = vunpack.c.h.b16 %v580
        %v721 = vunpack.c.l.b16 %v581
        %v722 = vunpack.c.h.b16 %v581
        %v723 = vunpack.c.l.b16 %v582
        %v724 = vunpack.c.h.b16 %v582
        %v725 = vunpack.c.l.b16 %v583
        %v726 = vunpack.c.h.b16 %v583
        %v727 = vunpack.c.l.b16 %v584
        %v728 = vunpack.c.h.b16 %v584
        %v729 = vpack.c.b16 %v639, %v633
        %v730 = vpack.c.b16 %v640, %v634
        %v731 = vpack.c.b16 %v641, %v635
        %v732 = vpack.c.b16 %v642, %v636
        %v733 = vpack.c.b16 %v643, %v637
        %v734 = vpack.c.b16 %v644, %v638
        %v735 = vpack.c.b16 %v651, %v645
        %v736 = vpack.c.b16 %v652, %v646
        %v737 = vpack.c.b16 %v653, %v647
        %v738 = vpack.c.b16 %v654, %v648
        %v739 = vpack.c.b16 %v655, %v649
        %v740 = vpack.c.b16 %v656, %v650
        %v741 = vpack.c.b16 %v663, %v657
        %v742 = vpack.c.b16 %v664, %v658
        %v743 = vpack.c.b16 %v665, %v659
        %v744 = vpack.c.b16 %v666, %v660
        %v745 = vpack.c.b16 %v667, %v661
        %v746 = vpack.c.b16 %v668, %v662
        %v747 = vpack.c.b16 %v675, %v669
        %v748 = vpack.c.b16 %v676, %v670
        %v749 = vpack.c.b16 %v677, %v671
        %v750 = vpack.c.b16 %v678, %v672
        %v751 = vpack.c.b16 %v679, %v673
        %v752 = vpack.c.b16 %v680, %v674
        %v753 = vpack.c.b16 %v687, %v681
        %v754 = vpack.c.b16 %v688, %v682
        %v755 = vpack.c.b16 %v689, %v683
        %v756 = vpack.c.b16 %v690, %v684
        %v757 = vpack.c.b16 %v691, %v685
        %v758 = vpack.c.b16 %v692, %v686
        %v759 = vpack.c.b16 %v699, %v693
        %v760 = vpack.c.b16 %v700, %v694
        %v761 = vpack.c.b16 %v701, %v695
        %v762 = vpack.c.b16 %v702, %v696
        %v763 = vpack.c.b16 %v703, %v697
        %v764 = vpack.c.b16 %v704, %v698
        %v765 = vpack.c.b16 %v711, %v705
        %v766 = vpack.c.b16 %v712, %v706
        %v767 = vpack.c.b16 %v713, %v707
        %v768 = vpack.c.b16 %v714, %v708
        %v769 = vpack.c.b16 %v715, %v709
        %v770 = vpack.c.b16 %v716, %v710
        %v771 = vpack.c.b16 %v723, %v717
        %v772 = vpack.c.b16 %v724, %v718
        %v773 = vpack.c.b16 %v725, %v719
        %v774 = vpack.c.b16 %v726, %v720
        %v775 = vpack.c.b16 %v727, %v721
        %v776 = vpack.c.b16 %v728, %v722
        %825 = vmatprep.subr.bf16.mxu0 %v730
        %826 = vmatpush1.bf16.msra.mxu0 %v729
        %827 = vmatprep.subr.bf16.mxu0 %v736
        %828 = vmatpush1.bf16.msra.mxu0 %v735
        %829 = vmatprep.subr.bf16.mxu0 %v742
        %830 = vmatpush1.bf16.msra.mxu0 %v741
        %831 = vmatprep.subr.bf16.mxu0 %v748
        %832 = vmatpush1.bf16.msra.mxu0 %v747
        %833 = vmatprep.subr.bf16.mxu0 %v754
        %834 = vmatpush1.bf16.msra.mxu0 %v753
        %835 = vmatprep.subr.bf16.mxu0 %v760
        %836 = vmatpush1.bf16.msra.mxu0 %v759
        %837 = vmatprep.subr.bf16.mxu0 %v766
        %838 = vmatpush1.bf16.msra.mxu0 %v765
        %839 = vmatprep.subr.bf16.mxu0 %v772
        %840 = vmatpush1.bf16.msra.mxu0 %v771
        %841 = vmatprep.subr.bf16.mxu0 0
        %842 = vmatpush1.bf16.msra.mxu0 0
        %843 = vmatprep.subr.bf16.mxu0 0
        %844 = vmatpush1.bf16.msra.mxu0 0
        %845 = vmatprep.subr.bf16.mxu0 0
        %846 = vmatpush1.bf16.msra.mxu0 0
        %847 = vmatprep.subr.bf16.mxu0 0
        %848 = vmatpush1.bf16.msra.mxu0 0
        %849 = vmatprep.subr.bf16.mxu0 0
        %850 = vmatpush1.bf16.msra.mxu0 0
        %851 = vmatprep.subr.bf16.mxu0 0
        %852 = vmatpush1.bf16.msra.mxu0 0
        %853 = vmatprep.subr.bf16.mxu0 0
        %854 = vmatpush1.bf16.msra.mxu0 0
        %855 = vmatprep.subr.bf16.mxu0 0
        %856 = vmatpush1.bf16.msra.mxu0 0
        %857 = vmatprep.mubr.bf16.mxu0 0
        %858 = vmatmul.mubr.bf16.gmra.mrb[0].mxu0 %v529
        %v859 = vpop.f32.mrb[0].mxu0
        %v860 = vadd.f32 0.0, %v859
        %v861 = vpop.f32.mrb[0].mxu0
        %v862 = vadd.f32 0.0, %v861
        %v863 = vpop.f32.mrb[0].mxu0
        %v864 = vadd.f32 0.0, %v863
        %v865 = vpop.f32.mrb[0].mxu0
        %v866 = vadd.f32 0.0, %v865
        %867 = vmatprep.mubr.bf16.mxu0 0
        %868 = vmatmul.mubr.bf16.gmra.mrb[0].mxu0 %v530
        %v869 = vpop.f32.mrb[0].mxu0
        %v870 = vadd.f32 0.0, %v869
        %v871 = vpop.f32.mrb[0].mxu0
        %v872 = vadd.f32 0.0, %v871
        %v873 = vpop.f32.mrb[0].mxu0
        %v874 = vadd.f32 0.0, %v873
        %v875 = vpop.f32.mrb[0].mxu0
        %v876 = vadd.f32 0.0, %v875
        %877 = vmatprep.mubr.bf16.mxu0 0
        %878 = vmatmul.mubr.bf16.gmra.mrb[0].mxu0 %v531
        %v879 = vpop.f32.mrb[0].mxu0
        %v880 = vadd.f32 0.0, %v879
        %v881 = vpop.f32.mrb[0].mxu0
        %v882 = vadd.f32 0.0, %v881
        %v883 = vpop.f32.mrb[0].mxu0
        %v884 = vadd.f32 0.0, %v883
        %v885 = vpop.f32.mrb[0].mxu0
        %v886 = vadd.f32 0.0, %v885
        %887 = vmatprep.mubr.bf16.mxu0 0
        %888 = vmatmul.mubr.bf16.gmra.mrb[0].mxu0 %v532
        %v889 = vpop.f32.mrb[0].mxu0
        %v890 = vadd.f32 0.0, %v889
        %v891 = vpop.f32.mrb[0].mxu0
        %v892 = vadd.f32 0.0, %v891
        %v893 = vpop.f32.mrb[0].mxu0
        %v894 = vadd.f32 0.0, %v893
        %v895 = vpop.f32.mrb[0].mxu0
        %v896 = vadd.f32 0.0, %v895
        %897 = vmatprep.mubr.bf16.mxu0 0
        %898 = vmatmul.mubr.bf16.gmra.mrb[0].mxu0 %v533
        %v899 = vpop.f32.mrb[0].mxu0
        %v900 = vadd.f32 0.0, %v899
        %v901 = vpop.f32.mrb[0].mxu0
        %v902 = vadd.f32 0.0, %v901
        %v903 = vpop.f32.mrb[0].mxu0
        %v904 = vadd.f32 0.0, %v903
        %v905 = vpop.f32.mrb[0].mxu0
        %v906 = vadd.f32 0.0, %v905
        %907 = vmatprep.mubr.bf16.mxu0 0
        %908 = vmatmul.mubr.bf16.gmra.mrb[0].mxu0 %v534
        %v909 = vpop.f32.mrb[0].mxu0
        %v910 = vadd.f32 0.0, %v909
        %v911 = vpop.f32.mrb[0].mxu0
        %v912 = vadd.f32 0.0, %v911
        %v913 = vpop.f32.mrb[0].mxu0
        %v914 = vadd.f32 0.0, %v913
        %v915 = vpop.f32.mrb[0].mxu0
        %v916 = vadd.f32 0.0, %v915
        %917 = vmatprep.mubr.bf16.mxu0 0
        %918 = vmatmul.mubr.bf16.gmra.mrb[0].mxu0 %v535
        %v919 = vpop.f32.mrb[0].mxu0
        %v920 = vadd.f32 0.0, %v919
        %v921 = vpop.f32.mrb[0].mxu0
        %v922 = vadd.f32 0.0, %v921
        %v923 = vpop.f32.mrb[0].mxu0
        %v924 = vadd.f32 0.0, %v923
        %v925 = vpop.f32.mrb[0].mxu0
        %v926 = vadd.f32 0.0, %v925
        %927 = vmatprep.mubr.bf16.mxu0 0
        %928 = vmatmul.mubr.bf16.gmra.mrb[0].mxu0 %v536
        %v929 = vpop.f32.mrb[0].mxu0
        %v930 = vadd.f32 0.0, %v929
        %v931 = vpop.f32.mrb[0].mxu0
        %v932 = vadd.f32 0.0, %v931
        %v933 = vpop.f32.mrb[0].mxu0
        %v934 = vadd.f32 0.0, %v933
        %v935 = vpop.f32.mrb[0].mxu0
        %v936 = vadd.f32 0.0, %v935
        %937 = vdwg.mxu0
        %938 = vmatprep.subr.bf16.mxu0 %v732
        %939 = vmatpush1.bf16.msra.mxu0 %v731
        %940 = vmatprep.subr.bf16.mxu0 %v738
        %941 = vmatpush1.bf16.msra.mxu0 %v737
        %942 = vmatprep.subr.bf16.mxu0 %v744
        %943 = vmatpush1.bf16.msra.mxu0 %v743
        %944 = vmatprep.subr.bf16.mxu0 %v750
        %945 = vmatpush1.bf16.msra.mxu0 %v749
        %946 = vmatprep.subr.bf16.mxu0 %v756
        %947 = vmatpush1.bf16.msra.mxu0 %v755
        %948 = vmatprep.subr.bf16.mxu0 %v762
        %949 = vmatpush1.bf16.msra.mxu0 %v761
        %950 = vmatprep.subr.bf16.mxu0 %v768
        %951 = vmatpush1.bf16.msra.mxu0 %v767
        %952 = vmatprep.subr.bf16.mxu0 %v774
        %953 = vmatpush1.bf16.msra.mxu0 %v773
        %954 = vmatprep.subr.bf16.mxu0 0
        %955 = vmatpush1.bf16.msra.mxu0 0
        %956 = vmatprep.subr.bf16.mxu0 0
        %957 = vmatpush1.bf16.msra.mxu0 0
        %958 = vmatprep.subr.bf16.mxu0 0
        %959 = vmatpush1.bf16.msra.mxu0 0
        %960 = vmatprep.subr.bf16.mxu0 0
        %961 = vmatpush1.bf16.msra.mxu0 0
        %962 = vmatprep.subr.bf16.mxu0 0
        %963 = vmatpush1.bf16.msra.mxu0 0
        %964 = vmatprep.subr.bf16.mxu0 0
        %965 = vmatpush1.bf16.msra.mxu0 0
        %966 = vmatprep.subr.bf16.mxu0 0
        %967 = vmatpush1.bf16.msra.mxu0 0
        %968 = vmatprep.subr.bf16.mxu0 0
        %969 = vmatpush1.bf16.msra.mxu0 0
        %970 = vmatprep.mubr.bf16.mxu0 0
        %971 = vmatmul.mubr.bf16.gmra.mrb[0].mxu0 %v529
        %v972 = vpop.f32.mrb[0].mxu0
        %v973 = vadd.f32 0.0, %v972
        %v974 = vpop.f32.mrb[0].mxu0
        %v975 = vadd.f32 0.0, %v974
        %v976 = vpop.f32.mrb[0].mxu0
        %v977 = vadd.f32 0.0, %v976
        %v978 = vpop.f32.mrb[0].mxu0
        %v979 = vadd.f32 0.0, %v978
        %980 = vmatprep.mubr.bf16.mxu0 0
        %981 = vmatmul.mubr.bf16.gmra.mrb[0].mxu0 %v530
        %v982 = vpop.f32.mrb[0].mxu0
        %v983 = vadd.f32 0.0, %v982
        %v984 = vpop.f32.mrb[0].mxu0
        %v985 = vadd.f32 0.0, %v984
        %v986 = vpop.f32.mrb[0].mxu0
        %v987 = vadd.f32 0.0, %v986
        %v988 = vpop.f32.mrb[0].mxu0
        %v989 = vadd.f32 0.0, %v988
        %990 = vmatprep.mubr.bf16.mxu0 0
        %991 = vmatmul.mubr.bf16.gmra.mrb[0].mxu0 %v531
        %v992 = vpop.f32.mrb[0].mxu0
        %v993 = vadd.f32 0.0, %v992
        %v994 = vpop.f32.mrb[0].mxu0
        %v995 = vadd.f32 0.0, %v994
        %v996 = vpop.f32.mrb[0].mxu0
        %v997 = vadd.f32 0.0, %v996
        %v998 = vpop.f32.mrb[0].mxu0
        %v999 = vadd.f32 0.0, %v998
        %1000 = vmatprep.mubr.bf16.mxu0 0
        %1001 = vmatmul.mubr.bf16.gmra.mrb[0].mxu0 %v532
        %v1002 = vpop.f32.mrb[0].mxu0
        %v1003 = vadd.f32 0.0, %v1002
        %v1004 = vpop.f32.mrb[0].mxu0
        %v1005 = vadd.f32 0.0, %v1004
        %v1006 = vpop.f32.mrb[0].mxu0
        %v1007 = vadd.f32 0.0, %v1006
        %v1008 = vpop.f32.mrb[0].mxu0
        %v1009 = vadd.f32 0.0, %v1008
        %1010 = vmatprep.mubr.bf16.mxu0 0
        %1011 = vmatmul.mubr.bf16.gmra.mrb[0].mxu0 %v533
        %v1012 = vpop.f32.mrb[0].mxu0
        %v1013 = vadd.f32 0.0, %v1012
        %v1014 = vpop.f32.mrb[0].mxu0
        %v1015 = vadd.f32 0.0, %v1014
        %v1016 = vpop.f32.mrb[0].mxu0
        %v1017 = vadd.f32 0.0, %v1016
        %v1018 = vpop.f32.mrb[0].mxu0
        %v1019 = vadd.f32 0.0, %v1018
        %1020 = vmatprep.mubr.bf16.mxu0 0
        %1021 = vmatmul.mubr.bf16.gmra.mrb[0].mxu0 %v534
        %v1022 = vpop.f32.mrb[0].mxu0
        %v1023 = vadd.f32 0.0, %v1022
        %v1024 = vpop.f32.mrb[0].mxu0
        %v1025 = vadd.f32 0.0, %v1024
        %v1026 = vpop.f32.mrb[0].mxu0
        %v1027 = vadd.f32 0.0, %v1026
        %v1028 = vpop.f32.mrb[0].mxu0
        %v1029 = vadd.f32 0.0, %v1028
        %1030 = vmatprep.mubr.bf16.mxu0 0
        %1031 = vmatmul.mubr.bf16.gmra.mrb[0].mxu0 %v535
        %v1032 = vpop.f32.mrb[0].mxu0
        %v1033 = vadd.f32 0.0, %v1032
        %v1034 = vpop.f32.mrb[0].mxu0
        %v1035 = vadd.f32 0.0, %v1034
        %v1036 = vpop.f32.mrb[0].mxu0
        %v1037 = vadd.f32 0.0, %v1036
        %v1038 = vpop.f32.mrb[0].mxu0
        %v1039 = vadd.f32 0.0, %v1038
        %1040 = vmatprep.mubr.bf16.mxu0 0
        %1041 = vmatmul.mubr.bf16.gmra.mrb[0].mxu0 %v536
        %v1042 = vpop.f32.mrb[0].mxu0
        %v1043 = vadd.f32 0.0, %v1042
        %v1044 = vpop.f32.mrb[0].mxu0
        %v1045 = vadd.f32 0.0, %v1044
        %v1046 = vpop.f32.mrb[0].mxu0
        %v1047 = vadd.f32 0.0, %v1046
        %v1048 = vpop.f32.mrb[0].mxu0
        %v1049 = vadd.f32 0.0, %v1048
        %1050 = vdwg.mxu0
        %1051 = vmatprep.subr.bf16.mxu0 %v734
        %1052 = vmatpush1.bf16.msra.mxu0 %v733
        %1053 = vmatprep.subr.bf16.mxu0 %v740
        %1054 = vmatpush1.bf16.msra.mxu0 %v739
        %1055 = vmatprep.subr.bf16.mxu0 %v746
        %1056 = vmatpush1.bf16.msra.mxu0 %v745
        %1057 = vmatprep.subr.bf16.mxu0 %v752
        %1058 = vmatpush1.bf16.msra.mxu0 %v751
        %1059 = vmatprep.subr.bf16.mxu0 %v758
        %1060 = vmatpush1.bf16.msra.mxu0 %v757
        %1061 = vmatprep.subr.bf16.mxu0 %v764
        %1062 = vmatpush1.bf16.msra.mxu0 %v763
        %1063 = vmatprep.subr.bf16.mxu0 %v770
        %1064 = vmatpush1.bf16.msra.mxu0 %v769
        %1065 = vmatprep.subr.bf16.mxu0 %v776
        %1066 = vmatpush1.bf16.msra.mxu0 %v775
        %1067 = vmatprep.subr.bf16.mxu0 0
        %1068 = vmatpush1.bf16.msra.mxu0 0
        %1069 = vmatprep.subr.bf16.mxu0 0
        %1070 = vmatpush1.bf16.msra.mxu0 0
        %1071 = vmatprep.subr.bf16.mxu0 0
        %1072 = vmatpush1.bf16.msra.mxu0 0
        %1073 = vmatprep.subr.bf16.mxu0 0
        %1074 = vmatpush1.bf16.msra.mxu0 0
        %1075 = vmatprep.subr.bf16.mxu0 0
        %1076 = vmatpush1.bf16.msra.mxu0 0
        %1077 = vmatprep.subr.bf16.mxu0 0
        %1078 = vmatpush1.bf16.msra.mxu0 0
        %1079 = vmatprep.subr.bf16.mxu0 0
        %1080 = vmatpush1.bf16.msra.mxu0 0
        %1081 = vmatprep.subr.bf16.mxu0 0
        %1082 = vmatpush1.bf16.msra.mxu0 0
        %1083 = vmatprep.mubr.bf16.mxu0 0
        %1084 = vmatmul.mubr.bf16.gmra.mrb[0].mxu0 %v529
        %v1085 = vpop.f32.mrb[0].mxu0
        %v1086 = vadd.f32 0.0, %v1085
        %v1087 = vpop.f32.mrb[0].mxu0
        %v1088 = vadd.f32 0.0, %v1087
        %v1089 = vpop.f32.mrb[0].mxu0
        %v1090 = vadd.f32 0.0, %v1089
        %v1091 = vpop.f32.mrb[0].mxu0
        %v1092 = vadd.f32 0.0, %v1091
        %1093 = vmatprep.mubr.bf16.mxu0 0
        %1094 = vmatmul.mubr.bf16.gmra.mrb[0].mxu0 %v530
        %v1095 = vpop.f32.mrb[0].mxu0
        %v1096 = vadd.f32 0.0, %v1095
        %v1097 = vpop.f32.mrb[0].mxu0
        %v1098 = vadd.f32 0.0, %v1097
        %v1099 = vpop.f32.mrb[0].mxu0
        %v1100 = vadd.f32 0.0, %v1099
        %v1101 = vpop.f32.mrb[0].mxu0
        %v1102 = vadd.f32 0.0, %v1101
        %1103 = vmatprep.mubr.bf16.mxu0 0
        %1104 = vmatmul.mubr.bf16.gmra.mrb[0].mxu0 %v531
        %v1105 = vpop.f32.mrb[0].mxu0
        %v1106 = vadd.f32 0.0, %v1105
        %v1107 = vpop.f32.mrb[0].mxu0
        %v1108 = vadd.f32 0.0, %v1107
        %v1109 = vpop.f32.mrb[0].mxu0
        %v1110 = vadd.f32 0.0, %v1109
        %v1111 = vpop.f32.mrb[0].mxu0
        %v1112 = vadd.f32 0.0, %v1111
        %1113 = vmatprep.mubr.bf16.mxu0 0
        %1114 = vmatmul.mubr.bf16.gmra.mrb[0].mxu0 %v532
        %v1115 = vpop.f32.mrb[0].mxu0
        %v1116 = vadd.f32 0.0, %v1115
        %v1117 = vpop.f32.mrb[0].mxu0
        %v1118 = vadd.f32 0.0, %v1117
        %v1119 = vpop.f32.mrb[0].mxu0
        %v1120 = vadd.f32 0.0, %v1119
        %v1121 = vpop.f32.mrb[0].mxu0
        %v1122 = vadd.f32 0.0, %v1121
        %1123 = vmatprep.mubr.bf16.mxu0 0
        %1124 = vmatmul.mubr.bf16.gmra.mrb[0].mxu0 %v533
        %v1125 = vpop.f32.mrb[0].mxu0
        %v1126 = vadd.f32 0.0, %v1125
        %v1127 = vpop.f32.mrb[0].mxu0
        %v1128 = vadd.f32 0.0, %v1127
        %v1129 = vpop.f32.mrb[0].mxu0
        %v1130 = vadd.f32 0.0, %v1129
        %v1131 = vpop.f32.mrb[0].mxu0
        %v1132 = vadd.f32 0.0, %v1131
        %1133 = vmatprep.mubr.bf16.mxu0 0
        %1134 = vmatmul.mubr.bf16.gmra.mrb[0].mxu0 %v534
        %v1135 = vpop.f32.mrb[0].mxu0
        %v1136 = vadd.f32 0.0, %v1135
        %v1137 = vpop.f32.mrb[0].mxu0
        %v1138 = vadd.f32 0.0, %v1137
        %v1139 = vpop.f32.mrb[0].mxu0
        %v1140 = vadd.f32 0.0, %v1139
        %v1141 = vpop.f32.mrb[0].mxu0
        %v1142 = vadd.f32 0.0, %v1141
        %1143 = vmatprep.mubr.bf16.mxu0 0
        %1144 = vmatmul.mubr.bf16.gmra.mrb[0].mxu0 %v535
        %v1145 = vpop.f32.mrb[0].mxu0
        %v1146 = vadd.f32 0.0, %v1145
        %v1147 = vpop.f32.mrb[0].mxu0
        %v1148 = vadd.f32 0.0, %v1147
        %v1149 = vpop.f32.mrb[0].mxu0
        %v1150 = vadd.f32 0.0, %v1149
        %v1151 = vpop.f32.mrb[0].mxu0
        %v1152 = vadd.f32 0.0, %v1151
        %1153 = vmatprep.mubr.bf16.mxu0 0
        %1154 = vmatmul.mubr.bf16.gmra.mrb[0].mxu0 %v536
        %v1155 = vpop.f32.mrb[0].mxu0
        %v1156 = vadd.f32 0.0, %v1155
        %v1157 = vpop.f32.mrb[0].mxu0
        %v1158 = vadd.f32 0.0, %v1157
        %v1159 = vpop.f32.mrb[0].mxu0
        %v1160 = vadd.f32 0.0, %v1159
        %v1161 = vpop.f32.mrb[0].mxu0
        %v1162 = vadd.f32 0.0, %v1161
        %1163 = vdwg.mxu0
        %v1164 = vpack.c.bf16 %v864, %v860
        %v1165 = vpack.c.bf16 %v874, %v870
        %v1166 = vpack.c.bf16 %v884, %v880
        %v1167 = vpack.c.bf16 %v894, %v890
        %v1168 = vpack.c.bf16 %v866, %v862
        %v1169 = vpack.c.bf16 %v876, %v872
        %v1170 = vpack.c.bf16 %v886, %v882
        %v1171 = vpack.c.bf16 %v896, %v892
        %v1172 = vpack.c.bf16 %v977, %v973
        %v1173 = vpack.c.bf16 %v987, %v983
        %v1174 = vpack.c.bf16 %v997, %v993
        %v1175 = vpack.c.bf16 %v1007, %v1003
        %1176 = vmatprep.subr.bf16.mxu0 0
        %1177 = vmatpush1.bf16.xpose.msra.mxu0 %v1168
        %1178 = vmatprep.subr.bf16.mxu0 0
        %1179 = vmatpush1.bf16.xpose.msra.mxu0 %v1169
        %1180 = vmatprep.subr.bf16.mxu0 0
        %1181 = vmatpush1.bf16.xpose.msra.mxu0 %v1170
        %1182 = vmatprep.subr.bf16.mxu0 0
        %1183 = vmatpush1.bf16.xpose.msra.mxu0 %v1171
        %1184 = vmatprep.subr.bf16.mxu0 0
        %1185 = vmatpush1.bf16.xpose.msra.mxu0 0
        %1186 = vmatprep.subr.bf16.mxu0 0
        %1187 = vmatpush1.bf16.xpose.msra.mxu0 0
        %1188 = vmatprep.subr.bf16.mxu0 0
        %1189 = vmatpush1.bf16.xpose.msra.mxu0 0
        %1190 = vmatprep.subr.bf16.mxu0 0
        %1191 = vmatpush1.bf16.xpose.msra.mxu0 0
        %1192 = vmatprep.subr.bf16.mxu0 0
        %1193 = vmatpush1.bf16.xpose.msra.mxu0 0
        %1194 = vmatprep.subr.bf16.mxu0 0
        %1195 = vmatpush1.bf16.xpose.msra.mxu0 0
        %1196 = vmatprep.subr.bf16.mxu0 0
        %1197 = vmatpush1.bf16.xpose.msra.mxu0 0
        %1198 = vmatprep.subr.bf16.mxu0 0
        %1199 = vmatpush1.bf16.xpose.msra.mxu0 0
        %1200 = vmatprep.subr.bf16.mxu0 0
        %1201 = vmatpush1.bf16.xpose.msra.mxu0 0
        %1202 = vmatprep.subr.bf16.mxu0 0
        %1203 = vmatpush1.bf16.xpose.msra.mxu0 0
        %1204 = vmatprep.subr.bf16.mxu0 0
        %1205 = vmatpush1.bf16.xpose.msra.mxu0 0
        %1206 = vmatprep.subr.bf16.mxu0 0
        %1207 = vmatpush1.bf16.xpose.msra.mxu0 0
        %1208 = vmatprep.mubr.bf16.mxu0 0
        %1209 = vmatmul.mubr.bf16.gmra.mrb[0].mxu0 %v1164
        %v1210 = vpop.f32.mrb[0].mxu0
        %v1211 = vadd.f32 0.0, %v1210
        %v1212 = vpop.f32.mrb[0].mxu0
        %v1213 = vpop.f32.mrb[0].mxu0
        %v1214 = vadd.f32 0.0, %v1213
        %v1215 = vpop.f32.mrb[0].mxu0
        %1216 = vmatprep.mubr.bf16.mxu0 0
        %1217 = vmatmul.mubr.bf16.gmra.mrb[0].mxu0 %v1165
        %v1218 = vpop.f32.mrb[0].mxu0
        %v1219 = vadd.f32 0.0, %v1218
        %v1220 = vpop.f32.mrb[0].mxu0
        %v1221 = vpop.f32.mrb[0].mxu0
        %v1222 = vadd.f32 0.0, %v1221
        %v1223 = vpop.f32.mrb[0].mxu0
        %1224 = vmatprep.mubr.bf16.mxu0 0
        %1225 = vmatmul.mubr.bf16.gmra.mrb[0].mxu0 %v1166
        %v1226 = vpop.f32.mrb[0].mxu0
        %v1227 = vadd.f32 0.0, %v1226
        %v1228 = vpop.f32.mrb[0].mxu0
        %v1229 = vpop.f32.mrb[0].mxu0
        %v1230 = vadd.f32 0.0, %v1229
        %v1231 = vpop.f32.mrb[0].mxu0
        %1232 = vmatprep.mubr.bf16.mxu0 0
        %1233 = vmatmul.mubr.bf16.gmra.mrb[0].mxu0 %v1167
        %v1234 = vpop.f32.mrb[0].mxu0
        %v1235 = vadd.f32 0.0, %v1234
        %v1236 = vpop.f32.mrb[0].mxu0
        %v1237 = vpop.f32.mrb[0].mxu0
        %v1238 = vadd.f32 0.0, %v1237
        %v1239 = vpop.f32.mrb[0].mxu0
        %1240 = vdwg.mxu0
        %v1241 = vmul.f32 %v1211, 0.125
        %v1242 = vmul.f32 %v1214, 0.125
        %v1243 = vmul.f32 %v1219, 0.125
        %v1244 = vmul.f32 %v1222, 0.125
        %v1245 = vmul.f32 %v1227, 0.125
        %v1246 = vmul.f32 %v1230, 0.125
        %v1247 = vmul.f32 %v1235, 0.125
        %v1248 = vmul.f32 %v1238, 0.125
        %vm1249 = vcmask 523264
        %v1250 = vsel %vm1249, %v1241, -inf
        %1251 = vmax.xlane.f32.xlu0 %v1250
        %v1252 = vpop.xlane.xlu0 %1251
        %v1253 = vsel %vm1249, %v1242, -inf
        %1254 = vmax.xlane.f32.xlu0 %v1253
        %v1255 = vpop.xlane.xlu0 %1254
        %v1256 = vsel %vm1249, %v1243, -inf
        %1257 = vmax.xlane.f32.xlu0 %v1256
        %v1258 = vpop.xlane.xlu0 %1257
        %v1259 = vsel %vm1249, %v1244, -inf
        %1260 = vmax.xlane.f32.xlu0 %v1259
        %v1261 = vpop.xlane.xlu0 %1260
        %v1262 = vsel %vm1249, %v1245, -inf
        %1263 = vmax.xlane.f32.xlu0 %v1262
        %v1264 = vpop.xlane.xlu0 %1263
        %v1265 = vsel %vm1249, %v1246, -inf
        %1266 = vmax.xlane.f32.xlu0 %v1265
        %v1267 = vpop.xlane.xlu0 %1266
        %v1268 = vsel %vm1249, %v1247, -inf
        %1269 = vmax.xlane.f32.xlu0 %v1268
        %v1270 = vpop.xlane.xlu0 %1269
        %v1271 = vsel %vm1249, %v1248, -inf
        %1272 = vmax.xlane.f32.xlu0 %v1271
        %v1273 = vpop.xlane.xlu0 %1272
        %v1274 = vsub.f32 %v1241, %v1252
        %v1275 = vsub.f32 %v1242, %v1255
        %v1276 = vsub.f32 %v1243, %v1258
        %v1277 = vsub.f32 %v1244, %v1261
        %v1278 = vsub.f32 %v1245, %v1264
        %v1279 = vsub.f32 %v1246, %v1267
        %v1280 = vsub.f32 %v1247, %v1270
        %v1281 = vsub.f32 %v1248, %v1273
        %v1282 = vmul.f32 %v1274, 1.442695
        %v1283 = vpow.pop %v1282
        %v1284 = vmul.f32 %v1275, 1.442695
        %v1285 = vpow.pop %v1284
        %v1286 = vmul.f32 %v1276, 1.442695
        %v1287 = vpow.pop %v1286
        %v1288 = vmul.f32 %v1277, 1.442695
        %v1289 = vpow.pop %v1288
        %v1290 = vmul.f32 %v1278, 1.442695
        %v1291 = vpow.pop %v1290
        %v1292 = vmul.f32 %v1279, 1.442695
        %v1293 = vpow.pop %v1292
        %v1294 = vmul.f32 %v1280, 1.442695
        %v1295 = vpow.pop %v1294
        %v1296 = vmul.f32 %v1281, 1.442695
        %v1297 = vpow.pop %v1296
        %v1298 = vsel %vm1249, %v1283, 0.0
        %1299 = vadd.xlane.f32.xlu0 %v1298
        %v1300 = vpop.xlane.xlu0 %1299
        %v1301 = vsel %vm1249, %v1285, 0.0
        %1302 = vadd.xlane.f32.xlu0 %v1301
        %v1303 = vpop.xlane.xlu0 %1302
        %v1304 = vsel %vm1249, %v1287, 0.0
        %1305 = vadd.xlane.f32.xlu0 %v1304
        %v1306 = vpop.xlane.xlu0 %1305
        %v1307 = vsel %vm1249, %v1289, 0.0
        %1308 = vadd.xlane.f32.xlu0 %v1307
        %v1309 = vpop.xlane.xlu0 %1308
        %v1310 = vsel %vm1249, %v1291, 0.0
        %1311 = vadd.xlane.f32.xlu0 %v1310
        %v1312 = vpop.xlane.xlu0 %1311
        %v1313 = vsel %vm1249, %v1293, 0.0
        %1314 = vadd.xlane.f32.xlu0 %v1313
        %v1315 = vpop.xlane.xlu0 %1314
        %v1316 = vsel %vm1249, %v1295, 0.0
        %1317 = vadd.xlane.f32.xlu0 %v1316
        %v1318 = vpop.xlane.xlu0 %1317
        %v1319 = vsel %vm1249, %v1297, 0.0
        %1320 = vadd.xlane.f32.xlu0 %v1319
        %v1321 = vpop.xlane.xlu0 %1320
        %v1322 = vrcp.pop %v1300
        %v1323 = vrcp.pop %v1303
        %v1324 = vrcp.pop %v1306
        %v1325 = vrcp.pop %v1309
        %v1326 = vrcp.pop %v1312
        %v1327 = vrcp.pop %v1315
        %v1328 = vrcp.pop %v1318
        %v1329 = vrcp.pop %v1321
        %v1330 = vmul.f32 %v1283, %v1322
        %v1331 = vmul.f32 %v1285, %v1323
        %v1332 = vmul.f32 %v1287, %v1324
        %v1333 = vmul.f32 %v1289, %v1325
        %v1334 = vmul.f32 %v1291, %v1326
        %v1335 = vmul.f32 %v1293, %v1327
        %v1336 = vmul.f32 %v1295, %v1328
        %v1337 = vmul.f32 %v1297, %v1329
        %v1338 = vpack.c.bf16 %v1331, %v1330
        %v1339 = vpack.c.bf16 %v1333, %v1332
        %v1340 = vpack.c.bf16 %v1335, %v1334
        %v1341 = vpack.c.bf16 %v1337, %v1336
        %v1343 = vsel %vm1249, %v1338, 0
        %v1346 = vsel %vm1249, %v1339, 0
        %v1349 = vsel %vm1249, %v1340, 0
        %v1352 = vsel %vm1249, %v1341, 0
        %1354 = vmatprep.subr.bf16.mxu0 0
        %1355 = vmatpush1.bf16.msra.mxu0 %v1172
        %1356 = vmatprep.subr.bf16.mxu0 0
        %1357 = vmatpush1.bf16.msra.mxu0 %v1173
        %1358 = vmatprep.subr.bf16.mxu0 0
        %1359 = vmatpush1.bf16.msra.mxu0 %v1174
        %1360 = vmatprep.subr.bf16.mxu0 0
        %1361 = vmatpush1.bf16.msra.mxu0 %v1175
        %1362 = vmatprep.subr.bf16.mxu0 0
        %1363 = vmatpush1.bf16.msra.mxu0 0
        %1364 = vmatprep.subr.bf16.mxu0 0
        %1365 = vmatpush1.bf16.msra.mxu0 0
        %1366 = vmatprep.subr.bf16.mxu0 0
        %1367 = vmatpush1.bf16.msra.mxu0 0
        %1368 = vmatprep.subr.bf16.mxu0 0
        %1369 = vmatpush1.bf16.msra.mxu0 0
        %1370 = vmatprep.subr.bf16.mxu0 0
        %1371 = vmatpush1.bf16.msra.mxu0 0
        %1372 = vmatprep.subr.bf16.mxu0 0
        %1373 = vmatpush1.bf16.msra.mxu0 0
        %1374 = vmatprep.subr.bf16.mxu0 0
        %1375 = vmatpush1.bf16.msra.mxu0 0
        %1376 = vmatprep.subr.bf16.mxu0 0
        %1377 = vmatpush1.bf16.msra.mxu0 0
        %1378 = vmatprep.subr.bf16.mxu0 0
        %1379 = vmatpush1.bf16.msra.mxu0 0
        %1380 = vmatprep.subr.bf16.mxu0 0
        %1381 = vmatpush1.bf16.msra.mxu0 0
        %1382 = vmatprep.subr.bf16.mxu0 0
        %1383 = vmatpush1.bf16.msra.mxu0 0
        %1384 = vmatprep.subr.bf16.mxu0 0
        %1385 = vmatpush1.bf16.msra.mxu0 0
        %1386 = vmatprep.mubr.bf16.mxu0 0
        %1387 = vmatmul.mubr.bf16.gmra.mrb[0].mxu0 %v1343
        %v1388 = vpop.f32.mrb[0].mxu0
        %v1389 = vadd.f32 0.0, %v1388
        %v1390 = vpop.f32.mrb[0].mxu0
        %v1391 = vpop.f32.mrb[0].mxu0
        %v1392 = vadd.f32 0.0, %v1391
        %v1393 = vpop.f32.mrb[0].mxu0
        %1394 = vmatprep.mubr.bf16.mxu0 0
        %1395 = vmatmul.mubr.bf16.gmra.mrb[0].mxu0 %v1346
        %v1396 = vpop.f32.mrb[0].mxu0
        %v1397 = vadd.f32 0.0, %v1396
        %v1398 = vpop.f32.mrb[0].mxu0
        %v1399 = vpop.f32.mrb[0].mxu0
        %v1400 = vadd.f32 0.0, %v1399
        %v1401 = vpop.f32.mrb[0].mxu0
        %1402 = vmatprep.mubr.bf16.mxu0 0
        %1403 = vmatmul.mubr.bf16.gmra.mrb[0].mxu0 %v1349
        %v1404 = vpop.f32.mrb[0].mxu0
        %v1405 = vadd.f32 0.0, %v1404
        %v1406 = vpop.f32.mrb[0].mxu0
        %v1407 = vpop.f32.mrb[0].mxu0
        %v1408 = vadd.f32 0.0, %v1407
        %v1409 = vpop.f32.mrb[0].mxu0
        %1410 = vmatprep.mubr.bf16.mxu0 0
        %1411 = vmatmul.mubr.bf16.gmra.mrb[0].mxu0 %v1352
        %v1412 = vpop.f32.mrb[0].mxu0
        %v1413 = vadd.f32 0.0, %v1412
        %v1414 = vpop.f32.mrb[0].mxu0
        %v1415 = vpop.f32.mrb[0].mxu0
        %v1416 = vadd.f32 0.0, %v1415
        %v1417 = vpop.f32.mrb[0].mxu0
        %1418 = vdwg.mxu0
        %v1419 = vpack.c.bf16 %v979, %v975
        %v1420 = vpack.c.bf16 %v989, %v985
        %v1421 = vpack.c.bf16 %v999, %v995
        %v1422 = vpack.c.bf16 %v1009, %v1005
        %v1423 = vpack.c.bf16 %v1090, %v1086
        %v1424 = vpack.c.bf16 %v1100, %v1096
        %v1425 = vpack.c.bf16 %v1110, %v1106
        %v1426 = vpack.c.bf16 %v1120, %v1116
        %v1427 = vpack.c.bf16 %v1092, %v1088
        %v1428 = vpack.c.bf16 %v1102, %v1098
        %v1429 = vpack.c.bf16 %v1112, %v1108
        %v1430 = vpack.c.bf16 %v1122, %v1118
        %1431 = vmatprep.subr.bf16.mxu0 0
        %1432 = vmatpush1.bf16.xpose.msra.mxu0 %v1423
        %1433 = vmatprep.subr.bf16.mxu0 0
        %1434 = vmatpush1.bf16.xpose.msra.mxu0 %v1424
        %1435 = vmatprep.subr.bf16.mxu0 0
        %1436 = vmatpush1.bf16.xpose.msra.mxu0 %v1425
        %1437 = vmatprep.subr.bf16.mxu0 0
        %1438 = vmatpush1.bf16.xpose.msra.mxu0 %v1426
        %1439 = vmatprep.subr.bf16.mxu0 0
        %1440 = vmatpush1.bf16.xpose.msra.mxu0 0
        %1441 = vmatprep.subr.bf16.mxu0 0
        %1442 = vmatpush1.bf16.xpose.msra.mxu0 0
        %1443 = vmatprep.subr.bf16.mxu0 0
        %1444 = vmatpush1.bf16.xpose.msra.mxu0 0
        %1445 = vmatprep.subr.bf16.mxu0 0
        %1446 = vmatpush1.bf16.xpose.msra.mxu0 0
        %1447 = vmatprep.subr.bf16.mxu0 0
        %1448 = vmatpush1.bf16.xpose.msra.mxu0 0
        %1449 = vmatprep.subr.bf16.mxu0 0
        %1450 = vmatpush1.bf16.xpose.msra.mxu0 0
        %1451 = vmatprep.subr.bf16.mxu0 0
        %1452 = vmatpush1.bf16.xpose.msra.mxu0 0
        %1453 = vmatprep.subr.bf16.mxu0 0
        %1454 = vmatpush1.bf16.xpose.msra.mxu0 0
        %1455 = vmatprep.subr.bf16.mxu0 0
        %1456 = vmatpush1.bf16.xpose.msra.mxu0 0
        %1457 = vmatprep.subr.bf16.mxu0 0
        %1458 = vmatpush1.bf16.xpose.msra.mxu0 0
        %1459 = vmatprep.subr.bf16.mxu0 0
        %1460 = vmatpush1.bf16.xpose.msra.mxu0 0
        %1461 = vmatprep.subr.bf16.mxu0 0
        %1462 = vmatpush1.bf16.xpose.msra.mxu0 0
        %1463 = vmatprep.mubr.bf16.mxu0 0
        %1464 = vmatmul.mubr.bf16.gmra.mrb[0].mxu0 %v1419
        %v1465 = vpop.f32.mrb[0].mxu0
        %v1466 = vadd.f32 0.0, %v1465
        %v1467 = vpop.f32.mrb[0].mxu0
        %v1468 = vpop.f32.mrb[0].mxu0
        %v1469 = vadd.f32 0.0, %v1468
        %v1470 = vpop.f32.mrb[0].mxu0
        %1471 = vmatprep.mubr.bf16.mxu0 0
        %1472 = vmatmul.mubr.bf16.gmra.mrb[0].mxu0 %v1420
        %v1473 = vpop.f32.mrb[0].mxu0
        %v1474 = vadd.f32 0.0, %v1473
        %v1475 = vpop.f32.mrb[0].mxu0
        %v1476 = vpop.f32.mrb[0].mxu0
        %v1477 = vadd.f32 0.0, %v1476
        %v1478 = vpop.f32.mrb[0].mxu0
        %1479 = vmatprep.mubr.bf16.mxu0 0
        %1480 = vmatmul.mubr.bf16.gmra.mrb[0].mxu0 %v1421
        %v1481 = vpop.f32.mrb[0].mxu0
        %v1482 = vadd.f32 0.0, %v1481
        %v1483 = vpop.f32.mrb[0].mxu0
        %v1484 = vpop.f32.mrb[0].mxu0
        %v1485 = vadd.f32 0.0, %v1484
        %v1486 = vpop.f32.mrb[0].mxu0
        %1487 = vmatprep.mubr.bf16.mxu0 0
        %1488 = vmatmul.mubr.bf16.gmra.mrb[0].mxu0 %v1422
        %v1489 = vpop.f32.mrb[0].mxu0
        %v1490 = vadd.f32 0.0, %v1489
        %v1491 = vpop.f32.mrb[0].mxu0
        %v1492 = vpop.f32.mrb[0].mxu0
        %v1493 = vadd.f32 0.0, %v1492
        %v1494 = vpop.f32.mrb[0].mxu0
        %1495 = vdwg.mxu0
        %v1496 = vmul.f32 %v1466, 0.125
        %v1497 = vmul.f32 %v1469, 0.125
        %v1498 = vmul.f32 %v1474, 0.125
        %v1499 = vmul.f32 %v1477, 0.125
        %v1500 = vmul.f32 %v1482, 0.125
        %v1501 = vmul.f32 %v1485, 0.125
        %v1502 = vmul.f32 %v1490, 0.125
        %v1503 = vmul.f32 %v1493, 0.125
        %v1504 = vsel %vm1249, %v1496, -inf
        %1505 = vmax.xlane.f32.xlu0 %v1504
        %v1506 = vpop.xlane.xlu0 %1505
        %v1507 = vsel %vm1249, %v1497, -inf
        %1508 = vmax.xlane.f32.xlu0 %v1507
        %v1509 = vpop.xlane.xlu0 %1508
        %v1510 = vsel %vm1249, %v1498, -inf
        %1511 = vmax.xlane.f32.xlu0 %v1510
        %v1512 = vpop.xlane.xlu0 %1511
        %v1513 = vsel %vm1249, %v1499, -inf
        %1514 = vmax.xlane.f32.xlu0 %v1513
        %v1515 = vpop.xlane.xlu0 %1514
        %v1516 = vsel %vm1249, %v1500, -inf
        %1517 = vmax.xlane.f32.xlu0 %v1516
        %v1518 = vpop.xlane.xlu0 %1517
        %v1519 = vsel %vm1249, %v1501, -inf
        %1520 = vmax.xlane.f32.xlu0 %v1519
        %v1521 = vpop.xlane.xlu0 %1520
        %v1522 = vsel %vm1249, %v1502, -inf
        %1523 = vmax.xlane.f32.xlu0 %v1522
        %v1524 = vpop.xlane.xlu0 %1523
        %v1525 = vsel %vm1249, %v1503, -inf
        %1526 = vmax.xlane.f32.xlu0 %v1525
        %v1527 = vpop.xlane.xlu0 %1526
        %v1528 = vsub.f32 %v1496, %v1506
        %v1529 = vsub.f32 %v1497, %v1509
        %v1530 = vsub.f32 %v1498, %v1512
        %v1531 = vsub.f32 %v1499, %v1515
        %v1532 = vsub.f32 %v1500, %v1518
        %v1533 = vsub.f32 %v1501, %v1521
        %v1534 = vsub.f32 %v1502, %v1524
        %v1535 = vsub.f32 %v1503, %v1527
        %v1536 = vmul.f32 %v1528, 1.442695
        %v1537 = vpow.pop %v1536
        %v1538 = vmul.f32 %v1529, 1.442695
        %v1539 = vpow.pop %v1538
        %v1540 = vmul.f32 %v1530, 1.442695
        %v1541 = vpow.pop %v1540
        %v1542 = vmul.f32 %v1531, 1.442695
        %v1543 = vpow.pop %v1542
        %v1544 = vmul.f32 %v1532, 1.442695
        %v1545 = vpow.pop %v1544
        %v1546 = vmul.f32 %v1533, 1.442695
        %v1547 = vpow.pop %v1546
        %v1548 = vmul.f32 %v1534, 1.442695
        %v1549 = vpow.pop %v1548
        %v1550 = vmul.f32 %v1535, 1.442695
        %v1551 = vpow.pop %v1550
        %v1552 = vsel %vm1249, %v1537, 0.0
        %1553 = vadd.xlane.f32.xlu0 %v1552
        %v1554 = vpop.xlane.xlu0 %1553
        %v1555 = vsel %vm1249, %v1539, 0.0
        %1556 = vadd.xlane.f32.xlu0 %v1555
        %v1557 = vpop.xlane.xlu0 %1556
        %v1558 = vsel %vm1249, %v1541, 0.0
        %1559 = vadd.xlane.f32.xlu0 %v1558
        %v1560 = vpop.xlane.xlu0 %1559
        %v1561 = vsel %vm1249, %v1543, 0.0
        %1562 = vadd.xlane.f32.xlu0 %v1561
        %v1563 = vpop.xlane.xlu0 %1562
        %v1564 = vsel %vm1249, %v1545, 0.0
        %1565 = vadd.xlane.f32.xlu0 %v1564
        %v1566 = vpop.xlane.xlu0 %1565
        %v1567 = vsel %vm1249, %v1547, 0.0
        %1568 = vadd.xlane.f32.xlu0 %v1567
        %v1569 = vpop.xlane.xlu0 %1568
        %v1570 = vsel %vm1249, %v1549, 0.0
        %1571 = vadd.xlane.f32.xlu0 %v1570
        %v1572 = vpop.xlane.xlu0 %1571
        %v1573 = vsel %vm1249, %v1551, 0.0
        %1574 = vadd.xlane.f32.xlu0 %v1573
        %v1575 = vpop.xlane.xlu0 %1574
        %v1576 = vrcp.pop %v1554
        %v1577 = vrcp.pop %v1557
        %v1578 = vrcp.pop %v1560
        %v1579 = vrcp.pop %v1563
        %v1580 = vrcp.pop %v1566
        %v1581 = vrcp.pop %v1569
        %v1582 = vrcp.pop %v1572
        %v1583 = vrcp.pop %v1575
        %v1584 = vmul.f32 %v1537, %v1576
        %v1585 = vmul.f32 %v1539, %v1577
        %v1586 = vmul.f32 %v1541, %v1578
        %v1587 = vmul.f32 %v1543, %v1579
        %v1588 = vmul.f32 %v1545, %v1580
        %v1589 = vmul.f32 %v1547, %v1581
        %v1590 = vmul.f32 %v1549, %v1582
        %v1591 = vmul.f32 %v1551, %v1583
        %v1592 = vpack.c.bf16 %v1585, %v1584
        %v1593 = vpack.c.bf16 %v1587, %v1586
        %v1594 = vpack.c.bf16 %v1589, %v1588
        %v1595 = vpack.c.bf16 %v1591, %v1590
        %v1597 = vsel %vm1249, %v1592, 0
        %v1600 = vsel %vm1249, %v1593, 0
        %v1603 = vsel %vm1249, %v1594, 0
        %v1606 = vsel %vm1249, %v1595, 0
        %1608 = vmatprep.subr.bf16.mxu0 0
        %1609 = vmatpush1.bf16.msra.mxu0 %v1427
        %1610 = vmatprep.subr.bf16.mxu0 0
        %1611 = vmatpush1.bf16.msra.mxu0 %v1428
        %1612 = vmatprep.subr.bf16.mxu0 0
        %1613 = vmatpush1.bf16.msra.mxu0 %v1429
        %1614 = vmatprep.subr.bf16.mxu0 0
        %1615 = vmatpush1.bf16.msra.mxu0 %v1430
        %1616 = vmatprep.subr.bf16.mxu0 0
        %1617 = vmatpush1.bf16.msra.mxu0 0
        %1618 = vmatprep.subr.bf16.mxu0 0
        %1619 = vmatpush1.bf16.msra.mxu0 0
        %1620 = vmatprep.subr.bf16.mxu0 0
        %1621 = vmatpush1.bf16.msra.mxu0 0
        %1622 = vmatprep.subr.bf16.mxu0 0
        %1623 = vmatpush1.bf16.msra.mxu0 0
        %1624 = vmatprep.subr.bf16.mxu0 0
        %1625 = vmatpush1.bf16.msra.mxu0 0
        %1626 = vmatprep.subr.bf16.mxu0 0
        %1627 = vmatpush1.bf16.msra.mxu0 0
        %1628 = vmatprep.subr.bf16.mxu0 0
        %1629 = vmatpush1.bf16.msra.mxu0 0
        %1630 = vmatprep.subr.bf16.mxu0 0
        %1631 = vmatpush1.bf16.msra.mxu0 0
        %1632 = vmatprep.subr.bf16.mxu0 0
        %1633 = vmatpush1.bf16.msra.mxu0 0
        %1634 = vmatprep.subr.bf16.mxu0 0
        %1635 = vmatpush1.bf16.msra.mxu0 0
        %1636 = vmatprep.subr.bf16.mxu0 0
        %1637 = vmatpush1.bf16.msra.mxu0 0
        %1638 = vmatprep.subr.bf16.mxu0 0
        %1639 = vmatpush1.bf16.msra.mxu0 0
        %1640 = vmatprep.mubr.bf16.mxu0 0
        %1641 = vmatmul.mubr.bf16.gmra.mrb[0].mxu0 %v1597
        %v1642 = vpop.f32.mrb[0].mxu0
        %v1643 = vadd.f32 0.0, %v1642
        %v1644 = vpop.f32.mrb[0].mxu0
        %v1645 = vpop.f32.mrb[0].mxu0
        %v1646 = vadd.f32 0.0, %v1645
        %v1647 = vpop.f32.mrb[0].mxu0
        %1648 = vmatprep.mubr.bf16.mxu0 0
        %1649 = vmatmul.mubr.bf16.gmra.mrb[0].mxu0 %v1600
        %v1650 = vpop.f32.mrb[0].mxu0
        %v1651 = vadd.f32 0.0, %v1650
        %v1652 = vpop.f32.mrb[0].mxu0
        %v1653 = vpop.f32.mrb[0].mxu0
        %v1654 = vadd.f32 0.0, %v1653
        %v1655 = vpop.f32.mrb[0].mxu0
        %1656 = vmatprep.mubr.bf16.mxu0 0
        %1657 = vmatmul.mubr.bf16.gmra.mrb[0].mxu0 %v1603
        %v1658 = vpop.f32.mrb[0].mxu0
        %v1659 = vadd.f32 0.0, %v1658
        %v1660 = vpop.f32.mrb[0].mxu0
        %v1661 = vpop.f32.mrb[0].mxu0
        %v1662 = vadd.f32 0.0, %v1661
        %v1663 = vpop.f32.mrb[0].mxu0
        %1664 = vmatprep.mubr.bf16.mxu0 0
        %1665 = vmatmul.mubr.bf16.gmra.mrb[0].mxu0 %v1606
        %v1666 = vpop.f32.mrb[0].mxu0
        %v1667 = vadd.f32 0.0, %v1666
        %v1668 = vpop.f32.mrb[0].mxu0
        %v1669 = vpop.f32.mrb[0].mxu0
        %v1670 = vadd.f32 0.0, %v1669
        %v1671 = vpop.f32.mrb[0].mxu0
        %1672 = vdwg.mxu0
        %v1673 = vpack.c.bf16 %v904, %v900
        %v1674 = vpack.c.bf16 %v914, %v910
        %v1675 = vpack.c.bf16 %v924, %v920
        %v1676 = vpack.c.bf16 %v934, %v930
        %v1677 = vpack.c.bf16 %v906, %v902
        %v1678 = vpack.c.bf16 %v916, %v912
        %v1679 = vpack.c.bf16 %v926, %v922
        %v1680 = vpack.c.bf16 %v936, %v932
        %v1681 = vpack.c.bf16 %v1017, %v1013
        %v1682 = vpack.c.bf16 %v1027, %v1023
        %v1683 = vpack.c.bf16 %v1037, %v1033
        %v1684 = vpack.c.bf16 %v1047, %v1043
        %1685 = vmatprep.subr.bf16.mxu0 0
        %1686 = vmatpush1.bf16.xpose.msra.mxu0 %v1677
        %1687 = vmatprep.subr.bf16.mxu0 0
        %1688 = vmatpush1.bf16.xpose.msra.mxu0 %v1678
        %1689 = vmatprep.subr.bf16.mxu0 0
        %1690 = vmatpush1.bf16.xpose.msra.mxu0 %v1679
        %1691 = vmatprep.subr.bf16.mxu0 0
        %1692 = vmatpush1.bf16.xpose.msra.mxu0 %v1680
        %1693 = vmatprep.subr.bf16.mxu0 0
        %1694 = vmatpush1.bf16.xpose.msra.mxu0 0
        %1695 = vmatprep.subr.bf16.mxu0 0
        %1696 = vmatpush1.bf16.xpose.msra.mxu0 0
        %1697 = vmatprep.subr.bf16.mxu0 0
        %1698 = vmatpush1.bf16.xpose.msra.mxu0 0
        %1699 = vmatprep.subr.bf16.mxu0 0
        %1700 = vmatpush1.bf16.xpose.msra.mxu0 0
        %1701 = vmatprep.subr.bf16.mxu0 0
        %1702 = vmatpush1.bf16.xpose.msra.mxu0 0
        %1703 = vmatprep.subr.bf16.mxu0 0
        %1704 = vmatpush1.bf16.xpose.msra.mxu0 0
        %1705 = vmatprep.subr.bf16.mxu0 0
        %1706 = vmatpush1.bf16.xpose.msra.mxu0 0
        %1707 = vmatprep.subr.bf16.mxu0 0
        %1708 = vmatpush1.bf16.xpose.msra.mxu0 0
        %1709 = vmatprep.subr.bf16.mxu0 0
        %1710 = vmatpush1.bf16.xpose.msra.mxu0 0
        %1711 = vmatprep.subr.bf16.mxu0 0
        %1712 = vmatpush1.bf16.xpose.msra.mxu0 0
        %1713 = vmatprep.subr.bf16.mxu0 0
        %1714 = vmatpush1.bf16.xpose.msra.mxu0 0
        %1715 = vmatprep.subr.bf16.mxu0 0
        %1716 = vmatpush1.bf16.xpose.msra.mxu0 0
        %1717 = vmatprep.mubr.bf16.mxu0 0
        %1718 = vmatmul.mubr.bf16.gmra.mrb[0].mxu0 %v1673
        %v1719 = vpop.f32.mrb[0].mxu0
        %v1720 = vadd.f32 0.0, %v1719
        %v1721 = vpop.f32.mrb[0].mxu0
        %v1722 = vpop.f32.mrb[0].mxu0
        %v1723 = vadd.f32 0.0, %v1722
        %v1724 = vpop.f32.mrb[0].mxu0
        %1725 = vmatprep.mubr.bf16.mxu0 0
        %1726 = vmatmul.mubr.bf16.gmra.mrb[0].mxu0 %v1674
        %v1727 = vpop.f32.mrb[0].mxu0
        %v1728 = vadd.f32 0.0, %v1727
        %v1729 = vpop.f32.mrb[0].mxu0
        %v1730 = vpop.f32.mrb[0].mxu0
        %v1731 = vadd.f32 0.0, %v1730
        %v1732 = vpop.f32.mrb[0].mxu0
        %1733 = vmatprep.mubr.bf16.mxu0 0
        %1734 = vmatmul.mubr.bf16.gmra.mrb[0].mxu0 %v1675
        %v1735 = vpop.f32.mrb[0].mxu0
        %v1736 = vadd.f32 0.0, %v1735
        %v1737 = vpop.f32.mrb[0].mxu0
        %v1738 = vpop.f32.mrb[0].mxu0
        %v1739 = vadd.f32 0.0, %v1738
        %v1740 = vpop.f32.mrb[0].mxu0
        %1741 = vmatprep.mubr.bf16.mxu0 0
        %1742 = vmatmul.mubr.bf16.gmra.mrb[0].mxu0 %v1676
        %v1743 = vpop.f32.mrb[0].mxu0
        %v1744 = vadd.f32 0.0, %v1743
        %v1745 = vpop.f32.mrb[0].mxu0
        %v1746 = vpop.f32.mrb[0].mxu0
        %v1747 = vadd.f32 0.0, %v1746
        %v1748 = vpop.f32.mrb[0].mxu0
        %1749 = vdwg.mxu0
        %v1750 = vmul.f32 %v1720, 0.125
        %v1751 = vmul.f32 %v1723, 0.125
        %v1752 = vmul.f32 %v1728, 0.125
        %v1753 = vmul.f32 %v1731, 0.125
        %v1754 = vmul.f32 %v1736, 0.125
        %v1755 = vmul.f32 %v1739, 0.125
        %v1756 = vmul.f32 %v1744, 0.125
        %v1757 = vmul.f32 %v1747, 0.125
        %v1758 = vsel %vm1249, %v1750, -inf
        %1759 = vmax.xlane.f32.xlu0 %v1758
        %v1760 = vpop.xlane.xlu0 %1759
        %v1761 = vsel %vm1249, %v1751, -inf
        %1762 = vmax.xlane.f32.xlu0 %v1761
        %v1763 = vpop.xlane.xlu0 %1762
        %v1764 = vsel %vm1249, %v1752, -inf
        %1765 = vmax.xlane.f32.xlu0 %v1764
        %v1766 = vpop.xlane.xlu0 %1765
        %v1767 = vsel %vm1249, %v1753, -inf
        %1768 = vmax.xlane.f32.xlu0 %v1767
        %v1769 = vpop.xlane.xlu0 %1768
        %v1770 = vsel %vm1249, %v1754, -inf
        %1771 = vmax.xlane.f32.xlu0 %v1770
        %v1772 = vpop.xlane.xlu0 %1771
        %v1773 = vsel %vm1249, %v1755, -inf
        %1774 = vmax.xlane.f32.xlu0 %v1773
        %v1775 = vpop.xlane.xlu0 %1774
        %v1776 = vsel %vm1249, %v1756, -inf
        %1777 = vmax.xlane.f32.xlu0 %v1776
        %v1778 = vpop.xlane.xlu0 %1777
        %v1779 = vsel %vm1249, %v1757, -inf
        %1780 = vmax.xlane.f32.xlu0 %v1779
        %v1781 = vpop.xlane.xlu0 %1780
        %v1782 = vsub.f32 %v1750, %v1760
        %v1783 = vsub.f32 %v1751, %v1763
        %v1784 = vsub.f32 %v1752, %v1766
        %v1785 = vsub.f32 %v1753, %v1769
        %v1786 = vsub.f32 %v1754, %v1772
        %v1787 = vsub.f32 %v1755, %v1775
        %v1788 = vsub.f32 %v1756, %v1778
        %v1789 = vsub.f32 %v1757, %v1781
        %v1790 = vmul.f32 %v1782, 1.442695
        %v1791 = vpow.pop %v1790
        %v1792 = vmul.f32 %v1783, 1.442695
        %v1793 = vpow.pop %v1792
        %v1794 = vmul.f32 %v1784, 1.442695
        %v1795 = vpow.pop %v1794
        %v1796 = vmul.f32 %v1785, 1.442695
        %v1797 = vpow.pop %v1796
        %v1798 = vmul.f32 %v1786, 1.442695
        %v1799 = vpow.pop %v1798
        %v1800 = vmul.f32 %v1787, 1.442695
        %v1801 = vpow.pop %v1800
        %v1802 = vmul.f32 %v1788, 1.442695
        %v1803 = vpow.pop %v1802
        %v1804 = vmul.f32 %v1789, 1.442695
        %v1805 = vpow.pop %v1804
        %v1806 = vsel %vm1249, %v1791, 0.0
        %1807 = vadd.xlane.f32.xlu0 %v1806
        %v1808 = vpop.xlane.xlu0 %1807
        %v1809 = vsel %vm1249, %v1793, 0.0
        %1810 = vadd.xlane.f32.xlu0 %v1809
        %v1811 = vpop.xlane.xlu0 %1810
        %v1812 = vsel %vm1249, %v1795, 0.0
        %1813 = vadd.xlane.f32.xlu0 %v1812
        %v1814 = vpop.xlane.xlu0 %1813
        %v1815 = vsel %vm1249, %v1797, 0.0
        %1816 = vadd.xlane.f32.xlu0 %v1815
        %v1817 = vpop.xlane.xlu0 %1816
        %v1818 = vsel %vm1249, %v1799, 0.0
        %1819 = vadd.xlane.f32.xlu0 %v1818
        %v1820 = vpop.xlane.xlu0 %1819
        %v1821 = vsel %vm1249, %v1801, 0.0
        %1822 = vadd.xlane.f32.xlu0 %v1821
        %v1823 = vpop.xlane.xlu0 %1822
        %v1824 = vsel %vm1249, %v1803, 0.0
        %1825 = vadd.xlane.f32.xlu0 %v1824
        %v1826 = vpop.xlane.xlu0 %1825
        %v1827 = vsel %vm1249, %v1805, 0.0
        %1828 = vadd.xlane.f32.xlu0 %v1827
        %v1829 = vpop.xlane.xlu0 %1828
        %v1830 = vrcp.pop %v1808
        %v1831 = vrcp.pop %v1811
        %v1832 = vrcp.pop %v1814
        %v1833 = vrcp.pop %v1817
        %v1834 = vrcp.pop %v1820
        %v1835 = vrcp.pop %v1823
        %v1836 = vrcp.pop %v1826
        %v1837 = vrcp.pop %v1829
        %v1838 = vmul.f32 %v1791, %v1830
        %v1839 = vmul.f32 %v1793, %v1831
        %v1840 = vmul.f32 %v1795, %v1832
        %v1841 = vmul.f32 %v1797, %v1833
        %v1842 = vmul.f32 %v1799, %v1834
        %v1843 = vmul.f32 %v1801, %v1835
        %v1844 = vmul.f32 %v1803, %v1836
        %v1845 = vmul.f32 %v1805, %v1837
        %v1846 = vpack.c.bf16 %v1839, %v1838
        %v1847 = vpack.c.bf16 %v1841, %v1840
        %v1848 = vpack.c.bf16 %v1843, %v1842
        %v1849 = vpack.c.bf16 %v1845, %v1844
        %v1851 = vsel %vm1249, %v1846, 0
        %v1854 = vsel %vm1249, %v1847, 0
        %v1857 = vsel %vm1249, %v1848, 0
        %v1860 = vsel %vm1249, %v1849, 0
        %1862 = vmatprep.subr.bf16.mxu0 0
        %1863 = vmatpush1.bf16.msra.mxu0 %v1681
        %1864 = vmatprep.subr.bf16.mxu0 0
        %1865 = vmatpush1.bf16.msra.mxu0 %v1682
        %1866 = vmatprep.subr.bf16.mxu0 0
        %1867 = vmatpush1.bf16.msra.mxu0 %v1683
        %1868 = vmatprep.subr.bf16.mxu0 0
        %1869 = vmatpush1.bf16.msra.mxu0 %v1684
        %1870 = vmatprep.subr.bf16.mxu0 0
        %1871 = vmatpush1.bf16.msra.mxu0 0
        %1872 = vmatprep.subr.bf16.mxu0 0
        %1873 = vmatpush1.bf16.msra.mxu0 0
        %1874 = vmatprep.subr.bf16.mxu0 0
        %1875 = vmatpush1.bf16.msra.mxu0 0
        %1876 = vmatprep.subr.bf16.mxu0 0
        %1877 = vmatpush1.bf16.msra.mxu0 0
        %1878 = vmatprep.subr.bf16.mxu0 0
        %1879 = vmatpush1.bf16.msra.mxu0 0
        %1880 = vmatprep.subr.bf16.mxu0 0
        %1881 = vmatpush1.bf16.msra.mxu0 0
        %1882 = vmatprep.subr.bf16.mxu0 0
        %1883 = vmatpush1.bf16.msra.mxu0 0
        %1884 = vmatprep.subr.bf16.mxu0 0
        %1885 = vmatpush1.bf16.msra.mxu0 0
        %1886 = vmatprep.subr.bf16.mxu0 0
        %1887 = vmatpush1.bf16.msra.mxu0 0
        %1888 = vmatprep.subr.bf16.mxu0 0
        %1889 = vmatpush1.bf16.msra.mxu0 0
        %1890 = vmatprep.subr.bf16.mxu0 0
        %1891 = vmatpush1.bf16.msra.mxu0 0
        %1892 = vmatprep.subr.bf16.mxu0 0
        %1893 = vmatpush1.bf16.msra.mxu0 0
        %1894 = vmatprep.mubr.bf16.mxu0 0
        %1895 = vmatmul.mubr.bf16.gmra.mrb[0].mxu0 %v1851
        %v1896 = vpop.f32.mrb[0].mxu0
        %v1897 = vadd.f32 0.0, %v1896
        %v1898 = vpop.f32.mrb[0].mxu0
        %v1899 = vpop.f32.mrb[0].mxu0
        %v1900 = vadd.f32 0.0, %v1899
        %v1901 = vpop.f32.mrb[0].mxu0
        %1902 = vmatprep.mubr.bf16.mxu0 0
        %1903 = vmatmul.mubr.bf16.gmra.mrb[0].mxu0 %v1854
        %v1904 = vpop.f32.mrb[0].mxu0
        %v1905 = vadd.f32 0.0, %v1904
        %v1906 = vpop.f32.mrb[0].mxu0
        %v1907 = vpop.f32.mrb[0].mxu0
        %v1908 = vadd.f32 0.0, %v1907
        %v1909 = vpop.f32.mrb[0].mxu0
        %1910 = vmatprep.mubr.bf16.mxu0 0
        %1911 = vmatmul.mubr.bf16.gmra.mrb[0].mxu0 %v1857
        %v1912 = vpop.f32.mrb[0].mxu0
        %v1913 = vadd.f32 0.0, %v1912
        %v1914 = vpop.f32.mrb[0].mxu0
        %v1915 = vpop.f32.mrb[0].mxu0
        %v1916 = vadd.f32 0.0, %v1915
        %v1917 = vpop.f32.mrb[0].mxu0
        %1918 = vmatprep.mubr.bf16.mxu0 0
        %1919 = vmatmul.mubr.bf16.gmra.mrb[0].mxu0 %v1860
        %v1920 = vpop.f32.mrb[0].mxu0
        %v1921 = vadd.f32 0.0, %v1920
        %v1922 = vpop.f32.mrb[0].mxu0
        %v1923 = vpop.f32.mrb[0].mxu0
        %v1924 = vadd.f32 0.0, %v1923
        %v1925 = vpop.f32.mrb[0].mxu0
        %1926 = vdwg.mxu0
        %v1927 = vpack.c.bf16 %v1019, %v1015
        %v1928 = vpack.c.bf16 %v1029, %v1025
        %v1929 = vpack.c.bf16 %v1039, %v1035
        %v1930 = vpack.c.bf16 %v1049, %v1045
        %v1931 = vpack.c.bf16 %v1130, %v1126
        %v1932 = vpack.c.bf16 %v1140, %v1136
        %v1933 = vpack.c.bf16 %v1150, %v1146
        %v1934 = vpack.c.bf16 %v1160, %v1156
        %v1935 = vpack.c.bf16 %v1132, %v1128
        %v1936 = vpack.c.bf16 %v1142, %v1138
        %v1937 = vpack.c.bf16 %v1152, %v1148
        %v1938 = vpack.c.bf16 %v1162, %v1158
        %1939 = vmatprep.subr.bf16.mxu0 0
        %1940 = vmatpush1.bf16.xpose.msra.mxu0 %v1931
        %1941 = vmatprep.subr.bf16.mxu0 0
        %1942 = vmatpush1.bf16.xpose.msra.mxu0 %v1932
        %1943 = vmatprep.subr.bf16.mxu0 0
        %1944 = vmatpush1.bf16.xpose.msra.mxu0 %v1933
        %1945 = vmatprep.subr.bf16.mxu0 0
        %1946 = vmatpush1.bf16.xpose.msra.mxu0 %v1934
        %1947 = vmatprep.subr.bf16.mxu0 0
        %1948 = vmatpush1.bf16.xpose.msra.mxu0 0
        %1949 = vmatprep.subr.bf16.mxu0 0
        %1950 = vmatpush1.bf16.xpose.msra.mxu0 0
        %1951 = vmatprep.subr.bf16.mxu0 0
        %1952 = vmatpush1.bf16.xpose.msra.mxu0 0
        %1953 = vmatprep.subr.bf16.mxu0 0
        %1954 = vmatpush1.bf16.xpose.msra.mxu0 0
        %1955 = vmatprep.subr.bf16.mxu0 0
        %1956 = vmatpush1.bf16.xpose.msra.mxu0 0
        %1957 = vmatprep.subr.bf16.mxu0 0
        %1958 = vmatpush1.bf16.xpose.msra.mxu0 0
        %1959 = vmatprep.subr.bf16.mxu0 0
        %1960 = vmatpush1.bf16.xpose.msra.mxu0 0
        %1961 = vmatprep.subr.bf16.mxu0 0
        %1962 = vmatpush1.bf16.xpose.msra.mxu0 0
        %1963 = vmatprep.subr.bf16.mxu0 0
        %1964 = vmatpush1.bf16.xpose.msra.mxu0 0
        %1965 = vmatprep.subr.bf16.mxu0 0
        %1966 = vmatpush1.bf16.xpose.msra.mxu0 0
        %1967 = vmatprep.subr.bf16.mxu0 0
        %1968 = vmatpush1.bf16.xpose.msra.mxu0 0
        %1969 = vmatprep.subr.bf16.mxu0 0
        %1970 = vmatpush1.bf16.xpose.msra.mxu0 0
        %1971 = vmatprep.mubr.bf16.mxu0 0
        %1972 = vmatmul.mubr.bf16.gmra.mrb[0].mxu0 %v1927
        %v1973 = vpop.f32.mrb[0].mxu0
        %v1974 = vadd.f32 0.0, %v1973
        %v1975 = vpop.f32.mrb[0].mxu0
        %v1976 = vpop.f32.mrb[0].mxu0
        %v1977 = vadd.f32 0.0, %v1976
        %v1978 = vpop.f32.mrb[0].mxu0
        %1979 = vmatprep.mubr.bf16.mxu0 0
        %1980 = vmatmul.mubr.bf16.gmra.mrb[0].mxu0 %v1928
        %v1981 = vpop.f32.mrb[0].mxu0
        %v1982 = vadd.f32 0.0, %v1981
        %v1983 = vpop.f32.mrb[0].mxu0
        %v1984 = vpop.f32.mrb[0].mxu0
        %v1985 = vadd.f32 0.0, %v1984
        %v1986 = vpop.f32.mrb[0].mxu0
        %1987 = vmatprep.mubr.bf16.mxu0 0
        %1988 = vmatmul.mubr.bf16.gmra.mrb[0].mxu0 %v1929
        %v1989 = vpop.f32.mrb[0].mxu0
        %v1990 = vadd.f32 0.0, %v1989
        %v1991 = vpop.f32.mrb[0].mxu0
        %v1992 = vpop.f32.mrb[0].mxu0
        %v1993 = vadd.f32 0.0, %v1992
        %v1994 = vpop.f32.mrb[0].mxu0
        %1995 = vmatprep.mubr.bf16.mxu0 0
        %1996 = vmatmul.mubr.bf16.gmra.mrb[0].mxu0 %v1930
        %v1997 = vpop.f32.mrb[0].mxu0
        %v1998 = vadd.f32 0.0, %v1997
        %v1999 = vpop.f32.mrb[0].mxu0
        %v2000 = vpop.f32.mrb[0].mxu0
        %v2001 = vadd.f32 0.0, %v2000
        %v2002 = vpop.f32.mrb[0].mxu0
        %2003 = vdwg.mxu0
        %v2004 = vmul.f32 %v1974, 0.125
        %v2005 = vmul.f32 %v1977, 0.125
        %v2006 = vmul.f32 %v1982, 0.125
        %v2007 = vmul.f32 %v1985, 0.125
        %v2008 = vmul.f32 %v1990, 0.125
        %v2009 = vmul.f32 %v1993, 0.125
        %v2010 = vmul.f32 %v1998, 0.125
        %v2011 = vmul.f32 %v2001, 0.125
        %v2012 = vsel %vm1249, %v2004, -inf
        %2013 = vmax.xlane.f32.xlu0 %v2012
        %v2014 = vpop.xlane.xlu0 %2013
        %v2015 = vsel %vm1249, %v2005, -inf
        %2016 = vmax.xlane.f32.xlu0 %v2015
        %v2017 = vpop.xlane.xlu0 %2016
        %v2018 = vsel %vm1249, %v2006, -inf
        %2019 = vmax.xlane.f32.xlu0 %v2018
        %v2020 = vpop.xlane.xlu0 %2019
        %v2021 = vsel %vm1249, %v2007, -inf
        %2022 = vmax.xlane.f32.xlu0 %v2021
        %v2023 = vpop.xlane.xlu0 %2022
        %v2024 = vsel %vm1249, %v2008, -inf
        %2025 = vmax.xlane.f32.xlu0 %v2024
        %v2026 = vpop.xlane.xlu0 %2025
        %v2027 = vsel %vm1249, %v2009, -inf
        %2028 = vmax.xlane.f32.xlu0 %v2027
        %v2029 = vpop.xlane.xlu0 %2028
        %v2030 = vsel %vm1249, %v2010, -inf
        %2031 = vmax.xlane.f32.xlu0 %v2030
        %v2032 = vpop.xlane.xlu0 %2031
        %v2033 = vsel %vm1249, %v2011, -inf
        %2034 = vmax.xlane.f32.xlu0 %v2033
        %v2035 = vpop.xlane.xlu0 %2034
        %v2036 = vsub.f32 %v2004, %v2014
        %v2037 = vsub.f32 %v2005, %v2017
        %v2038 = vsub.f32 %v2006, %v2020
        %v2039 = vsub.f32 %v2007, %v2023
        %v2040 = vsub.f32 %v2008, %v2026
        %v2041 = vsub.f32 %v2009, %v2029
        %v2042 = vsub.f32 %v2010, %v2032
        %v2043 = vsub.f32 %v2011, %v2035
        %v2044 = vmul.f32 %v2036, 1.442695
        %v2045 = vpow.pop %v2044
        %v2046 = vmul.f32 %v2037, 1.442695
        %v2047 = vpow.pop %v2046
        %v2048 = vmul.f32 %v2038, 1.442695
        %v2049 = vpow.pop %v2048
        %v2050 = vmul.f32 %v2039, 1.442695
        %v2051 = vpow.pop %v2050
        %v2052 = vmul.f32 %v2040, 1.442695
        %v2053 = vpow.pop %v2052
        %v2054 = vmul.f32 %v2041, 1.442695
        %v2055 = vpow.pop %v2054
        %v2056 = vmul.f32 %v2042, 1.442695
        %v2057 = vpow.pop %v2056
        %v2058 = vmul.f32 %v2043, 1.442695
        %v2059 = vpow.pop %v2058
        %v2060 = vsel %vm1249, %v2045, 0.0
        %2061 = vadd.xlane.f32.xlu0 %v2060
        %v2062 = vpop.xlane.xlu0 %2061
        %v2063 = vsel %vm1249, %v2047, 0.0
        %2064 = vadd.xlane.f32.xlu0 %v2063
        %v2065 = vpop.xlane.xlu0 %2064
        %v2066 = vsel %vm1249, %v2049, 0.0
        %2067 = vadd.xlane.f32.xlu0 %v2066
        %v2068 = vpop.xlane.xlu0 %2067
        %v2069 = vsel %vm1249, %v2051, 0.0
        %2070 = vadd.xlane.f32.xlu0 %v2069
        %v2071 = vpop.xlane.xlu0 %2070
        %v2072 = vsel %vm1249, %v2053, 0.0
        %2073 = vadd.xlane.f32.xlu0 %v2072
        %v2074 = vpop.xlane.xlu0 %2073
        %v2075 = vsel %vm1249, %v2055, 0.0
        %2076 = vadd.xlane.f32.xlu0 %v2075
        %v2077 = vpop.xlane.xlu0 %2076
        %v2078 = vsel %vm1249, %v2057, 0.0
        %2079 = vadd.xlane.f32.xlu0 %v2078
        %v2080 = vpop.xlane.xlu0 %2079
        %v2081 = vsel %vm1249, %v2059, 0.0
        %2082 = vadd.xlane.f32.xlu0 %v2081
        %v2083 = vpop.xlane.xlu0 %2082
        %v2084 = vrcp.pop %v2062
        %v2085 = vrcp.pop %v2065
        %v2086 = vrcp.pop %v2068
        %v2087 = vrcp.pop %v2071
        %v2088 = vrcp.pop %v2074
        %v2089 = vrcp.pop %v2077
        %v2090 = vrcp.pop %v2080
        %v2091 = vrcp.pop %v2083
        %v2092 = vmul.f32 %v2045, %v2084
        %v2093 = vmul.f32 %v2047, %v2085
        %v2094 = vmul.f32 %v2049, %v2086
        %v2095 = vmul.f32 %v2051, %v2087
        %v2096 = vmul.f32 %v2053, %v2088
        %v2097 = vmul.f32 %v2055, %v2089
        %v2098 = vmul.f32 %v2057, %v2090
        %v2099 = vmul.f32 %v2059, %v2091
        %v2100 = vpack.c.bf16 %v2093, %v2092
        %v2101 = vpack.c.bf16 %v2095, %v2094
        %v2102 = vpack.c.bf16 %v2097, %v2096
        %v2103 = vpack.c.bf16 %v2099, %v2098
        %v2105 = vsel %vm1249, %v2100, 0
        %v2108 = vsel %vm1249, %v2101, 0
        %v2111 = vsel %vm1249, %v2102, 0
        %v2114 = vsel %vm1249, %v2103, 0
        %2116 = vmatprep.subr.bf16.mxu0 0
        %2117 = vmatpush1.bf16.msra.mxu0 %v1935
        %2118 = vmatprep.subr.bf16.mxu0 0
        %2119 = vmatpush1.bf16.msra.mxu0 %v1936
        %2120 = vmatprep.subr.bf16.mxu0 0
        %2121 = vmatpush1.bf16.msra.mxu0 %v1937
        %2122 = vmatprep.subr.bf16.mxu0 0
        %2123 = vmatpush1.bf16.msra.mxu0 %v1938
        %2124 = vmatprep.subr.bf16.mxu0 0
        %2125 = vmatpush1.bf16.msra.mxu0 0
        %2126 = vmatprep.subr.bf16.mxu0 0
        %2127 = vmatpush1.bf16.msra.mxu0 0
        %2128 = vmatprep.subr.bf16.mxu0 0
        %2129 = vmatpush1.bf16.msra.mxu0 0
        %2130 = vmatprep.subr.bf16.mxu0 0
        %2131 = vmatpush1.bf16.msra.mxu0 0
        %2132 = vmatprep.subr.bf16.mxu0 0
        %2133 = vmatpush1.bf16.msra.mxu0 0
        %2134 = vmatprep.subr.bf16.mxu0 0
        %2135 = vmatpush1.bf16.msra.mxu0 0
        %2136 = vmatprep.subr.bf16.mxu0 0
        %2137 = vmatpush1.bf16.msra.mxu0 0
        %2138 = vmatprep.subr.bf16.mxu0 0
        %2139 = vmatpush1.bf16.msra.mxu0 0
        %2140 = vmatprep.subr.bf16.mxu0 0
        %2141 = vmatpush1.bf16.msra.mxu0 0
        %2142 = vmatprep.subr.bf16.mxu0 0
        %2143 = vmatpush1.bf16.msra.mxu0 0
        %2144 = vmatprep.subr.bf16.mxu0 0
        %2145 = vmatpush1.bf16.msra.mxu0 0
        %2146 = vmatprep.subr.bf16.mxu0 0
        %2147 = vmatpush1.bf16.msra.mxu0 0
        %2148 = vmatprep.mubr.bf16.mxu0 0
        %2149 = vmatmul.mubr.bf16.gmra.mrb[0].mxu0 %v2105
        %v2150 = vpop.f32.mrb[0].mxu0
        %v2151 = vadd.f32 0.0, %v2150
        %v2152 = vpop.f32.mrb[0].mxu0
        %v2153 = vpop.f32.mrb[0].mxu0
        %v2154 = vadd.f32 0.0, %v2153
        %v2155 = vpop.f32.mrb[0].mxu0
        %2156 = vmatprep.mubr.bf16.mxu0 0
        %2157 = vmatmul.mubr.bf16.gmra.mrb[0].mxu0 %v2108
        %v2158 = vpop.f32.mrb[0].mxu0
        %v2159 = vadd.f32 0.0, %v2158
        %v2160 = vpop.f32.mrb[0].mxu0
        %v2161 = vpop.f32.mrb[0].mxu0
        %v2162 = vadd.f32 0.0, %v2161
        %v2163 = vpop.f32.mrb[0].mxu0
        %2164 = vmatprep.mubr.bf16.mxu0 0
        %2165 = vmatmul.mubr.bf16.gmra.mrb[0].mxu0 %v2111
        %v2166 = vpop.f32.mrb[0].mxu0
        %v2167 = vadd.f32 0.0, %v2166
        %v2168 = vpop.f32.mrb[0].mxu0
        %v2169 = vpop.f32.mrb[0].mxu0
        %v2170 = vadd.f32 0.0, %v2169
        %v2171 = vpop.f32.mrb[0].mxu0
        %2172 = vmatprep.mubr.bf16.mxu0 0
        %2173 = vmatmul.mubr.bf16.gmra.mrb[0].mxu0 %v2114
        %v2174 = vpop.f32.mrb[0].mxu0
        %v2175 = vadd.f32 0.0, %v2174
        %v2176 = vpop.f32.mrb[0].mxu0
        %v2177 = vpop.f32.mrb[0].mxu0
        %v2178 = vadd.f32 0.0, %v2177
        %v2179 = vpop.f32.mrb[0].mxu0
        %2180 = vdwg.mxu0
        %v2181 = vpack.c.bf16 %v1392, %v1389
        %v2182 = vpack.c.bf16 %v1646, %v1643
        %v2183 = vpack.c.bf16 %v1400, %v1397
        %v2184 = vpack.c.bf16 %v1654, %v1651
        %v2185 = vpack.c.bf16 %v1408, %v1405
        %v2186 = vpack.c.bf16 %v1662, %v1659
        %v2187 = vpack.c.bf16 %v1416, %v1413
        %v2188 = vpack.c.bf16 %v1670, %v1667
        %v2189 = vpack.c.bf16 %v1900, %v1897
        %v2190 = vpack.c.bf16 %v2154, %v2151
        %v2191 = vpack.c.bf16 %v1908, %v1905
        %v2192 = vpack.c.bf16 %v2162, %v2159
        %v2193 = vpack.c.bf16 %v1916, %v1913
        %v2194 = vpack.c.bf16 %v2170, %v2167
        %v2195 = vpack.c.bf16 %v1924, %v1921
        %v2196 = vpack.c.bf16 %v2178, %v2175
        %v2197 = vld [vmem:[%s385] sm:$0xf]
        %v2198 = vld [vmem:[%s385 + $0x4] sm:$0xf]
        %v2199 = vld [vmem:[%s385 + $0x8] sm:$0xf]
        %v2200 = vld [vmem:[%s385 + $0xc] sm:$0xf]
        %v2201 = vld [vmem:[%s385 + $0x10] sm:$0xf]
        %v2202 = vld [vmem:[%s385 + $0x14] sm:$0xf]
        %v2203 = vld [vmem:[%s385 + $0x18] sm:$0xf]
        %v2204 = vld [vmem:[%s385 + $0x1c] sm:$0xf]
        %v2205 = vld [vmem:[%s385 + $0x20] sm:$0xf]
        %v2206 = vld [vmem:[%s385 + $0x24] sm:$0xf]
        %v2207 = vld [vmem:[%s385 + $0x28] sm:$0xf]
        %v2208 = vld [vmem:[%s385 + $0x2c] sm:$0xf]
        %v2209 = vld [vmem:[%s385 + $0x30] sm:$0xf]
        %v2210 = vld [vmem:[%s385 + $0x34] sm:$0xf]
        %v2211 = vld [vmem:[%s385 + $0x38] sm:$0xf]
        %v2212 = vld [vmem:[%s385 + $0x3c] sm:$0xf]
        %v2213 = vld [vmem:[%s385 + $0x40] sm:$0xf]
        %v2214 = vld [vmem:[%s385 + $0x44] sm:$0xf]
        %v2215 = vld [vmem:[%s385 + $0x48] sm:$0xf]
        %v2216 = vld [vmem:[%s385 + $0x4c] sm:$0xf]
        %v2217 = vld [vmem:[%s385 + $0x50] sm:$0xf]
        %v2218 = vld [vmem:[%s385 + $0x54] sm:$0xf]
        %v2219 = vld [vmem:[%s385 + $0x58] sm:$0xf]
        %v2220 = vld [vmem:[%s385 + $0x5c] sm:$0xf]
        %v2221 = vld [vmem:[%s385 + $0x60] sm:$0xf]
        %v2222 = vld [vmem:[%s385 + $0x64] sm:$0xf]
        %v2223 = vld [vmem:[%s385 + $0x68] sm:$0xf]
        %v2224 = vld [vmem:[%s385 + $0x6c] sm:$0xf]
        %v2225 = vld [vmem:[%s385 + $0x70] sm:$0xf]
        %v2226 = vld [vmem:[%s385 + $0x74] sm:$0xf]
        %v2227 = vld [vmem:[%s385 + $0x78] sm:$0xf]
        %v2228 = vld [vmem:[%s385 + $0x7c] sm:$0xf]
        %v2229 = vlaneseq
        %v2230 = vshrl.u32 %v2229, 7
        %v2231 = vsub.s32 0, %v2230
        %v2232 = vrot.slane %v527, %v2231
        %v2265 = vunpack.c.l.b16 %v2197
        %v2266 = vunpack.c.l.b16 %v2198
        %v2267 = vunpack.c.l.b16 %v2199
        %v2268 = vunpack.c.l.b16 %v2200
        %v2269 = vunpack.c.l.b16 %v2201
        %v2270 = vunpack.c.l.b16 %v2202
        %v2271 = vunpack.c.l.b16 %v2203
        %v2272 = vunpack.c.l.b16 %v2204
        %v2273 = vunpack.c.l.b16 %v2205
        %v2274 = vunpack.c.l.b16 %v2206
        %v2275 = vunpack.c.l.b16 %v2207
        %v2276 = vunpack.c.l.b16 %v2208
        %v2277 = vunpack.c.l.b16 %v2209
        %v2278 = vunpack.c.l.b16 %v2210
        %v2279 = vunpack.c.l.b16 %v2211
        %v2280 = vunpack.c.l.b16 %v2212
        %v2281 = vunpack.c.l.b16 %v2213
        %v2282 = vunpack.c.l.b16 %v2214
        %v2283 = vunpack.c.l.b16 %v2215
        %v2284 = vunpack.c.l.b16 %v2216
        %v2285 = vunpack.c.l.b16 %v2217
        %v2286 = vunpack.c.l.b16 %v2218
        %v2287 = vunpack.c.l.b16 %v2219
        %v2288 = vunpack.c.l.b16 %v2220
        %v2289 = vunpack.c.l.b16 %v2221
        %v2290 = vunpack.c.l.b16 %v2222
        %v2291 = vunpack.c.l.b16 %v2223
        %v2292 = vunpack.c.l.b16 %v2224
        %v2293 = vunpack.c.l.b16 %v2225
        %v2294 = vunpack.c.l.b16 %v2226
        %v2295 = vunpack.c.l.b16 %v2227
        %v2296 = vunpack.c.l.b16 %v2228
        %v2297 = vpack.c.b16 %v2266, %v2265
        %v2298 = vpack.c.b16 %v2268, %v2267
        %v2299 = vpack.c.b16 %v2270, %v2269
        %v2300 = vpack.c.b16 %v2272, %v2271
        %v2301 = vpack.c.b16 %v2274, %v2273
        %v2302 = vpack.c.b16 %v2276, %v2275
        %v2303 = vpack.c.b16 %v2278, %v2277
        %v2304 = vpack.c.b16 %v2280, %v2279
        %v2305 = vpack.c.b16 %v2282, %v2281
        %v2306 = vpack.c.b16 %v2284, %v2283
        %v2307 = vpack.c.b16 %v2286, %v2285
        %v2308 = vpack.c.b16 %v2288, %v2287
        %v2309 = vpack.c.b16 %v2290, %v2289
        %v2310 = vpack.c.b16 %v2292, %v2291
        %v2311 = vpack.c.b16 %v2294, %v2293
        %v2312 = vpack.c.b16 %v2296, %v2295
        %2329 = vmatprep.subr.bf16.mxu0 0
        %2330 = vmatpush1.bf16.msra.mxu0 %v2297
        %2331 = vmatprep.subr.bf16.mxu0 0
        %2332 = vmatpush1.bf16.msra.mxu0 %v2298
        %2333 = vmatprep.subr.bf16.mxu0 0
        %2334 = vmatpush1.bf16.msra.mxu0 %v2299
        %2335 = vmatprep.subr.bf16.mxu0 0
        %2336 = vmatpush1.bf16.msra.mxu0 %v2300
        %2337 = vmatprep.subr.bf16.mxu0 0
        %2338 = vmatpush1.bf16.msra.mxu0 %v2301
        %2339 = vmatprep.subr.bf16.mxu0 0
        %2340 = vmatpush1.bf16.msra.mxu0 %v2302
        %2341 = vmatprep.subr.bf16.mxu0 0
        %2342 = vmatpush1.bf16.msra.mxu0 %v2303
        %2343 = vmatprep.subr.bf16.mxu0 0
        %2344 = vmatpush1.bf16.msra.mxu0 %v2304
        %2345 = vmatprep.subr.bf16.mxu0 0
        %2346 = vmatpush1.bf16.msra.mxu0 %v2305
        %2347 = vmatprep.subr.bf16.mxu0 0
        %2348 = vmatpush1.bf16.msra.mxu0 %v2306
        %2349 = vmatprep.subr.bf16.mxu0 0
        %2350 = vmatpush1.bf16.msra.mxu0 %v2307
        %2351 = vmatprep.subr.bf16.mxu0 0
        %2352 = vmatpush1.bf16.msra.mxu0 %v2308
        %2353 = vmatprep.subr.bf16.mxu0 0
        %2354 = vmatpush1.bf16.msra.mxu0 %v2309
        %2355 = vmatprep.subr.bf16.mxu0 0
        %2356 = vmatpush1.bf16.msra.mxu0 %v2310
        %2357 = vmatprep.subr.bf16.mxu0 0
        %2358 = vmatpush1.bf16.msra.mxu0 %v2311
        %2359 = vmatprep.subr.bf16.mxu0 0
        %2360 = vmatpush1.bf16.msra.mxu0 %v2312
        %2361 = vmatprep.mubr.bf16.mxu0 %v2182
        %2362 = vmatmul.mubr.bf16.gmra.mrb[0].mxu0 %v2181
        %v2363 = vpop.f32.mrb[0].mxu0
        %v2364 = vadd.f32 %v2232, %v2363
        %v2365 = vpop.f32.mrb[0].mxu0
        %v2366 = vpop.f32.mrb[0].mxu0
        %v2367 = vadd.f32 %v2232, %v2366
        %v2368 = vpop.f32.mrb[0].mxu0
        %2369 = vmatprep.mubr.bf16.mxu0 %v2184
        %2370 = vmatmul.mubr.bf16.gmra.mrb[0].mxu0 %v2183
        %v2371 = vpop.f32.mrb[0].mxu0
        %v2372 = vadd.f32 %v2232, %v2371
        %v2373 = vpop.f32.mrb[0].mxu0
        %v2374 = vpop.f32.mrb[0].mxu0
        %v2375 = vadd.f32 %v2232, %v2374
        %v2376 = vpop.f32.mrb[0].mxu0
        %2377 = vmatprep.mubr.bf16.mxu0 %v2186
        %2378 = vmatmul.mubr.bf16.gmra.mrb[0].mxu0 %v2185
        %v2379 = vpop.f32.mrb[0].mxu0
        %v2380 = vadd.f32 %v2232, %v2379
        %v2381 = vpop.f32.mrb[0].mxu0
        %v2382 = vpop.f32.mrb[0].mxu0
        %v2383 = vadd.f32 %v2232, %v2382
        %v2384 = vpop.f32.mrb[0].mxu0
        %2385 = vmatprep.mubr.bf16.mxu0 %v2188
        %2386 = vmatmul.mubr.bf16.gmra.mrb[0].mxu0 %v2187
        %v2387 = vpop.f32.mrb[0].mxu0
        %v2388 = vadd.f32 %v2232, %v2387
        %v2389 = vpop.f32.mrb[0].mxu0
        %v2390 = vpop.f32.mrb[0].mxu0
        %v2391 = vadd.f32 %v2232, %v2390
        %v2392 = vpop.f32.mrb[0].mxu0
        %2393 = vmatprep.mubr.bf16.mxu0 %v2190
        %2394 = vmatmul.mubr.bf16.gmra.mrb[0].mxu0 %v2189
        %v2395 = vpop.f32.mrb[0].mxu0
        %v2396 = vadd.f32 %v2232, %v2395
        %v2397 = vpop.f32.mrb[0].mxu0
        %v2398 = vpop.f32.mrb[0].mxu0
        %v2399 = vadd.f32 %v2232, %v2398
        %v2400 = vpop.f32.mrb[0].mxu0
        %2401 = vmatprep.mubr.bf16.mxu0 %v2192
        %2402 = vmatmul.mubr.bf16.gmra.mrb[0].mxu0 %v2191
        %v2403 = vpop.f32.mrb[0].mxu0
        %v2404 = vadd.f32 %v2232, %v2403
        %v2405 = vpop.f32.mrb[0].mxu0
        %v2406 = vpop.f32.mrb[0].mxu0
        %v2407 = vadd.f32 %v2232, %v2406
        %v2408 = vpop.f32.mrb[0].mxu0
        %2409 = vmatprep.mubr.bf16.mxu0 %v2194
        %2410 = vmatmul.mubr.bf16.gmra.mrb[0].mxu0 %v2193
        %v2411 = vpop.f32.mrb[0].mxu0
        %v2412 = vadd.f32 %v2232, %v2411
        %v2413 = vpop.f32.mrb[0].mxu0
        %v2414 = vpop.f32.mrb[0].mxu0
        %v2415 = vadd.f32 %v2232, %v2414
        %v2416 = vpop.f32.mrb[0].mxu0
        %2417 = vmatprep.mubr.bf16.mxu0 %v2196
        %2418 = vmatmul.mubr.bf16.gmra.mrb[0].mxu0 %v2195
        %v2419 = vpop.f32.mrb[0].mxu0
        %v2420 = vadd.f32 %v2232, %v2419
        %v2421 = vpop.f32.mrb[0].mxu0
        %v2422 = vpop.f32.mrb[0].mxu0
        %v2423 = vadd.f32 %v2232, %v2422
        %v2424 = vpop.f32.mrb[0].mxu0
        %2425 = vdwg.mxu0
        %2426 = vadd.xlane.f32.xlu0 %v2364
        %v2427 = vpop.xlane.xlu0 %2426
        %2428 = vadd.xlane.f32.xlu0 %v2367
        %v2429 = vpop.xlane.xlu0 %2428
        %2430 = vadd.xlane.f32.xlu0 %v2372
        %v2431 = vpop.xlane.xlu0 %2430
        %2432 = vadd.xlane.f32.xlu0 %v2375
        %v2433 = vpop.xlane.xlu0 %2432
        %2434 = vadd.xlane.f32.xlu0 %v2380
        %v2435 = vpop.xlane.xlu0 %2434
        %2436 = vadd.xlane.f32.xlu0 %v2383
        %v2437 = vpop.xlane.xlu0 %2436
        %2438 = vadd.xlane.f32.xlu0 %v2388
        %v2439 = vpop.xlane.xlu0 %2438
        %2440 = vadd.xlane.f32.xlu0 %v2391
        %v2441 = vpop.xlane.xlu0 %2440
        %2442 = vadd.xlane.f32.xlu0 %v2396
        %v2443 = vpop.xlane.xlu0 %2442
        %2444 = vadd.xlane.f32.xlu0 %v2399
        %v2445 = vpop.xlane.xlu0 %2444
        %2446 = vadd.xlane.f32.xlu0 %v2404
        %v2447 = vpop.xlane.xlu0 %2446
        %2448 = vadd.xlane.f32.xlu0 %v2407
        %v2449 = vpop.xlane.xlu0 %2448
        %2450 = vadd.xlane.f32.xlu0 %v2412
        %v2451 = vpop.xlane.xlu0 %2450
        %2452 = vadd.xlane.f32.xlu0 %v2415
        %v2453 = vpop.xlane.xlu0 %2452
        %2454 = vadd.xlane.f32.xlu0 %v2420
        %v2455 = vpop.xlane.xlu0 %2454
        %2456 = vadd.xlane.f32.xlu0 %v2423
        %v2457 = vpop.xlane.xlu0 %2456
        %v2458 = vrcp.pop 128.0
        %v2459 = vmul.f32 %v2427, %v2458
        %v2460 = vmul.f32 %v2429, %v2458
        %v2461 = vmul.f32 %v2431, %v2458
        %v2462 = vmul.f32 %v2433, %v2458
        %v2463 = vmul.f32 %v2435, %v2458
        %v2464 = vmul.f32 %v2437, %v2458
        %v2465 = vmul.f32 %v2439, %v2458
        %v2466 = vmul.f32 %v2441, %v2458
        %v2467 = vmul.f32 %v2443, %v2458
        %v2468 = vmul.f32 %v2445, %v2458
        %v2469 = vmul.f32 %v2447, %v2458
        %v2470 = vmul.f32 %v2449, %v2458
        %v2471 = vmul.f32 %v2451, %v2458
        %v2472 = vmul.f32 %v2453, %v2458
        %v2473 = vmul.f32 %v2455, %v2458
        %v2474 = vmul.f32 %v2457, %v2458
        %v2475 = vsub.f32 %v2364, %v2459
        %v2476 = vsub.f32 %v2367, %v2460
        %v2477 = vsub.f32 %v2372, %v2461
        %v2478 = vsub.f32 %v2375, %v2462
        %v2479 = vsub.f32 %v2380, %v2463
        %v2480 = vsub.f32 %v2383, %v2464
        %v2481 = vsub.f32 %v2388, %v2465
        %v2482 = vsub.f32 %v2391, %v2466
        %v2483 = vsub.f32 %v2396, %v2467
        %v2484 = vsub.f32 %v2399, %v2468
        %v2485 = vsub.f32 %v2404, %v2469
        %v2486 = vsub.f32 %v2407, %v2470
        %v2487 = vsub.f32 %v2412, %v2471
        %v2488 = vsub.f32 %v2415, %v2472
        %v2489 = vsub.f32 %v2420, %v2473
        %v2490 = vsub.f32 %v2423, %v2474
        %v2491 = vmul.f32 %v2475, %v2475
        %v2492 = vmul.f32 %v2476, %v2476
        %v2493 = vmul.f32 %v2477, %v2477
        %v2494 = vmul.f32 %v2478, %v2478
        %v2495 = vmul.f32 %v2479, %v2479
        %v2496 = vmul.f32 %v2480, %v2480
        %v2497 = vmul.f32 %v2481, %v2481
        %v2498 = vmul.f32 %v2482, %v2482
        %v2499 = vmul.f32 %v2483, %v2483
        %v2500 = vmul.f32 %v2484, %v2484
        %v2501 = vmul.f32 %v2485, %v2485
        %v2502 = vmul.f32 %v2486, %v2486
        %v2503 = vmul.f32 %v2487, %v2487
        %v2504 = vmul.f32 %v2488, %v2488
        %v2505 = vmul.f32 %v2489, %v2489
        %v2506 = vmul.f32 %v2490, %v2490
        %2507 = vadd.xlane.f32.xlu0 %v2491
        %v2508 = vpop.xlane.xlu0 %2507
        %2509 = vadd.xlane.f32.xlu0 %v2492
        %v2510 = vpop.xlane.xlu0 %2509
        %2511 = vadd.xlane.f32.xlu0 %v2493
        %v2512 = vpop.xlane.xlu0 %2511
        %2513 = vadd.xlane.f32.xlu0 %v2494
        %v2514 = vpop.xlane.xlu0 %2513
        %2515 = vadd.xlane.f32.xlu0 %v2495
        %v2516 = vpop.xlane.xlu0 %2515
        %2517 = vadd.xlane.f32.xlu0 %v2496
        %v2518 = vpop.xlane.xlu0 %2517
        %2519 = vadd.xlane.f32.xlu0 %v2497
        %v2520 = vpop.xlane.xlu0 %2519
        %2521 = vadd.xlane.f32.xlu0 %v2498
        %v2522 = vpop.xlane.xlu0 %2521
        %2523 = vadd.xlane.f32.xlu0 %v2499
        %v2524 = vpop.xlane.xlu0 %2523
        %2525 = vadd.xlane.f32.xlu0 %v2500
        %v2526 = vpop.xlane.xlu0 %2525
        %2527 = vadd.xlane.f32.xlu0 %v2501
        %v2528 = vpop.xlane.xlu0 %2527
        %2529 = vadd.xlane.f32.xlu0 %v2502
        %v2530 = vpop.xlane.xlu0 %2529
        %2531 = vadd.xlane.f32.xlu0 %v2503
        %v2532 = vpop.xlane.xlu0 %2531
        %2533 = vadd.xlane.f32.xlu0 %v2504
        %v2534 = vpop.xlane.xlu0 %2533
        %2535 = vadd.xlane.f32.xlu0 %v2505
        %v2536 = vpop.xlane.xlu0 %2535
        %2537 = vadd.xlane.f32.xlu0 %v2506
        %v2538 = vpop.xlane.xlu0 %2537
        %v2539 = vmul.f32 %v2508, %v2458
        %v2540 = vmul.f32 %v2510, %v2458
        %v2541 = vmul.f32 %v2512, %v2458
        %v2542 = vmul.f32 %v2514, %v2458
        %v2543 = vmul.f32 %v2516, %v2458
        %v2544 = vmul.f32 %v2518, %v2458
        %v2545 = vmul.f32 %v2520, %v2458
        %v2546 = vmul.f32 %v2522, %v2458
        %v2547 = vmul.f32 %v2524, %v2458
        %v2548 = vmul.f32 %v2526, %v2458
        %v2549 = vmul.f32 %v2528, %v2458
        %v2550 = vmul.f32 %v2530, %v2458
        %v2551 = vmul.f32 %v2532, %v2458
        %v2552 = vmul.f32 %v2534, %v2458
        %v2553 = vmul.f32 %v2536, %v2458
        %v2554 = vmul.f32 %v2538, %v2458
        %v2555 = vadd.f32 %v2539, 1e-05
        %v2556 = vadd.f32 %v2540, 1e-05
        %v2557 = vadd.f32 %v2541, 1e-05
        %v2558 = vadd.f32 %v2542, 1e-05
        %v2559 = vadd.f32 %v2543, 1e-05
        %v2560 = vadd.f32 %v2544, 1e-05
        %v2561 = vadd.f32 %v2545, 1e-05
        %v2562 = vadd.f32 %v2546, 1e-05
        %v2563 = vadd.f32 %v2547, 1e-05
        %v2564 = vadd.f32 %v2548, 1e-05
        %v2565 = vadd.f32 %v2549, 1e-05
        %v2566 = vadd.f32 %v2550, 1e-05
        %v2567 = vadd.f32 %v2551, 1e-05
        %v2568 = vadd.f32 %v2552, 1e-05
        %v2569 = vadd.f32 %v2553, 1e-05
        %v2570 = vadd.f32 %v2554, 1e-05
        %v2571 = vrsqrt.pop %v2555
        %v2572 = vrsqrt.pop %v2556
        %v2573 = vrsqrt.pop %v2557
        %v2574 = vrsqrt.pop %v2558
        %v2575 = vrsqrt.pop %v2559
        %v2576 = vrsqrt.pop %v2560
        %v2577 = vrsqrt.pop %v2561
        %v2578 = vrsqrt.pop %v2562
        %v2579 = vrsqrt.pop %v2563
        %v2580 = vrsqrt.pop %v2564
        %v2581 = vrsqrt.pop %v2565
        %v2582 = vrsqrt.pop %v2566
        %v2583 = vrsqrt.pop %v2567
        %v2584 = vrsqrt.pop %v2568
        %v2585 = vrsqrt.pop %v2569
        %v2586 = vrsqrt.pop %v2570
        %v2587 = vmul.f32 %v2475, %v2571
        %v2588 = vmul.f32 %v2476, %v2572
        %v2589 = vmul.f32 %v2477, %v2573
        %v2590 = vmul.f32 %v2478, %v2574
        %v2591 = vmul.f32 %v2479, %v2575
        %v2592 = vmul.f32 %v2480, %v2576
        %v2593 = vmul.f32 %v2481, %v2577
        %v2594 = vmul.f32 %v2482, %v2578
        %v2595 = vmul.f32 %v2483, %v2579
        %v2596 = vmul.f32 %v2484, %v2580
        %v2597 = vmul.f32 %v2485, %v2581
        %v2598 = vmul.f32 %v2486, %v2582
        %v2599 = vmul.f32 %v2487, %v2583
        %v2600 = vmul.f32 %v2488, %v2584
        %v2601 = vmul.f32 %v2489, %v2585
        %v2602 = vmul.f32 %v2490, %v2586
        %v2603 = vlaneseq
        %v2604 = vshrl.u32 %v2603, 7
        %v2605 = vsub.s32 1, %v2604
        %v2606 = vrot.slane %v527, %v2605
        %v2607 = vmul.f32 %v2587, %v2606
        %v2608 = vmul.f32 %v2588, %v2606
        %v2609 = vmul.f32 %v2589, %v2606
        %v2610 = vmul.f32 %v2590, %v2606
        %v2611 = vmul.f32 %v2591, %v2606
        %v2612 = vmul.f32 %v2592, %v2606
        %v2613 = vmul.f32 %v2593, %v2606
        %v2614 = vmul.f32 %v2594, %v2606
        %v2615 = vmul.f32 %v2595, %v2606
        %v2616 = vmul.f32 %v2596, %v2606
        %v2617 = vmul.f32 %v2597, %v2606
        %v2618 = vmul.f32 %v2598, %v2606
        %v2619 = vmul.f32 %v2599, %v2606
        %v2620 = vmul.f32 %v2600, %v2606
        %v2621 = vmul.f32 %v2601, %v2606
        %v2622 = vmul.f32 %v2602, %v2606
        %v2623 = vlaneseq
        %v2624 = vshrl.u32 %v2623, 7
        %v2625 = vsub.s32 2, %v2624
        %v2626 = vrot.slane %v527, %v2625
        %v2627 = vadd.f32 %v2607, %v2626
        %v2628 = vadd.f32 %v2608, %v2626
        %v2629 = vadd.f32 %v2609, %v2626
        %v2630 = vadd.f32 %v2610, %v2626
        %v2631 = vadd.f32 %v2611, %v2626
        %v2632 = vadd.f32 %v2612, %v2626
        %v2633 = vadd.f32 %v2613, %v2626
        %v2634 = vadd.f32 %v2614, %v2626
        %v2635 = vadd.f32 %v2615, %v2626
        %v2636 = vadd.f32 %v2616, %v2626
        %v2637 = vadd.f32 %v2617, %v2626
        %v2638 = vadd.f32 %v2618, %v2626
        %v2639 = vadd.f32 %v2619, %v2626
        %v2640 = vadd.f32 %v2620, %v2626
        %v2641 = vadd.f32 %v2621, %v2626
        %v2642 = vadd.f32 %v2622, %v2626
        %v2643 = vadd.f32 %v2627, %v495
        %v2644 = vadd.f32 %v2628, %v496
        %v2645 = vadd.f32 %v2629, %v497
        %v2646 = vadd.f32 %v2630, %v498
        %v2647 = vadd.f32 %v2631, %v499
        %v2648 = vadd.f32 %v2632, %v500
        %v2649 = vadd.f32 %v2633, %v501
        %v2650 = vadd.f32 %v2634, %v502
        %v2651 = vadd.f32 %v2635, %v503
        %v2652 = vadd.f32 %v2636, %v504
        %v2653 = vadd.f32 %v2637, %v505
        %v2654 = vadd.f32 %v2638, %v506
        %v2655 = vadd.f32 %v2639, %v507
        %v2656 = vadd.f32 %v2640, %v508
        %v2657 = vadd.f32 %v2641, %v509
        %v2658 = vadd.f32 %v2642, %v510
        %v2659 = vadd.f32 %v2643, %v511
        %v2660 = vadd.f32 %v2644, %v512
        %v2661 = vadd.f32 %v2645, %v513
        %v2662 = vadd.f32 %v2646, %v514
        %v2663 = vadd.f32 %v2647, %v515
        %v2664 = vadd.f32 %v2648, %v516
        %v2665 = vadd.f32 %v2649, %v517
        %v2666 = vadd.f32 %v2650, %v518
        %v2667 = vadd.f32 %v2651, %v519
        %v2668 = vadd.f32 %v2652, %v520
        %v2669 = vadd.f32 %v2653, %v521
        %v2670 = vadd.f32 %v2654, %v522
        %v2671 = vadd.f32 %v2655, %v523
        %v2672 = vadd.f32 %v2656, %v524
        %v2673 = vadd.f32 %v2657, %v525
        %v2674 = vadd.f32 %v2658, %v526
        %v2675 = vpack.c.bf16 %v2660, %v2659
        %v2676 = vpack.c.bf16 %v2662, %v2661
        %v2677 = vpack.c.bf16 %v2664, %v2663
        %v2678 = vpack.c.bf16 %v2666, %v2665
        %v2679 = vpack.c.bf16 %v2668, %v2667
        %v2680 = vpack.c.bf16 %v2670, %v2669
        %v2681 = vpack.c.bf16 %v2672, %v2671
        %v2682 = vpack.c.bf16 %v2674, %v2673
        %v2683 = vld [vmem:[%s394] sm:$0xff]
        %v2684 = vld [vmem:[%s394 + $0x8] sm:$0xff]
        %v2685 = vld [vmem:[%s394 + $0x10] sm:$0xff]
        %v2686 = vld [vmem:[%s394 + $0x18] sm:$0xff]
        %v2687 = vld [vmem:[%s394 + $0x20] sm:$0xff]
        %v2688 = vld [vmem:[%s394 + $0x28] sm:$0xff]
        %v2689 = vld [vmem:[%s394 + $0x30] sm:$0xff]
        %v2690 = vld [vmem:[%s394 + $0x38] sm:$0xff]
        %v2691 = vld [vmem:[%s394 + $0x40] sm:$0xff]
        %v2692 = vld [vmem:[%s394 + $0x48] sm:$0xff]
        %v2693 = vld [vmem:[%s394 + $0x50] sm:$0xff]
        %v2694 = vld [vmem:[%s394 + $0x58] sm:$0xff]
        %v2695 = vld [vmem:[%s394 + $0x60] sm:$0xff]
        %v2696 = vld [vmem:[%s394 + $0x68] sm:$0xff]
        %v2697 = vld [vmem:[%s394 + $0x70] sm:$0xff]
        %v2698 = vld [vmem:[%s394 + $0x78] sm:$0xff]
        %v2699 = vlaneseq
        %v2700 = vshrl.u32 %v2699, 7
        %v2701 = vsub.s32 3, %v2700
        %v2702 = vrot.slane %v527, %v2701
        %v2703 = vlaneseq
        %v2704 = vshrl.u32 %v2703, 7
        %v2705 = vsub.s32 3, %v2704
        %v2706 = vrot.slane %v528, %v2705
        %v2723 = vunpack.c.l.b16 %v2683
        %v2724 = vunpack.c.h.b16 %v2683
        %v2725 = vunpack.c.l.b16 %v2684
        %v2726 = vunpack.c.h.b16 %v2684
        %v2727 = vunpack.c.l.b16 %v2685
        %v2728 = vunpack.c.h.b16 %v2685
        %v2729 = vunpack.c.l.b16 %v2686
        %v2730 = vunpack.c.h.b16 %v2686
        %v2731 = vunpack.c.l.b16 %v2687
        %v2732 = vunpack.c.h.b16 %v2687
        %v2733 = vunpack.c.l.b16 %v2688
        %v2734 = vunpack.c.h.b16 %v2688
        %v2735 = vunpack.c.l.b16 %v2689
        %v2736 = vunpack.c.h.b16 %v2689
        %v2737 = vunpack.c.l.b16 %v2690
        %v2738 = vunpack.c.h.b16 %v2690
        %v2739 = vunpack.c.l.b16 %v2691
        %v2740 = vunpack.c.h.b16 %v2691
        %v2741 = vunpack.c.l.b16 %v2692
        %v2742 = vunpack.c.h.b16 %v2692
        %v2743 = vunpack.c.l.b16 %v2693
        %v2744 = vunpack.c.h.b16 %v2693
        %v2745 = vunpack.c.l.b16 %v2694
        %v2746 = vunpack.c.h.b16 %v2694
        %v2747 = vunpack.c.l.b16 %v2695
        %v2748 = vunpack.c.h.b16 %v2695
        %v2749 = vunpack.c.l.b16 %v2696
        %v2750 = vunpack.c.h.b16 %v2696
        %v2751 = vunpack.c.l.b16 %v2697
        %v2752 = vunpack.c.h.b16 %v2697
        %v2753 = vunpack.c.l.b16 %v2698
        %v2754 = vunpack.c.h.b16 %v2698
        %v2755 = vpack.c.b16 %v2725, %v2723
        %v2756 = vpack.c.b16 %v2726, %v2724
        %v2757 = vpack.c.b16 %v2729, %v2727
        %v2758 = vpack.c.b16 %v2730, %v2728
        %v2759 = vpack.c.b16 %v2733, %v2731
        %v2760 = vpack.c.b16 %v2734, %v2732
        %v2761 = vpack.c.b16 %v2737, %v2735
        %v2762 = vpack.c.b16 %v2738, %v2736
        %v2763 = vpack.c.b16 %v2741, %v2739
        %v2764 = vpack.c.b16 %v2742, %v2740
        %v2765 = vpack.c.b16 %v2745, %v2743
        %v2766 = vpack.c.b16 %v2746, %v2744
        %v2767 = vpack.c.b16 %v2749, %v2747
        %v2768 = vpack.c.b16 %v2750, %v2748
        %v2769 = vpack.c.b16 %v2753, %v2751
        %v2770 = vpack.c.b16 %v2754, %v2752
        %2787 = vmatprep.subr.bf16.mxu0 %v2756
        %2788 = vmatpush1.bf16.msra.mxu0 %v2755
        %2789 = vmatprep.subr.bf16.mxu0 %v2758
        %2790 = vmatpush1.bf16.msra.mxu0 %v2757
        %2791 = vmatprep.subr.bf16.mxu0 %v2760
        %2792 = vmatpush1.bf16.msra.mxu0 %v2759
        %2793 = vmatprep.subr.bf16.mxu0 %v2762
        %2794 = vmatpush1.bf16.msra.mxu0 %v2761
        %2795 = vmatprep.subr.bf16.mxu0 %v2764
        %2796 = vmatpush1.bf16.msra.mxu0 %v2763
        %2797 = vmatprep.subr.bf16.mxu0 %v2766
        %2798 = vmatpush1.bf16.msra.mxu0 %v2765
        %2799 = vmatprep.subr.bf16.mxu0 %v2768
        %2800 = vmatpush1.bf16.msra.mxu0 %v2767
        %2801 = vmatprep.subr.bf16.mxu0 %v2770
        %2802 = vmatpush1.bf16.msra.mxu0 %v2769
        %2803 = vmatprep.subr.bf16.mxu0 0
        %2804 = vmatpush1.bf16.msra.mxu0 0
        %2805 = vmatprep.subr.bf16.mxu0 0
        %2806 = vmatpush1.bf16.msra.mxu0 0
        %2807 = vmatprep.subr.bf16.mxu0 0
        %2808 = vmatpush1.bf16.msra.mxu0 0
        %2809 = vmatprep.subr.bf16.mxu0 0
        %2810 = vmatpush1.bf16.msra.mxu0 0
        %2811 = vmatprep.subr.bf16.mxu0 0
        %2812 = vmatpush1.bf16.msra.mxu0 0
        %2813 = vmatprep.subr.bf16.mxu0 0
        %2814 = vmatpush1.bf16.msra.mxu0 0
        %2815 = vmatprep.subr.bf16.mxu0 0
        %2816 = vmatpush1.bf16.msra.mxu0 0
        %2817 = vmatprep.subr.bf16.mxu0 0
        %2818 = vmatpush1.bf16.msra.mxu0 0
        %2819 = vmatprep.mubr.bf16.mxu0 0
        %2820 = vmatmul.mubr.bf16.gmra.mrb[0].mxu0 %v2675
        %v2821 = vpop.f32.mrb[0].mxu0
        %v2822 = vadd.f32 %v2702, %v2821
        %v2823 = vpop.f32.mrb[0].mxu0
        %v2824 = vadd.f32 %v2706, %v2823
        %v2825 = vpop.f32.mrb[0].mxu0
        %v2826 = vadd.f32 %v2702, %v2825
        %v2827 = vpop.f32.mrb[0].mxu0
        %v2828 = vadd.f32 %v2706, %v2827
        %2829 = vmatprep.mubr.bf16.mxu0 0
        %2830 = vmatmul.mubr.bf16.gmra.mrb[0].mxu0 %v2676
        %v2831 = vpop.f32.mrb[0].mxu0
        %v2832 = vadd.f32 %v2702, %v2831
        %v2833 = vpop.f32.mrb[0].mxu0
        %v2834 = vadd.f32 %v2706, %v2833
        %v2835 = vpop.f32.mrb[0].mxu0
        %v2836 = vadd.f32 %v2702, %v2835
        %v2837 = vpop.f32.mrb[0].mxu0
        %v2838 = vadd.f32 %v2706, %v2837
        %2839 = vmatprep.mubr.bf16.mxu0 0
        %2840 = vmatmul.mubr.bf16.gmra.mrb[0].mxu0 %v2677
        %v2841 = vpop.f32.mrb[0].mxu0
        %v2842 = vadd.f32 %v2702, %v2841
        %v2843 = vpop.f32.mrb[0].mxu0
        %v2844 = vadd.f32 %v2706, %v2843
        %v2845 = vpop.f32.mrb[0].mxu0
        %v2846 = vadd.f32 %v2702, %v2845
        %v2847 = vpop.f32.mrb[0].mxu0
        %v2848 = vadd.f32 %v2706, %v2847
        %2849 = vmatprep.mubr.bf16.mxu0 0
        %2850 = vmatmul.mubr.bf16.gmra.mrb[0].mxu0 %v2678
        %v2851 = vpop.f32.mrb[0].mxu0
        %v2852 = vadd.f32 %v2702, %v2851
        %v2853 = vpop.f32.mrb[0].mxu0
        %v2854 = vadd.f32 %v2706, %v2853
        %v2855 = vpop.f32.mrb[0].mxu0
        %v2856 = vadd.f32 %v2702, %v2855
        %v2857 = vpop.f32.mrb[0].mxu0
        %v2858 = vadd.f32 %v2706, %v2857
        %2859 = vmatprep.mubr.bf16.mxu0 0
        %2860 = vmatmul.mubr.bf16.gmra.mrb[0].mxu0 %v2679
        %v2861 = vpop.f32.mrb[0].mxu0
        %v2862 = vadd.f32 %v2702, %v2861
        %v2863 = vpop.f32.mrb[0].mxu0
        %v2864 = vadd.f32 %v2706, %v2863
        %v2865 = vpop.f32.mrb[0].mxu0
        %v2866 = vadd.f32 %v2702, %v2865
        %v2867 = vpop.f32.mrb[0].mxu0
        %v2868 = vadd.f32 %v2706, %v2867
        %2869 = vmatprep.mubr.bf16.mxu0 0
        %2870 = vmatmul.mubr.bf16.gmra.mrb[0].mxu0 %v2680
        %v2871 = vpop.f32.mrb[0].mxu0
        %v2872 = vadd.f32 %v2702, %v2871
        %v2873 = vpop.f32.mrb[0].mxu0
        %v2874 = vadd.f32 %v2706, %v2873
        %v2875 = vpop.f32.mrb[0].mxu0
        %v2876 = vadd.f32 %v2702, %v2875
        %v2877 = vpop.f32.mrb[0].mxu0
        %v2878 = vadd.f32 %v2706, %v2877
        %2879 = vmatprep.mubr.bf16.mxu0 0
        %2880 = vmatmul.mubr.bf16.gmra.mrb[0].mxu0 %v2681
        %v2881 = vpop.f32.mrb[0].mxu0
        %v2882 = vadd.f32 %v2702, %v2881
        %v2883 = vpop.f32.mrb[0].mxu0
        %v2884 = vadd.f32 %v2706, %v2883
        %v2885 = vpop.f32.mrb[0].mxu0
        %v2886 = vadd.f32 %v2702, %v2885
        %v2887 = vpop.f32.mrb[0].mxu0
        %v2888 = vadd.f32 %v2706, %v2887
        %2889 = vmatprep.mubr.bf16.mxu0 0
        %2890 = vmatmul.mubr.bf16.gmra.mrb[0].mxu0 %v2682
        %v2891 = vpop.f32.mrb[0].mxu0
        %v2892 = vadd.f32 %v2702, %v2891
        %v2893 = vpop.f32.mrb[0].mxu0
        %v2894 = vadd.f32 %v2706, %v2893
        %v2895 = vpop.f32.mrb[0].mxu0
        %v2896 = vadd.f32 %v2702, %v2895
        %v2897 = vpop.f32.mrb[0].mxu0
        %v2898 = vadd.f32 %v2706, %v2897
        %2899 = vdwg.mxu0
        %v2900 = vmul.f32 %v2822, 0.5
        %v2901 = vmul.f32 %v2824, 0.5
        %v2902 = vmul.f32 %v2826, 0.5
        %v2903 = vmul.f32 %v2828, 0.5
        %v2904 = vmul.f32 %v2832, 0.5
        %v2905 = vmul.f32 %v2834, 0.5
        %v2906 = vmul.f32 %v2836, 0.5
        %v2907 = vmul.f32 %v2838, 0.5
        %v2908 = vmul.f32 %v2842, 0.5
        %v2909 = vmul.f32 %v2844, 0.5
        %v2910 = vmul.f32 %v2846, 0.5
        %v2911 = vmul.f32 %v2848, 0.5
        %v2912 = vmul.f32 %v2852, 0.5
        %v2913 = vmul.f32 %v2854, 0.5
        %v2914 = vmul.f32 %v2856, 0.5
        %v2915 = vmul.f32 %v2858, 0.5
        %v2916 = vmul.f32 %v2862, 0.5
        %v2917 = vmul.f32 %v2864, 0.5
        %v2918 = vmul.f32 %v2866, 0.5
        %v2919 = vmul.f32 %v2868, 0.5
        %v2920 = vmul.f32 %v2872, 0.5
        %v2921 = vmul.f32 %v2874, 0.5
        %v2922 = vmul.f32 %v2876, 0.5
        %v2923 = vmul.f32 %v2878, 0.5
        %v2924 = vmul.f32 %v2882, 0.5
        %v2925 = vmul.f32 %v2884, 0.5
        %v2926 = vmul.f32 %v2886, 0.5
        %v2927 = vmul.f32 %v2888, 0.5
        %v2928 = vmul.f32 %v2892, 0.5
        %v2929 = vmul.f32 %v2894, 0.5
        %v2930 = vmul.f32 %v2896, 0.5
        %v2931 = vmul.f32 %v2898, 0.5
        %v2932 = vmul.f32 %v2822, 0.70710677
        %v2933 = vmul.f32 %v2824, 0.70710677
        %v2934 = vmul.f32 %v2826, 0.70710677
        %v2935 = vmul.f32 %v2828, 0.70710677
        %v2936 = vmul.f32 %v2832, 0.70710677
        %v2937 = vmul.f32 %v2834, 0.70710677
        %v2938 = vmul.f32 %v2836, 0.70710677
        %v2939 = vmul.f32 %v2838, 0.70710677
        %v2940 = vmul.f32 %v2842, 0.70710677
        %v2941 = vmul.f32 %v2844, 0.70710677
        %v2942 = vmul.f32 %v2846, 0.70710677
        %v2943 = vmul.f32 %v2848, 0.70710677
        %v2944 = vmul.f32 %v2852, 0.70710677
        %v2945 = vmul.f32 %v2854, 0.70710677
        %v2946 = vmul.f32 %v2856, 0.70710677
        %v2947 = vmul.f32 %v2858, 0.70710677
        %v2948 = vmul.f32 %v2862, 0.70710677
        %v2949 = vmul.f32 %v2864, 0.70710677
        %v2950 = vmul.f32 %v2866, 0.70710677
        %v2951 = vmul.f32 %v2868, 0.70710677
        %v2952 = vmul.f32 %v2872, 0.70710677
        %v2953 = vmul.f32 %v2874, 0.70710677
        %v2954 = vmul.f32 %v2876, 0.70710677
        %v2955 = vmul.f32 %v2878, 0.70710677
        %v2956 = vmul.f32 %v2882, 0.70710677
        %v2957 = vmul.f32 %v2884, 0.70710677
        %v2958 = vmul.f32 %v2886, 0.70710677
        %v2959 = vmul.f32 %v2888, 0.70710677
        %v2960 = vmul.f32 %v2892, 0.70710677
        %v2961 = vmul.f32 %v2894, 0.70710677
        %v2962 = vmul.f32 %v2896, 0.70710677
        %v2963 = vmul.f32 %v2898, 0.70710677
        %v2964 = vand.u32 2147483647, %v2932
        %v2965 = vand.u32 2147483647, %v2933
        %v2966 = vand.u32 2147483647, %v2934
        %v2967 = vand.u32 2147483647, %v2935
        %v2968 = vand.u32 2147483647, %v2936
        %v2969 = vand.u32 2147483647, %v2937
        %v2970 = vand.u32 2147483647, %v2938
        %v2971 = vand.u32 2147483647, %v2939
        %v2972 = vand.u32 2147483647, %v2940
        %v2973 = vand.u32 2147483647, %v2941
        %v2974 = vand.u32 2147483647, %v2942
        %v2975 = vand.u32 2147483647, %v2943
        %v2976 = vand.u32 2147483647, %v2944
        %v2977 = vand.u32 2147483647, %v2945
        %v2978 = vand.u32 2147483647, %v2946
        %v2979 = vand.u32 2147483647, %v2947
        %v2980 = vand.u32 2147483647, %v2948
        %v2981 = vand.u32 2147483647, %v2949
        %v2982 = vand.u32 2147483647, %v2950
        %v2983 = vand.u32 2147483647, %v2951
        %v2984 = vand.u32 2147483647, %v2952
        %v2985 = vand.u32 2147483647, %v2953
        %v2986 = vand.u32 2147483647, %v2954
        %v2987 = vand.u32 2147483647, %v2955
        %v2988 = vand.u32 2147483647, %v2956
        %v2989 = vand.u32 2147483647, %v2957
        %v2990 = vand.u32 2147483647, %v2958
        %v2991 = vand.u32 2147483647, %v2959
        %v2992 = vand.u32 2147483647, %v2960
        %v2993 = vand.u32 2147483647, %v2961
        %v2994 = vand.u32 2147483647, %v2962
        %v2995 = vand.u32 2147483647, %v2963
        %v2996 = vmul.f32 %v2964, 0.3275911
        %v2997 = vmul.f32 %v2965, 0.3275911
        %v2998 = vmul.f32 %v2966, 0.3275911
        %v2999 = vmul.f32 %v2967, 0.3275911
        %v3000 = vmul.f32 %v2968, 0.3275911
        %v3001 = vmul.f32 %v2969, 0.3275911
        %v3002 = vmul.f32 %v2970, 0.3275911
        %v3003 = vmul.f32 %v2971, 0.3275911
        %v3004 = vmul.f32 %v2972, 0.3275911
        %v3005 = vmul.f32 %v2973, 0.3275911
        %v3006 = vmul.f32 %v2974, 0.3275911
        %v3007 = vmul.f32 %v2975, 0.3275911
        %v3008 = vmul.f32 %v2976, 0.3275911
        %v3009 = vmul.f32 %v2977, 0.3275911
        %v3010 = vmul.f32 %v2978, 0.3275911
        %v3011 = vmul.f32 %v2979, 0.3275911
        %v3012 = vmul.f32 %v2980, 0.3275911
        %v3013 = vmul.f32 %v2981, 0.3275911
        %v3014 = vmul.f32 %v2982, 0.3275911
        %v3015 = vmul.f32 %v2983, 0.3275911
        %v3016 = vmul.f32 %v2984, 0.3275911
        %v3017 = vmul.f32 %v2985, 0.3275911
        %v3018 = vmul.f32 %v2986, 0.3275911
        %v3019 = vmul.f32 %v2987, 0.3275911
        %v3020 = vmul.f32 %v2988, 0.3275911
        %v3021 = vmul.f32 %v2989, 0.3275911
        %v3022 = vmul.f32 %v2990, 0.3275911
        %v3023 = vmul.f32 %v2991, 0.3275911
        %v3024 = vmul.f32 %v2992, 0.3275911
        %v3025 = vmul.f32 %v2993, 0.3275911
        %v3026 = vmul.f32 %v2994, 0.3275911
        %v3027 = vmul.f32 %v2995, 0.3275911
        %v3028 = vadd.f32 %v2996, 1.0
        %v3029 = vadd.f32 %v2997, 1.0
        %v3030 = vadd.f32 %v2998, 1.0
        %v3031 = vadd.f32 %v2999, 1.0
        %v3032 = vadd.f32 %v3000, 1.0
        %v3033 = vadd.f32 %v3001, 1.0
        %v3034 = vadd.f32 %v3002, 1.0
        %v3035 = vadd.f32 %v3003, 1.0
        %v3036 = vadd.f32 %v3004, 1.0
        %v3037 = vadd.f32 %v3005, 1.0
        %v3038 = vadd.f32 %v3006, 1.0
        %v3039 = vadd.f32 %v3007, 1.0
        %v3040 = vadd.f32 %v3008, 1.0
        %v3041 = vadd.f32 %v3009, 1.0
        %v3042 = vadd.f32 %v3010, 1.0
        %v3043 = vadd.f32 %v3011, 1.0
        %v3044 = vadd.f32 %v3012, 1.0
        %v3045 = vadd.f32 %v3013, 1.0
        %v3046 = vadd.f32 %v3014, 1.0
        %v3047 = vadd.f32 %v3015, 1.0
        %v3048 = vadd.f32 %v3016, 1.0
        %v3049 = vadd.f32 %v3017, 1.0
        %v3050 = vadd.f32 %v3018, 1.0
        %v3051 = vadd.f32 %v3019, 1.0
        %v3052 = vadd.f32 %v3020, 1.0
        %v3053 = vadd.f32 %v3021, 1.0
        %v3054 = vadd.f32 %v3022, 1.0
        %v3055 = vadd.f32 %v3023, 1.0
        %v3056 = vadd.f32 %v3024, 1.0
        %v3057 = vadd.f32 %v3025, 1.0
        %v3058 = vadd.f32 %v3026, 1.0
        %v3059 = vadd.f32 %v3027, 1.0
        %v3060 = vrcp.pop %v3028
        %v3061 = vmul.f32 1.0, %v3060
        %v3062 = vrcp.pop %v3029
        %v3063 = vmul.f32 1.0, %v3062
        %v3064 = vrcp.pop %v3030
        %v3065 = vmul.f32 1.0, %v3064
        %v3066 = vrcp.pop %v3031
        %v3067 = vmul.f32 1.0, %v3066
        %v3068 = vrcp.pop %v3032
        %v3069 = vmul.f32 1.0, %v3068
        %v3070 = vrcp.pop %v3033
        %v3071 = vmul.f32 1.0, %v3070
        %v3072 = vrcp.pop %v3034
        %v3073 = vmul.f32 1.0, %v3072
        %v3074 = vrcp.pop %v3035
        %v3075 = vmul.f32 1.0, %v3074
        %v3076 = vrcp.pop %v3036
        %v3077 = vmul.f32 1.0, %v3076
        %v3078 = vrcp.pop %v3037
        %v3079 = vmul.f32 1.0, %v3078
        %v3080 = vrcp.pop %v3038
        %v3081 = vmul.f32 1.0, %v3080
        %v3082 = vrcp.pop %v3039
        %v3083 = vmul.f32 1.0, %v3082
        %v3084 = vrcp.pop %v3040
        %v3085 = vmul.f32 1.0, %v3084
        %v3086 = vrcp.pop %v3041
        %v3087 = vmul.f32 1.0, %v3086
        %v3088 = vrcp.pop %v3042
        %v3089 = vmul.f32 1.0, %v3088
        %v3090 = vrcp.pop %v3043
        %v3091 = vmul.f32 1.0, %v3090
        %v3092 = vrcp.pop %v3044
        %v3093 = vmul.f32 1.0, %v3092
        %v3094 = vrcp.pop %v3045
        %v3095 = vmul.f32 1.0, %v3094
        %v3096 = vrcp.pop %v3046
        %v3097 = vmul.f32 1.0, %v3096
        %v3098 = vrcp.pop %v3047
        %v3099 = vmul.f32 1.0, %v3098
        %v3100 = vrcp.pop %v3048
        %v3101 = vmul.f32 1.0, %v3100
        %v3102 = vrcp.pop %v3049
        %v3103 = vmul.f32 1.0, %v3102
        %v3104 = vrcp.pop %v3050
        %v3105 = vmul.f32 1.0, %v3104
        %v3106 = vrcp.pop %v3051
        %v3107 = vmul.f32 1.0, %v3106
        %v3108 = vrcp.pop %v3052
        %v3109 = vmul.f32 1.0, %v3108
        %v3110 = vrcp.pop %v3053
        %v3111 = vmul.f32 1.0, %v3110
        %v3112 = vrcp.pop %v3054
        %v3113 = vmul.f32 1.0, %v3112
        %v3114 = vrcp.pop %v3055
        %v3115 = vmul.f32 1.0, %v3114
        %v3116 = vrcp.pop %v3056
        %v3117 = vmul.f32 1.0, %v3116
        %v3118 = vrcp.pop %v3057
        %v3119 = vmul.f32 1.0, %v3118
        %v3120 = vrcp.pop %v3058
        %v3121 = vmul.f32 1.0, %v3120
        %v3122 = vrcp.pop %v3059
        %v3123 = vmul.f32 1.0, %v3122
        %v3124 = vmul.f32 %v3061, 1.0614054
        %v3125 = vmul.f32 %v3063, 1.0614054
        %v3126 = vmul.f32 %v3065, 1.0614054
        %v3127 = vmul.f32 %v3067, 1.0614054
        %v3128 = vmul.f32 %v3069, 1.0614054
        %v3129 = vmul.f32 %v3071, 1.0614054
        %v3130 = vmul.f32 %v3073, 1.0614054
        %v3131 = vmul.f32 %v3075, 1.0614054
        %v3132 = vmul.f32 %v3077, 1.0614054
        %v3133 = vmul.f32 %v3079, 1.0614054
        %v3134 = vmul.f32 %v3081, 1.0614054
        %v3135 = vmul.f32 %v3083, 1.0614054
        %v3136 = vmul.f32 %v3085, 1.0614054
        %v3137 = vmul.f32 %v3087, 1.0614054
        %v3138 = vmul.f32 %v3089, 1.0614054
        %v3139 = vmul.f32 %v3091, 1.0614054
        %v3140 = vmul.f32 %v3093, 1.0614054
        %v3141 = vmul.f32 %v3095, 1.0614054
        %v3142 = vmul.f32 %v3097, 1.0614054
        %v3143 = vmul.f32 %v3099, 1.0614054
        %v3144 = vmul.f32 %v3101, 1.0614054
        %v3145 = vmul.f32 %v3103, 1.0614054
        %v3146 = vmul.f32 %v3105, 1.0614054
        %v3147 = vmul.f32 %v3107, 1.0614054
        %v3148 = vmul.f32 %v3109, 1.0614054
        %v3149 = vmul.f32 %v3111, 1.0614054
        %v3150 = vmul.f32 %v3113, 1.0614054
        %v3151 = vmul.f32 %v3115, 1.0614054
        %v3152 = vmul.f32 %v3117, 1.0614054
        %v3153 = vmul.f32 %v3119, 1.0614054
        %v3154 = vmul.f32 %v3121, 1.0614054
        %v3155 = vmul.f32 %v3123, 1.0614054
        %v3156 = vadd.f32 %v3124, -1.4531521
        %v3157 = vadd.f32 %v3125, -1.4531521
        %v3158 = vadd.f32 %v3126, -1.4531521
        %v3159 = vadd.f32 %v3127, -1.4531521
        %v3160 = vadd.f32 %v3128, -1.4531521
        %v3161 = vadd.f32 %v3129, -1.4531521
        %v3162 = vadd.f32 %v3130, -1.4531521
        %v3163 = vadd.f32 %v3131, -1.4531521
        %v3164 = vadd.f32 %v3132, -1.4531521
        %v3165 = vadd.f32 %v3133, -1.4531521
        %v3166 = vadd.f32 %v3134, -1.4531521
        %v3167 = vadd.f32 %v3135, -1.4531521
        %v3168 = vadd.f32 %v3136, -1.4531521
        %v3169 = vadd.f32 %v3137, -1.4531521
        %v3170 = vadd.f32 %v3138, -1.4531521
        %v3171 = vadd.f32 %v3139, -1.4531521
        %v3172 = vadd.f32 %v3140, -1.4531521
        %v3173 = vadd.f32 %v3141, -1.4531521
        %v3174 = vadd.f32 %v3142, -1.4531521
        %v3175 = vadd.f32 %v3143, -1.4531521
        %v3176 = vadd.f32 %v3144, -1.4531521
        %v3177 = vadd.f32 %v3145, -1.4531521
        %v3178 = vadd.f32 %v3146, -1.4531521
        %v3179 = vadd.f32 %v3147, -1.4531521
        %v3180 = vadd.f32 %v3148, -1.4531521
        %v3181 = vadd.f32 %v3149, -1.4531521
        %v3182 = vadd.f32 %v3150, -1.4531521
        %v3183 = vadd.f32 %v3151, -1.4531521
        %v3184 = vadd.f32 %v3152, -1.4531521
        %v3185 = vadd.f32 %v3153, -1.4531521
        %v3186 = vadd.f32 %v3154, -1.4531521
        %v3187 = vadd.f32 %v3155, -1.4531521
        %v3188 = vmul.f32 %v3156, %v3061
        %v3189 = vmul.f32 %v3157, %v3063
        %v3190 = vmul.f32 %v3158, %v3065
        %v3191 = vmul.f32 %v3159, %v3067
        %v3192 = vmul.f32 %v3160, %v3069
        %v3193 = vmul.f32 %v3161, %v3071
        %v3194 = vmul.f32 %v3162, %v3073
        %v3195 = vmul.f32 %v3163, %v3075
        %v3196 = vmul.f32 %v3164, %v3077
        %v3197 = vmul.f32 %v3165, %v3079
        %v3198 = vmul.f32 %v3166, %v3081
        %v3199 = vmul.f32 %v3167, %v3083
        %v3200 = vmul.f32 %v3168, %v3085
        %v3201 = vmul.f32 %v3169, %v3087
        %v3202 = vmul.f32 %v3170, %v3089
        %v3203 = vmul.f32 %v3171, %v3091
        %v3204 = vmul.f32 %v3172, %v3093
        %v3205 = vmul.f32 %v3173, %v3095
        %v3206 = vmul.f32 %v3174, %v3097
        %v3207 = vmul.f32 %v3175, %v3099
        %v3208 = vmul.f32 %v3176, %v3101
        %v3209 = vmul.f32 %v3177, %v3103
        %v3210 = vmul.f32 %v3178, %v3105
        %v3211 = vmul.f32 %v3179, %v3107
        %v3212 = vmul.f32 %v3180, %v3109
        %v3213 = vmul.f32 %v3181, %v3111
        %v3214 = vmul.f32 %v3182, %v3113
        %v3215 = vmul.f32 %v3183, %v3115
        %v3216 = vmul.f32 %v3184, %v3117
        %v3217 = vmul.f32 %v3185, %v3119
        %v3218 = vmul.f32 %v3186, %v3121
        %v3219 = vmul.f32 %v3187, %v3123
        %v3220 = vadd.f32 %v3188, 1.4214138
        %v3221 = vadd.f32 %v3189, 1.4214138
        %v3222 = vadd.f32 %v3190, 1.4214138
        %v3223 = vadd.f32 %v3191, 1.4214138
        %v3224 = vadd.f32 %v3192, 1.4214138
        %v3225 = vadd.f32 %v3193, 1.4214138
        %v3226 = vadd.f32 %v3194, 1.4214138
        %v3227 = vadd.f32 %v3195, 1.4214138
        %v3228 = vadd.f32 %v3196, 1.4214138
        %v3229 = vadd.f32 %v3197, 1.4214138
        %v3230 = vadd.f32 %v3198, 1.4214138
        %v3231 = vadd.f32 %v3199, 1.4214138
        %v3232 = vadd.f32 %v3200, 1.4214138
        %v3233 = vadd.f32 %v3201, 1.4214138
        %v3234 = vadd.f32 %v3202, 1.4214138
        %v3235 = vadd.f32 %v3203, 1.4214138
        %v3236 = vadd.f32 %v3204, 1.4214138
        %v3237 = vadd.f32 %v3205, 1.4214138
        %v3238 = vadd.f32 %v3206, 1.4214138
        %v3239 = vadd.f32 %v3207, 1.4214138
        %v3240 = vadd.f32 %v3208, 1.4214138
        %v3241 = vadd.f32 %v3209, 1.4214138
        %v3242 = vadd.f32 %v3210, 1.4214138
        %v3243 = vadd.f32 %v3211, 1.4214138
        %v3244 = vadd.f32 %v3212, 1.4214138
        %v3245 = vadd.f32 %v3213, 1.4214138
        %v3246 = vadd.f32 %v3214, 1.4214138
        %v3247 = vadd.f32 %v3215, 1.4214138
        %v3248 = vadd.f32 %v3216, 1.4214138
        %v3249 = vadd.f32 %v3217, 1.4214138
        %v3250 = vadd.f32 %v3218, 1.4214138
        %v3251 = vadd.f32 %v3219, 1.4214138
        %v3252 = vmul.f32 %v3220, %v3061
        %v3253 = vmul.f32 %v3221, %v3063
        %v3254 = vmul.f32 %v3222, %v3065
        %v3255 = vmul.f32 %v3223, %v3067
        %v3256 = vmul.f32 %v3224, %v3069
        %v3257 = vmul.f32 %v3225, %v3071
        %v3258 = vmul.f32 %v3226, %v3073
        %v3259 = vmul.f32 %v3227, %v3075
        %v3260 = vmul.f32 %v3228, %v3077
        %v3261 = vmul.f32 %v3229, %v3079
        %v3262 = vmul.f32 %v3230, %v3081
        %v3263 = vmul.f32 %v3231, %v3083
        %v3264 = vmul.f32 %v3232, %v3085
        %v3265 = vmul.f32 %v3233, %v3087
        %v3266 = vmul.f32 %v3234, %v3089
        %v3267 = vmul.f32 %v3235, %v3091
        %v3268 = vmul.f32 %v3236, %v3093
        %v3269 = vmul.f32 %v3237, %v3095
        %v3270 = vmul.f32 %v3238, %v3097
        %v3271 = vmul.f32 %v3239, %v3099
        %v3272 = vmul.f32 %v3240, %v3101
        %v3273 = vmul.f32 %v3241, %v3103
        %v3274 = vmul.f32 %v3242, %v3105
        %v3275 = vmul.f32 %v3243, %v3107
        %v3276 = vmul.f32 %v3244, %v3109
        %v3277 = vmul.f32 %v3245, %v3111
        %v3278 = vmul.f32 %v3246, %v3113
        %v3279 = vmul.f32 %v3247, %v3115
        %v3280 = vmul.f32 %v3248, %v3117
        %v3281 = vmul.f32 %v3249, %v3119
        %v3282 = vmul.f32 %v3250, %v3121
        %v3283 = vmul.f32 %v3251, %v3123
        %v3284 = vadd.f32 %v3252, -0.28449672
        %v3285 = vadd.f32 %v3253, -0.28449672
        %v3286 = vadd.f32 %v3254, -0.28449672
        %v3287 = vadd.f32 %v3255, -0.28449672
        %v3288 = vadd.f32 %v3256, -0.28449672
        %v3289 = vadd.f32 %v3257, -0.28449672
        %v3290 = vadd.f32 %v3258, -0.28449672
        %v3291 = vadd.f32 %v3259, -0.28449672
        %v3292 = vadd.f32 %v3260, -0.28449672
        %v3293 = vadd.f32 %v3261, -0.28449672
        %v3294 = vadd.f32 %v3262, -0.28449672
        %v3295 = vadd.f32 %v3263, -0.28449672
        %v3296 = vadd.f32 %v3264, -0.28449672
        %v3297 = vadd.f32 %v3265, -0.28449672
        %v3298 = vadd.f32 %v3266, -0.28449672
        %v3299 = vadd.f32 %v3267, -0.28449672
        %v3300 = vadd.f32 %v3268, -0.28449672
        %v3301 = vadd.f32 %v3269, -0.28449672
        %v3302 = vadd.f32 %v3270, -0.28449672
        %v3303 = vadd.f32 %v3271, -0.28449672
        %v3304 = vadd.f32 %v3272, -0.28449672
        %v3305 = vadd.f32 %v3273, -0.28449672
        %v3306 = vadd.f32 %v3274, -0.28449672
        %v3307 = vadd.f32 %v3275, -0.28449672
        %v3308 = vadd.f32 %v3276, -0.28449672
        %v3309 = vadd.f32 %v3277, -0.28449672
        %v3310 = vadd.f32 %v3278, -0.28449672
        %v3311 = vadd.f32 %v3279, -0.28449672
        %v3312 = vadd.f32 %v3280, -0.28449672
        %v3313 = vadd.f32 %v3281, -0.28449672
        %v3314 = vadd.f32 %v3282, -0.28449672
        %v3315 = vadd.f32 %v3283, -0.28449672
        %v3316 = vmul.f32 %v3284, %v3061
        %v3317 = vmul.f32 %v3285, %v3063
        %v3318 = vmul.f32 %v3286, %v3065
        %v3319 = vmul.f32 %v3287, %v3067
        %v3320 = vmul.f32 %v3288, %v3069
        %v3321 = vmul.f32 %v3289, %v3071
        %v3322 = vmul.f32 %v3290, %v3073
        %v3323 = vmul.f32 %v3291, %v3075
        %v3324 = vmul.f32 %v3292, %v3077
        %v3325 = vmul.f32 %v3293, %v3079
        %v3326 = vmul.f32 %v3294, %v3081
        %v3327 = vmul.f32 %v3295, %v3083
        %v3328 = vmul.f32 %v3296, %v3085
        %v3329 = vmul.f32 %v3297, %v3087
        %v3330 = vmul.f32 %v3298, %v3089
        %v3331 = vmul.f32 %v3299, %v3091
        %v3332 = vmul.f32 %v3300, %v3093
        %v3333 = vmul.f32 %v3301, %v3095
        %v3334 = vmul.f32 %v3302, %v3097
        %v3335 = vmul.f32 %v3303, %v3099
        %v3336 = vmul.f32 %v3304, %v3101
        %v3337 = vmul.f32 %v3305, %v3103
        %v3338 = vmul.f32 %v3306, %v3105
        %v3339 = vmul.f32 %v3307, %v3107
        %v3340 = vmul.f32 %v3308, %v3109
        %v3341 = vmul.f32 %v3309, %v3111
        %v3342 = vmul.f32 %v3310, %v3113
        %v3343 = vmul.f32 %v3311, %v3115
        %v3344 = vmul.f32 %v3312, %v3117
        %v3345 = vmul.f32 %v3313, %v3119
        %v3346 = vmul.f32 %v3314, %v3121
        %v3347 = vmul.f32 %v3315, %v3123
        %v3348 = vadd.f32 %v3316, 0.2548296
        %v3349 = vadd.f32 %v3317, 0.2548296
        %v3350 = vadd.f32 %v3318, 0.2548296
        %v3351 = vadd.f32 %v3319, 0.2548296
        %v3352 = vadd.f32 %v3320, 0.2548296
        %v3353 = vadd.f32 %v3321, 0.2548296
        %v3354 = vadd.f32 %v3322, 0.2548296
        %v3355 = vadd.f32 %v3323, 0.2548296
        %v3356 = vadd.f32 %v3324, 0.2548296
        %v3357 = vadd.f32 %v3325, 0.2548296
        %v3358 = vadd.f32 %v3326, 0.2548296
        %v3359 = vadd.f32 %v3327, 0.2548296
        %v3360 = vadd.f32 %v3328, 0.2548296
        %v3361 = vadd.f32 %v3329, 0.2548296
        %v3362 = vadd.f32 %v3330, 0.2548296
        %v3363 = vadd.f32 %v3331, 0.2548296
        %v3364 = vadd.f32 %v3332, 0.2548296
        %v3365 = vadd.f32 %v3333, 0.2548296
        %v3366 = vadd.f32 %v3334, 0.2548296
        %v3367 = vadd.f32 %v3335, 0.2548296
        %v3368 = vadd.f32 %v3336, 0.2548296
        %v3369 = vadd.f32 %v3337, 0.2548296
        %v3370 = vadd.f32 %v3338, 0.2548296
        %v3371 = vadd.f32 %v3339, 0.2548296
        %v3372 = vadd.f32 %v3340, 0.2548296
        %v3373 = vadd.f32 %v3341, 0.2548296
        %v3374 = vadd.f32 %v3342, 0.2548296
        %v3375 = vadd.f32 %v3343, 0.2548296
        %v3376 = vadd.f32 %v3344, 0.2548296
        %v3377 = vadd.f32 %v3345, 0.2548296
        %v3378 = vadd.f32 %v3346, 0.2548296
        %v3379 = vadd.f32 %v3347, 0.2548296
        %v3380 = vmul.f32 %v3348, %v3061
        %v3381 = vmul.f32 %v3349, %v3063
        %v3382 = vmul.f32 %v3350, %v3065
        %v3383 = vmul.f32 %v3351, %v3067
        %v3384 = vmul.f32 %v3352, %v3069
        %v3385 = vmul.f32 %v3353, %v3071
        %v3386 = vmul.f32 %v3354, %v3073
        %v3387 = vmul.f32 %v3355, %v3075
        %v3388 = vmul.f32 %v3356, %v3077
        %v3389 = vmul.f32 %v3357, %v3079
        %v3390 = vmul.f32 %v3358, %v3081
        %v3391 = vmul.f32 %v3359, %v3083
        %v3392 = vmul.f32 %v3360, %v3085
        %v3393 = vmul.f32 %v3361, %v3087
        %v3394 = vmul.f32 %v3362, %v3089
        %v3395 = vmul.f32 %v3363, %v3091
        %v3396 = vmul.f32 %v3364, %v3093
        %v3397 = vmul.f32 %v3365, %v3095
        %v3398 = vmul.f32 %v3366, %v3097
        %v3399 = vmul.f32 %v3367, %v3099
        %v3400 = vmul.f32 %v3368, %v3101
        %v3401 = vmul.f32 %v3369, %v3103
        %v3402 = vmul.f32 %v3370, %v3105
        %v3403 = vmul.f32 %v3371, %v3107
        %v3404 = vmul.f32 %v3372, %v3109
        %v3405 = vmul.f32 %v3373, %v3111
        %v3406 = vmul.f32 %v3374, %v3113
        %v3407 = vmul.f32 %v3375, %v3115
        %v3408 = vmul.f32 %v3376, %v3117
        %v3409 = vmul.f32 %v3377, %v3119
        %v3410 = vmul.f32 %v3378, %v3121
        %v3411 = vmul.f32 %v3379, %v3123
        %v3412 = vsub.f32 0.0, %v2964
        %v3413 = vsub.f32 0.0, %v2965
        %v3414 = vsub.f32 0.0, %v2966
        %v3415 = vsub.f32 0.0, %v2967
        %v3416 = vsub.f32 0.0, %v2968
        %v3417 = vsub.f32 0.0, %v2969
        %v3418 = vsub.f32 0.0, %v2970
        %v3419 = vsub.f32 0.0, %v2971
        %v3420 = vsub.f32 0.0, %v2972
        %v3421 = vsub.f32 0.0, %v2973
        %v3422 = vsub.f32 0.0, %v2974
        %v3423 = vsub.f32 0.0, %v2975
        %v3424 = vsub.f32 0.0, %v2976
        %v3425 = vsub.f32 0.0, %v2977
        %v3426 = vsub.f32 0.0, %v2978
        %v3427 = vsub.f32 0.0, %v2979
        %v3428 = vsub.f32 0.0, %v2980
        %v3429 = vsub.f32 0.0, %v2981
        %v3430 = vsub.f32 0.0, %v2982
        %v3431 = vsub.f32 0.0, %v2983
        %v3432 = vsub.f32 0.0, %v2984
        %v3433 = vsub.f32 0.0, %v2985
        %v3434 = vsub.f32 0.0, %v2986
        %v3435 = vsub.f32 0.0, %v2987
        %v3436 = vsub.f32 0.0, %v2988
        %v3437 = vsub.f32 0.0, %v2989
        %v3438 = vsub.f32 0.0, %v2990
        %v3439 = vsub.f32 0.0, %v2991
        %v3440 = vsub.f32 0.0, %v2992
        %v3441 = vsub.f32 0.0, %v2993
        %v3442 = vsub.f32 0.0, %v2994
        %v3443 = vsub.f32 0.0, %v2995
        %v3444 = vmul.f32 %v3412, %v2964
        %v3445 = vmul.f32 %v3413, %v2965
        %v3446 = vmul.f32 %v3414, %v2966
        %v3447 = vmul.f32 %v3415, %v2967
        %v3448 = vmul.f32 %v3416, %v2968
        %v3449 = vmul.f32 %v3417, %v2969
        %v3450 = vmul.f32 %v3418, %v2970
        %v3451 = vmul.f32 %v3419, %v2971
        %v3452 = vmul.f32 %v3420, %v2972
        %v3453 = vmul.f32 %v3421, %v2973
        %v3454 = vmul.f32 %v3422, %v2974
        %v3455 = vmul.f32 %v3423, %v2975
        %v3456 = vmul.f32 %v3424, %v2976
        %v3457 = vmul.f32 %v3425, %v2977
        %v3458 = vmul.f32 %v3426, %v2978
        %v3459 = vmul.f32 %v3427, %v2979
        %v3460 = vmul.f32 %v3428, %v2980
        %v3461 = vmul.f32 %v3429, %v2981
        %v3462 = vmul.f32 %v3430, %v2982
        %v3463 = vmul.f32 %v3431, %v2983
        %v3464 = vmul.f32 %v3432, %v2984
        %v3465 = vmul.f32 %v3433, %v2985
        %v3466 = vmul.f32 %v3434, %v2986
        %v3467 = vmul.f32 %v3435, %v2987
        %v3468 = vmul.f32 %v3436, %v2988
        %v3469 = vmul.f32 %v3437, %v2989
        %v3470 = vmul.f32 %v3438, %v2990
        %v3471 = vmul.f32 %v3439, %v2991
        %v3472 = vmul.f32 %v3440, %v2992
        %v3473 = vmul.f32 %v3441, %v2993
        %v3474 = vmul.f32 %v3442, %v2994
        %v3475 = vmul.f32 %v3443, %v2995
        %v3476 = vmul.f32 %v3444, 1.442695
        %v3477 = vpow.pop %v3476
        %v3478 = vmul.f32 %v3445, 1.442695
        %v3479 = vpow.pop %v3478
        %v3480 = vmul.f32 %v3446, 1.442695
        %v3481 = vpow.pop %v3480
        %v3482 = vmul.f32 %v3447, 1.442695
        %v3483 = vpow.pop %v3482
        %v3484 = vmul.f32 %v3448, 1.442695
        %v3485 = vpow.pop %v3484
        %v3486 = vmul.f32 %v3449, 1.442695
        %v3487 = vpow.pop %v3486
        %v3488 = vmul.f32 %v3450, 1.442695
        %v3489 = vpow.pop %v3488
        %v3490 = vmul.f32 %v3451, 1.442695
        %v3491 = vpow.pop %v3490
        %v3492 = vmul.f32 %v3452, 1.442695
        %v3493 = vpow.pop %v3492
        %v3494 = vmul.f32 %v3453, 1.442695
        %v3495 = vpow.pop %v3494
        %v3496 = vmul.f32 %v3454, 1.442695
        %v3497 = vpow.pop %v3496
        %v3498 = vmul.f32 %v3455, 1.442695
        %v3499 = vpow.pop %v3498
        %v3500 = vmul.f32 %v3456, 1.442695
        %v3501 = vpow.pop %v3500
        %v3502 = vmul.f32 %v3457, 1.442695
        %v3503 = vpow.pop %v3502
        %v3504 = vmul.f32 %v3458, 1.442695
        %v3505 = vpow.pop %v3504
        %v3506 = vmul.f32 %v3459, 1.442695
        %v3507 = vpow.pop %v3506
        %v3508 = vmul.f32 %v3460, 1.442695
        %v3509 = vpow.pop %v3508
        %v3510 = vmul.f32 %v3461, 1.442695
        %v3511 = vpow.pop %v3510
        %v3512 = vmul.f32 %v3462, 1.442695
        %v3513 = vpow.pop %v3512
        %v3514 = vmul.f32 %v3463, 1.442695
        %v3515 = vpow.pop %v3514
        %v3516 = vmul.f32 %v3464, 1.442695
        %v3517 = vpow.pop %v3516
        %v3518 = vmul.f32 %v3465, 1.442695
        %v3519 = vpow.pop %v3518
        %v3520 = vmul.f32 %v3466, 1.442695
        %v3521 = vpow.pop %v3520
        %v3522 = vmul.f32 %v3467, 1.442695
        %v3523 = vpow.pop %v3522
        %v3524 = vmul.f32 %v3468, 1.442695
        %v3525 = vpow.pop %v3524
        %v3526 = vmul.f32 %v3469, 1.442695
        %v3527 = vpow.pop %v3526
        %v3528 = vmul.f32 %v3470, 1.442695
        %v3529 = vpow.pop %v3528
        %v3530 = vmul.f32 %v3471, 1.442695
        %v3531 = vpow.pop %v3530
        %v3532 = vmul.f32 %v3472, 1.442695
        %v3533 = vpow.pop %v3532
        %v3534 = vmul.f32 %v3473, 1.442695
        %v3535 = vpow.pop %v3534
        %v3536 = vmul.f32 %v3474, 1.442695
        %v3537 = vpow.pop %v3536
        %v3538 = vmul.f32 %v3475, 1.442695
        %v3539 = vpow.pop %v3538
        %v3540 = vmul.f32 %v3380, %v3477
        %v3541 = vmul.f32 %v3381, %v3479
        %v3542 = vmul.f32 %v3382, %v3481
        %v3543 = vmul.f32 %v3383, %v3483
        %v3544 = vmul.f32 %v3384, %v3485
        %v3545 = vmul.f32 %v3385, %v3487
        %v3546 = vmul.f32 %v3386, %v3489
        %v3547 = vmul.f32 %v3387, %v3491
        %v3548 = vmul.f32 %v3388, %v3493
        %v3549 = vmul.f32 %v3389, %v3495
        %v3550 = vmul.f32 %v3390, %v3497
        %v3551 = vmul.f32 %v3391, %v3499
        %v3552 = vmul.f32 %v3392, %v3501
        %v3553 = vmul.f32 %v3393, %v3503
        %v3554 = vmul.f32 %v3394, %v3505
        %v3555 = vmul.f32 %v3395, %v3507
        %v3556 = vmul.f32 %v3396, %v3509
        %v3557 = vmul.f32 %v3397, %v3511
        %v3558 = vmul.f32 %v3398, %v3513
        %v3559 = vmul.f32 %v3399, %v3515
        %v3560 = vmul.f32 %v3400, %v3517
        %v3561 = vmul.f32 %v3401, %v3519
        %v3562 = vmul.f32 %v3402, %v3521
        %v3563 = vmul.f32 %v3403, %v3523
        %v3564 = vmul.f32 %v3404, %v3525
        %v3565 = vmul.f32 %v3405, %v3527
        %v3566 = vmul.f32 %v3406, %v3529
        %v3567 = vmul.f32 %v3407, %v3531
        %v3568 = vmul.f32 %v3408, %v3533
        %v3569 = vmul.f32 %v3409, %v3535
        %v3570 = vmul.f32 %v3410, %v3537
        %v3571 = vmul.f32 %v3411, %v3539
        %v3572 = vsub.f32 1.0, %v3540
        %v3573 = vsub.f32 1.0, %v3541
        %v3574 = vsub.f32 1.0, %v3542
        %v3575 = vsub.f32 1.0, %v3543
        %v3576 = vsub.f32 1.0, %v3544
        %v3577 = vsub.f32 1.0, %v3545
        %v3578 = vsub.f32 1.0, %v3546
        %v3579 = vsub.f32 1.0, %v3547
        %v3580 = vsub.f32 1.0, %v3548
        %v3581 = vsub.f32 1.0, %v3549
        %v3582 = vsub.f32 1.0, %v3550
        %v3583 = vsub.f32 1.0, %v3551
        %v3584 = vsub.f32 1.0, %v3552
        %v3585 = vsub.f32 1.0, %v3553
        %v3586 = vsub.f32 1.0, %v3554
        %v3587 = vsub.f32 1.0, %v3555
        %v3588 = vsub.f32 1.0, %v3556
        %v3589 = vsub.f32 1.0, %v3557
        %v3590 = vsub.f32 1.0, %v3558
        %v3591 = vsub.f32 1.0, %v3559
        %v3592 = vsub.f32 1.0, %v3560
        %v3593 = vsub.f32 1.0, %v3561
        %v3594 = vsub.f32 1.0, %v3562
        %v3595 = vsub.f32 1.0, %v3563
        %v3596 = vsub.f32 1.0, %v3564
        %v3597 = vsub.f32 1.0, %v3565
        %v3598 = vsub.f32 1.0, %v3566
        %v3599 = vsub.f32 1.0, %v3567
        %v3600 = vsub.f32 1.0, %v3568
        %v3601 = vsub.f32 1.0, %v3569
        %v3602 = vsub.f32 1.0, %v3570
        %v3603 = vsub.f32 1.0, %v3571
        %vm3604 = vcmp.lt.f32.partialorder %v2932, 0.0
        %vm3605 = vcmp.lt.f32.partialorder %v2933, 0.0
        %vm3606 = vcmp.lt.f32.partialorder %v2934, 0.0
        %vm3607 = vcmp.lt.f32.partialorder %v2935, 0.0
        %vm3608 = vcmp.lt.f32.partialorder %v2936, 0.0
        %vm3609 = vcmp.lt.f32.partialorder %v2937, 0.0
        %vm3610 = vcmp.lt.f32.partialorder %v2938, 0.0
        %vm3611 = vcmp.lt.f32.partialorder %v2939, 0.0
        %vm3612 = vcmp.lt.f32.partialorder %v2940, 0.0
        %vm3613 = vcmp.lt.f32.partialorder %v2941, 0.0
        %vm3614 = vcmp.lt.f32.partialorder %v2942, 0.0
        %vm3615 = vcmp.lt.f32.partialorder %v2943, 0.0
        %vm3616 = vcmp.lt.f32.partialorder %v2944, 0.0
        %vm3617 = vcmp.lt.f32.partialorder %v2945, 0.0
        %vm3618 = vcmp.lt.f32.partialorder %v2946, 0.0
        %vm3619 = vcmp.lt.f32.partialorder %v2947, 0.0
        %vm3620 = vcmp.lt.f32.partialorder %v2948, 0.0
        %vm3621 = vcmp.lt.f32.partialorder %v2949, 0.0
        %vm3622 = vcmp.lt.f32.partialorder %v2950, 0.0
        %vm3623 = vcmp.lt.f32.partialorder %v2951, 0.0
        %vm3624 = vcmp.lt.f32.partialorder %v2952, 0.0
        %vm3625 = vcmp.lt.f32.partialorder %v2953, 0.0
        %vm3626 = vcmp.lt.f32.partialorder %v2954, 0.0
        %vm3627 = vcmp.lt.f32.partialorder %v2955, 0.0
        %vm3628 = vcmp.lt.f32.partialorder %v2956, 0.0
        %vm3629 = vcmp.lt.f32.partialorder %v2957, 0.0
        %vm3630 = vcmp.lt.f32.partialorder %v2958, 0.0
        %vm3631 = vcmp.lt.f32.partialorder %v2959, 0.0
        %vm3632 = vcmp.lt.f32.partialorder %v2960, 0.0
        %vm3633 = vcmp.lt.f32.partialorder %v2961, 0.0
        %vm3634 = vcmp.lt.f32.partialorder %v2962, 0.0
        %vm3635 = vcmp.lt.f32.partialorder %v2963, 0.0
        %v3636 = vsub.f32 0.0, %v3572
        %v3637 = vsub.f32 0.0, %v3573
        %v3638 = vsub.f32 0.0, %v3574
        %v3639 = vsub.f32 0.0, %v3575
        %v3640 = vsub.f32 0.0, %v3576
        %v3641 = vsub.f32 0.0, %v3577
        %v3642 = vsub.f32 0.0, %v3578
        %v3643 = vsub.f32 0.0, %v3579
        %v3644 = vsub.f32 0.0, %v3580
        %v3645 = vsub.f32 0.0, %v3581
        %v3646 = vsub.f32 0.0, %v3582
        %v3647 = vsub.f32 0.0, %v3583
        %v3648 = vsub.f32 0.0, %v3584
        %v3649 = vsub.f32 0.0, %v3585
        %v3650 = vsub.f32 0.0, %v3586
        %v3651 = vsub.f32 0.0, %v3587
        %v3652 = vsub.f32 0.0, %v3588
        %v3653 = vsub.f32 0.0, %v3589
        %v3654 = vsub.f32 0.0, %v3590
        %v3655 = vsub.f32 0.0, %v3591
        %v3656 = vsub.f32 0.0, %v3592
        %v3657 = vsub.f32 0.0, %v3593
        %v3658 = vsub.f32 0.0, %v3594
        %v3659 = vsub.f32 0.0, %v3595
        %v3660 = vsub.f32 0.0, %v3596
        %v3661 = vsub.f32 0.0, %v3597
        %v3662 = vsub.f32 0.0, %v3598
        %v3663 = vsub.f32 0.0, %v3599
        %v3664 = vsub.f32 0.0, %v3600
        %v3665 = vsub.f32 0.0, %v3601
        %v3666 = vsub.f32 0.0, %v3602
        %v3667 = vsub.f32 0.0, %v3603
        %v3668 = vsel %vm3604, %v3636, %v3572
        %v3669 = vsel %vm3605, %v3637, %v3573
        %v3670 = vsel %vm3606, %v3638, %v3574
        %v3671 = vsel %vm3607, %v3639, %v3575
        %v3672 = vsel %vm3608, %v3640, %v3576
        %v3673 = vsel %vm3609, %v3641, %v3577
        %v3674 = vsel %vm3610, %v3642, %v3578
        %v3675 = vsel %vm3611, %v3643, %v3579
        %v3676 = vsel %vm3612, %v3644, %v3580
        %v3677 = vsel %vm3613, %v3645, %v3581
        %v3678 = vsel %vm3614, %v3646, %v3582
        %v3679 = vsel %vm3615, %v3647, %v3583
        %v3680 = vsel %vm3616, %v3648, %v3584
        %v3681 = vsel %vm3617, %v3649, %v3585
        %v3682 = vsel %vm3618, %v3650, %v3586
        %v3683 = vsel %vm3619, %v3651, %v3587
        %v3684 = vsel %vm3620, %v3652, %v3588
        %v3685 = vsel %vm3621, %v3653, %v3589
        %v3686 = vsel %vm3622, %v3654, %v3590
        %v3687 = vsel %vm3623, %v3655, %v3591
        %v3688 = vsel %vm3624, %v3656, %v3592
        %v3689 = vsel %vm3625, %v3657, %v3593
        %v3690 = vsel %vm3626, %v3658, %v3594
        %v3691 = vsel %vm3627, %v3659, %v3595
        %v3692 = vsel %vm3628, %v3660, %v3596
        %v3693 = vsel %vm3629, %v3661, %v3597
        %v3694 = vsel %vm3630, %v3662, %v3598
        %v3695 = vsel %vm3631, %v3663, %v3599
        %v3696 = vsel %vm3632, %v3664, %v3600
        %v3697 = vsel %vm3633, %v3665, %v3601
        %v3698 = vsel %vm3634, %v3666, %v3602
        %v3699 = vsel %vm3635, %v3667, %v3603
        %v3700 = vadd.f32 %v3668, 1.0
        %v3701 = vadd.f32 %v3669, 1.0
        %v3702 = vadd.f32 %v3670, 1.0
        %v3703 = vadd.f32 %v3671, 1.0
        %v3704 = vadd.f32 %v3672, 1.0
        %v3705 = vadd.f32 %v3673, 1.0
        %v3706 = vadd.f32 %v3674, 1.0
        %v3707 = vadd.f32 %v3675, 1.0
        %v3708 = vadd.f32 %v3676, 1.0
        %v3709 = vadd.f32 %v3677, 1.0
        %v3710 = vadd.f32 %v3678, 1.0
        %v3711 = vadd.f32 %v3679, 1.0
        %v3712 = vadd.f32 %v3680, 1.0
        %v3713 = vadd.f32 %v3681, 1.0
        %v3714 = vadd.f32 %v3682, 1.0
        %v3715 = vadd.f32 %v3683, 1.0
        %v3716 = vadd.f32 %v3684, 1.0
        %v3717 = vadd.f32 %v3685, 1.0
        %v3718 = vadd.f32 %v3686, 1.0
        %v3719 = vadd.f32 %v3687, 1.0
        %v3720 = vadd.f32 %v3688, 1.0
        %v3721 = vadd.f32 %v3689, 1.0
        %v3722 = vadd.f32 %v3690, 1.0
        %v3723 = vadd.f32 %v3691, 1.0
        %v3724 = vadd.f32 %v3692, 1.0
        %v3725 = vadd.f32 %v3693, 1.0
        %v3726 = vadd.f32 %v3694, 1.0
        %v3727 = vadd.f32 %v3695, 1.0
        %v3728 = vadd.f32 %v3696, 1.0
        %v3729 = vadd.f32 %v3697, 1.0
        %v3730 = vadd.f32 %v3698, 1.0
        %v3731 = vadd.f32 %v3699, 1.0
        %v3732 = vmul.f32 %v2900, %v3700
        %v3733 = vmul.f32 %v2901, %v3701
        %v3734 = vmul.f32 %v2902, %v3702
        %v3735 = vmul.f32 %v2903, %v3703
        %v3736 = vmul.f32 %v2904, %v3704
        %v3737 = vmul.f32 %v2905, %v3705
        %v3738 = vmul.f32 %v2906, %v3706
        %v3739 = vmul.f32 %v2907, %v3707
        %v3740 = vmul.f32 %v2908, %v3708
        %v3741 = vmul.f32 %v2909, %v3709
        %v3742 = vmul.f32 %v2910, %v3710
        %v3743 = vmul.f32 %v2911, %v3711
        %v3744 = vmul.f32 %v2912, %v3712
        %v3745 = vmul.f32 %v2913, %v3713
        %v3746 = vmul.f32 %v2914, %v3714
        %v3747 = vmul.f32 %v2915, %v3715
        %v3748 = vmul.f32 %v2916, %v3716
        %v3749 = vmul.f32 %v2917, %v3717
        %v3750 = vmul.f32 %v2918, %v3718
        %v3751 = vmul.f32 %v2919, %v3719
        %v3752 = vmul.f32 %v2920, %v3720
        %v3753 = vmul.f32 %v2921, %v3721
        %v3754 = vmul.f32 %v2922, %v3722
        %v3755 = vmul.f32 %v2923, %v3723
        %v3756 = vmul.f32 %v2924, %v3724
        %v3757 = vmul.f32 %v2925, %v3725
        %v3758 = vmul.f32 %v2926, %v3726
        %v3759 = vmul.f32 %v2927, %v3727
        %v3760 = vmul.f32 %v2928, %v3728
        %v3761 = vmul.f32 %v2929, %v3729
        %v3762 = vmul.f32 %v2930, %v3730
        %v3763 = vmul.f32 %v2931, %v3731
        %v3764 = vpack.c.bf16 %v3734, %v3732
        %v3765 = vpack.c.bf16 %v3735, %v3733
        %v3766 = vpack.c.bf16 %v3738, %v3736
        %v3767 = vpack.c.bf16 %v3739, %v3737
        %v3768 = vpack.c.bf16 %v3742, %v3740
        %v3769 = vpack.c.bf16 %v3743, %v3741
        %v3770 = vpack.c.bf16 %v3746, %v3744
        %v3771 = vpack.c.bf16 %v3747, %v3745
        %v3772 = vpack.c.bf16 %v3750, %v3748
        %v3773 = vpack.c.bf16 %v3751, %v3749
        %v3774 = vpack.c.bf16 %v3754, %v3752
        %v3775 = vpack.c.bf16 %v3755, %v3753
        %v3776 = vpack.c.bf16 %v3758, %v3756
        %v3777 = vpack.c.bf16 %v3759, %v3757
        %v3778 = vpack.c.bf16 %v3762, %v3760
        %v3779 = vpack.c.bf16 %v3763, %v3761
        %v3780 = vld [vmem:[%s403] sm:$0xf]
        %v3781 = vld [vmem:[%s403 + $0x4] sm:$0xf]
        %v3782 = vld [vmem:[%s403 + $0x8] sm:$0xf]
        %v3783 = vld [vmem:[%s403 + $0xc] sm:$0xf]
        %v3784 = vld [vmem:[%s403 + $0x10] sm:$0xf]
        %v3785 = vld [vmem:[%s403 + $0x14] sm:$0xf]
        %v3786 = vld [vmem:[%s403 + $0x18] sm:$0xf]
        %v3787 = vld [vmem:[%s403 + $0x1c] sm:$0xf]
        %v3788 = vld [vmem:[%s403 + $0x20] sm:$0xf]
        %v3789 = vld [vmem:[%s403 + $0x24] sm:$0xf]
        %v3790 = vld [vmem:[%s403 + $0x28] sm:$0xf]
        %v3791 = vld [vmem:[%s403 + $0x2c] sm:$0xf]
        %v3792 = vld [vmem:[%s403 + $0x30] sm:$0xf]
        %v3793 = vld [vmem:[%s403 + $0x34] sm:$0xf]
        %v3794 = vld [vmem:[%s403 + $0x38] sm:$0xf]
        %v3795 = vld [vmem:[%s403 + $0x3c] sm:$0xf]
        %v3796 = vld [vmem:[%s403 + $0x40] sm:$0xf]
        %v3797 = vld [vmem:[%s403 + $0x44] sm:$0xf]
        %v3798 = vld [vmem:[%s403 + $0x48] sm:$0xf]
        %v3799 = vld [vmem:[%s403 + $0x4c] sm:$0xf]
        %v3800 = vld [vmem:[%s403 + $0x50] sm:$0xf]
        %v3801 = vld [vmem:[%s403 + $0x54] sm:$0xf]
        %v3802 = vld [vmem:[%s403 + $0x58] sm:$0xf]
        %v3803 = vld [vmem:[%s403 + $0x5c] sm:$0xf]
        %v3804 = vld [vmem:[%s403 + $0x60] sm:$0xf]
        %v3805 = vld [vmem:[%s403 + $0x64] sm:$0xf]
        %v3806 = vld [vmem:[%s403 + $0x68] sm:$0xf]
        %v3807 = vld [vmem:[%s403 + $0x6c] sm:$0xf]
        %v3808 = vld [vmem:[%s403 + $0x70] sm:$0xf]
        %v3809 = vld [vmem:[%s403 + $0x74] sm:$0xf]
        %v3810 = vld [vmem:[%s403 + $0x78] sm:$0xf]
        %v3811 = vld [vmem:[%s403 + $0x7c] sm:$0xf]
        %v3812 = vlaneseq
        %v3813 = vshrl.u32 %v3812, 7
        %v3814 = vsub.s32 4, %v3813
        %v3815 = vrot.slane %v527, %v3814
        %v3848 = vunpack.c.l.b16 %v3780
        %v3849 = vunpack.c.l.b16 %v3781
        %v3850 = vunpack.c.l.b16 %v3782
        %v3851 = vunpack.c.l.b16 %v3783
        %v3852 = vunpack.c.l.b16 %v3784
        %v3853 = vunpack.c.l.b16 %v3785
        %v3854 = vunpack.c.l.b16 %v3786
        %v3855 = vunpack.c.l.b16 %v3787
        %v3856 = vunpack.c.l.b16 %v3788
        %v3857 = vunpack.c.l.b16 %v3789
        %v3858 = vunpack.c.l.b16 %v3790
        %v3859 = vunpack.c.l.b16 %v3791
        %v3860 = vunpack.c.l.b16 %v3792
        %v3861 = vunpack.c.l.b16 %v3793
        %v3862 = vunpack.c.l.b16 %v3794
        %v3863 = vunpack.c.l.b16 %v3795
        %v3864 = vunpack.c.l.b16 %v3796
        %v3865 = vunpack.c.l.b16 %v3797
        %v3866 = vunpack.c.l.b16 %v3798
        %v3867 = vunpack.c.l.b16 %v3799
        %v3868 = vunpack.c.l.b16 %v3800
        %v3869 = vunpack.c.l.b16 %v3801
        %v3870 = vunpack.c.l.b16 %v3802
        %v3871 = vunpack.c.l.b16 %v3803
        %v3872 = vunpack.c.l.b16 %v3804
        %v3873 = vunpack.c.l.b16 %v3805
        %v3874 = vunpack.c.l.b16 %v3806
        %v3875 = vunpack.c.l.b16 %v3807
        %v3876 = vunpack.c.l.b16 %v3808
        %v3877 = vunpack.c.l.b16 %v3809
        %v3878 = vunpack.c.l.b16 %v3810
        %v3879 = vunpack.c.l.b16 %v3811
        %v3880 = vpack.c.b16 %v3849, %v3848
        %v3881 = vpack.c.b16 %v3851, %v3850
        %v3882 = vpack.c.b16 %v3853, %v3852
        %v3883 = vpack.c.b16 %v3855, %v3854
        %v3884 = vpack.c.b16 %v3857, %v3856
        %v3885 = vpack.c.b16 %v3859, %v3858
        %v3886 = vpack.c.b16 %v3861, %v3860
        %v3887 = vpack.c.b16 %v3863, %v3862
        %v3888 = vpack.c.b16 %v3865, %v3864
        %v3889 = vpack.c.b16 %v3867, %v3866
        %v3890 = vpack.c.b16 %v3869, %v3868
        %v3891 = vpack.c.b16 %v3871, %v3870
        %v3892 = vpack.c.b16 %v3873, %v3872
        %v3893 = vpack.c.b16 %v3875, %v3874
        %v3894 = vpack.c.b16 %v3877, %v3876
        %v3895 = vpack.c.b16 %v3879, %v3878
        %3912 = vmatprep.subr.bf16.mxu0 0
        %3913 = vmatpush1.bf16.msra.mxu0 %v3880
        %3914 = vmatprep.subr.bf16.mxu0 0
        %3915 = vmatpush1.bf16.msra.mxu0 %v3881
        %3916 = vmatprep.subr.bf16.mxu0 0
        %3917 = vmatpush1.bf16.msra.mxu0 %v3882
        %3918 = vmatprep.subr.bf16.mxu0 0
        %3919 = vmatpush1.bf16.msra.mxu0 %v3883
        %3920 = vmatprep.subr.bf16.mxu0 0
        %3921 = vmatpush1.bf16.msra.mxu0 %v3884
        %3922 = vmatprep.subr.bf16.mxu0 0
        %3923 = vmatpush1.bf16.msra.mxu0 %v3885
        %3924 = vmatprep.subr.bf16.mxu0 0
        %3925 = vmatpush1.bf16.msra.mxu0 %v3886
        %3926 = vmatprep.subr.bf16.mxu0 0
        %3927 = vmatpush1.bf16.msra.mxu0 %v3887
        %3928 = vmatprep.subr.bf16.mxu0 0
        %3929 = vmatpush1.bf16.msra.mxu0 %v3888
        %3930 = vmatprep.subr.bf16.mxu0 0
        %3931 = vmatpush1.bf16.msra.mxu0 %v3889
        %3932 = vmatprep.subr.bf16.mxu0 0
        %3933 = vmatpush1.bf16.msra.mxu0 %v3890
        %3934 = vmatprep.subr.bf16.mxu0 0
        %3935 = vmatpush1.bf16.msra.mxu0 %v3891
        %3936 = vmatprep.subr.bf16.mxu0 0
        %3937 = vmatpush1.bf16.msra.mxu0 %v3892
        %3938 = vmatprep.subr.bf16.mxu0 0
        %3939 = vmatpush1.bf16.msra.mxu0 %v3893
        %3940 = vmatprep.subr.bf16.mxu0 0
        %3941 = vmatpush1.bf16.msra.mxu0 %v3894
        %3942 = vmatprep.subr.bf16.mxu0 0
        %3943 = vmatpush1.bf16.msra.mxu0 %v3895
        %3944 = vmatprep.mubr.bf16.mxu0 %v3765
        %3945 = vmatmul.mubr.bf16.gmra.mrb[0].mxu0 %v3764
        %v3946 = vpop.f32.mrb[0].mxu0
        %v3947 = vadd.f32 %v3815, %v3946
        %v3948 = vpop.f32.mrb[0].mxu0
        %v3949 = vpop.f32.mrb[0].mxu0
        %v3950 = vadd.f32 %v3815, %v3949
        %v3951 = vpop.f32.mrb[0].mxu0
        %3952 = vmatprep.mubr.bf16.mxu0 %v3767
        %3953 = vmatmul.mubr.bf16.gmra.mrb[0].mxu0 %v3766
        %v3954 = vpop.f32.mrb[0].mxu0
        %v3955 = vadd.f32 %v3815, %v3954
        %v3956 = vpop.f32.mrb[0].mxu0
        %v3957 = vpop.f32.mrb[0].mxu0
        %v3958 = vadd.f32 %v3815, %v3957
        %v3959 = vpop.f32.mrb[0].mxu0
        %3960 = vmatprep.mubr.bf16.mxu0 %v3769
        %3961 = vmatmul.mubr.bf16.gmra.mrb[0].mxu0 %v3768
        %v3962 = vpop.f32.mrb[0].mxu0
        %v3963 = vadd.f32 %v3815, %v3962
        %v3964 = vpop.f32.mrb[0].mxu0
        %v3965 = vpop.f32.mrb[0].mxu0
        %v3966 = vadd.f32 %v3815, %v3965
        %v3967 = vpop.f32.mrb[0].mxu0
        %3968 = vmatprep.mubr.bf16.mxu0 %v3771
        %3969 = vmatmul.mubr.bf16.gmra.mrb[0].mxu0 %v3770
        %v3970 = vpop.f32.mrb[0].mxu0
        %v3971 = vadd.f32 %v3815, %v3970
        %v3972 = vpop.f32.mrb[0].mxu0
        %v3973 = vpop.f32.mrb[0].mxu0
        %v3974 = vadd.f32 %v3815, %v3973
        %v3975 = vpop.f32.mrb[0].mxu0
        %3976 = vmatprep.mubr.bf16.mxu0 %v3773
        %3977 = vmatmul.mubr.bf16.gmra.mrb[0].mxu0 %v3772
        %v3978 = vpop.f32.mrb[0].mxu0
        %v3979 = vadd.f32 %v3815, %v3978
        %v3980 = vpop.f32.mrb[0].mxu0
        %v3981 = vpop.f32.mrb[0].mxu0
        %v3982 = vadd.f32 %v3815, %v3981
        %v3983 = vpop.f32.mrb[0].mxu0
        %3984 = vmatprep.mubr.bf16.mxu0 %v3775
        %3985 = vmatmul.mubr.bf16.gmra.mrb[0].mxu0 %v3774
        %v3986 = vpop.f32.mrb[0].mxu0
        %v3987 = vadd.f32 %v3815, %v3986
        %v3988 = vpop.f32.mrb[0].mxu0
        %v3989 = vpop.f32.mrb[0].mxu0
        %v3990 = vadd.f32 %v3815, %v3989
        %v3991 = vpop.f32.mrb[0].mxu0
        %3992 = vmatprep.mubr.bf16.mxu0 %v3777
        %3993 = vmatmul.mubr.bf16.gmra.mrb[0].mxu0 %v3776
        %v3994 = vpop.f32.mrb[0].mxu0
        %v3995 = vadd.f32 %v3815, %v3994
        %v3996 = vpop.f32.mrb[0].mxu0
        %v3997 = vpop.f32.mrb[0].mxu0
        %v3998 = vadd.f32 %v3815, %v3997
        %v3999 = vpop.f32.mrb[0].mxu0
        %4000 = vmatprep.mubr.bf16.mxu0 %v3779
        %4001 = vmatmul.mubr.bf16.gmra.mrb[0].mxu0 %v3778
        %v4002 = vpop.f32.mrb[0].mxu0
        %v4003 = vadd.f32 %v3815, %v4002
        %v4004 = vpop.f32.mrb[0].mxu0
        %v4005 = vpop.f32.mrb[0].mxu0
        %v4006 = vadd.f32 %v3815, %v4005
        %v4007 = vpop.f32.mrb[0].mxu0
        %4008 = vdwg.mxu0
        %4009 = vadd.xlane.f32.xlu0 %v3947
        %v4010 = vpop.xlane.xlu0 %4009
        %4011 = vadd.xlane.f32.xlu0 %v3950
        %v4012 = vpop.xlane.xlu0 %4011
        %4013 = vadd.xlane.f32.xlu0 %v3955
        %v4014 = vpop.xlane.xlu0 %4013
        %4015 = vadd.xlane.f32.xlu0 %v3958
        %v4016 = vpop.xlane.xlu0 %4015
        %4017 = vadd.xlane.f32.xlu0 %v3963
        %v4018 = vpop.xlane.xlu0 %4017
        %4019 = vadd.xlane.f32.xlu0 %v3966
        %v4020 = vpop.xlane.xlu0 %4019
        %4021 = vadd.xlane.f32.xlu0 %v3971
        %v4022 = vpop.xlane.xlu0 %4021
        %4023 = vadd.xlane.f32.xlu0 %v3974
        %v4024 = vpop.xlane.xlu0 %4023
        %4025 = vadd.xlane.f32.xlu0 %v3979
        %v4026 = vpop.xlane.xlu0 %4025
        %4027 = vadd.xlane.f32.xlu0 %v3982
        %v4028 = vpop.xlane.xlu0 %4027
        %4029 = vadd.xlane.f32.xlu0 %v3987
        %v4030 = vpop.xlane.xlu0 %4029
        %4031 = vadd.xlane.f32.xlu0 %v3990
        %v4032 = vpop.xlane.xlu0 %4031
        %4033 = vadd.xlane.f32.xlu0 %v3995
        %v4034 = vpop.xlane.xlu0 %4033
        %4035 = vadd.xlane.f32.xlu0 %v3998
        %v4036 = vpop.xlane.xlu0 %4035
        %4037 = vadd.xlane.f32.xlu0 %v4003
        %v4038 = vpop.xlane.xlu0 %4037
        %4039 = vadd.xlane.f32.xlu0 %v4006
        %v4040 = vpop.xlane.xlu0 %4039
        %v4041 = vmul.f32 %v4010, %v2458
        %v4042 = vmul.f32 %v4012, %v2458
        %v4043 = vmul.f32 %v4014, %v2458
        %v4044 = vmul.f32 %v4016, %v2458
        %v4045 = vmul.f32 %v4018, %v2458
        %v4046 = vmul.f32 %v4020, %v2458
        %v4047 = vmul.f32 %v4022, %v2458
        %v4048 = vmul.f32 %v4024, %v2458
        %v4049 = vmul.f32 %v4026, %v2458
        %v4050 = vmul.f32 %v4028, %v2458
        %v4051 = vmul.f32 %v4030, %v2458
        %v4052 = vmul.f32 %v4032, %v2458
        %v4053 = vmul.f32 %v4034, %v2458
        %v4054 = vmul.f32 %v4036, %v2458
        %v4055 = vmul.f32 %v4038, %v2458
        %v4056 = vmul.f32 %v4040, %v2458
        %v4057 = vsub.f32 %v3947, %v4041
        %v4058 = vsub.f32 %v3950, %v4042
        %v4059 = vsub.f32 %v3955, %v4043
        %v4060 = vsub.f32 %v3958, %v4044
        %v4061 = vsub.f32 %v3963, %v4045
        %v4062 = vsub.f32 %v3966, %v4046
        %v4063 = vsub.f32 %v3971, %v4047
        %v4064 = vsub.f32 %v3974, %v4048
        %v4065 = vsub.f32 %v3979, %v4049
        %v4066 = vsub.f32 %v3982, %v4050
        %v4067 = vsub.f32 %v3987, %v4051
        %v4068 = vsub.f32 %v3990, %v4052
        %v4069 = vsub.f32 %v3995, %v4053
        %v4070 = vsub.f32 %v3998, %v4054
        %v4071 = vsub.f32 %v4003, %v4055
        %v4072 = vsub.f32 %v4006, %v4056
        %v4073 = vmul.f32 %v4057, %v4057
        %v4074 = vmul.f32 %v4058, %v4058
        %v4075 = vmul.f32 %v4059, %v4059
        %v4076 = vmul.f32 %v4060, %v4060
        %v4077 = vmul.f32 %v4061, %v4061
        %v4078 = vmul.f32 %v4062, %v4062
        %v4079 = vmul.f32 %v4063, %v4063
        %v4080 = vmul.f32 %v4064, %v4064
        %v4081 = vmul.f32 %v4065, %v4065
        %v4082 = vmul.f32 %v4066, %v4066
        %v4083 = vmul.f32 %v4067, %v4067
        %v4084 = vmul.f32 %v4068, %v4068
        %v4085 = vmul.f32 %v4069, %v4069
        %v4086 = vmul.f32 %v4070, %v4070
        %v4087 = vmul.f32 %v4071, %v4071
        %v4088 = vmul.f32 %v4072, %v4072
        %4089 = vadd.xlane.f32.xlu0 %v4073
        %v4090 = vpop.xlane.xlu0 %4089
        %4091 = vadd.xlane.f32.xlu0 %v4074
        %v4092 = vpop.xlane.xlu0 %4091
        %4093 = vadd.xlane.f32.xlu0 %v4075
        %v4094 = vpop.xlane.xlu0 %4093
        %4095 = vadd.xlane.f32.xlu0 %v4076
        %v4096 = vpop.xlane.xlu0 %4095
        %4097 = vadd.xlane.f32.xlu0 %v4077
        %v4098 = vpop.xlane.xlu0 %4097
        %4099 = vadd.xlane.f32.xlu0 %v4078
        %v4100 = vpop.xlane.xlu0 %4099
        %4101 = vadd.xlane.f32.xlu0 %v4079
        %v4102 = vpop.xlane.xlu0 %4101
        %4103 = vadd.xlane.f32.xlu0 %v4080
        %v4104 = vpop.xlane.xlu0 %4103
        %4105 = vadd.xlane.f32.xlu0 %v4081
        %v4106 = vpop.xlane.xlu0 %4105
        %4107 = vadd.xlane.f32.xlu0 %v4082
        %v4108 = vpop.xlane.xlu0 %4107
        %4109 = vadd.xlane.f32.xlu0 %v4083
        %v4110 = vpop.xlane.xlu0 %4109
        %4111 = vadd.xlane.f32.xlu0 %v4084
        %v4112 = vpop.xlane.xlu0 %4111
        %4113 = vadd.xlane.f32.xlu0 %v4085
        %v4114 = vpop.xlane.xlu0 %4113
        %4115 = vadd.xlane.f32.xlu0 %v4086
        %v4116 = vpop.xlane.xlu0 %4115
        %4117 = vadd.xlane.f32.xlu0 %v4087
        %v4118 = vpop.xlane.xlu0 %4117
        %4119 = vadd.xlane.f32.xlu0 %v4088
        %v4120 = vpop.xlane.xlu0 %4119
        %v4121 = vmul.f32 %v4090, %v2458
        %v4122 = vmul.f32 %v4092, %v2458
        %v4123 = vmul.f32 %v4094, %v2458
        %v4124 = vmul.f32 %v4096, %v2458
        %v4125 = vmul.f32 %v4098, %v2458
        %v4126 = vmul.f32 %v4100, %v2458
        %v4127 = vmul.f32 %v4102, %v2458
        %v4128 = vmul.f32 %v4104, %v2458
        %v4129 = vmul.f32 %v4106, %v2458
        %v4130 = vmul.f32 %v4108, %v2458
        %v4131 = vmul.f32 %v4110, %v2458
        %v4132 = vmul.f32 %v4112, %v2458
        %v4133 = vmul.f32 %v4114, %v2458
        %v4134 = vmul.f32 %v4116, %v2458
        %v4135 = vmul.f32 %v4118, %v2458
        %v4136 = vmul.f32 %v4120, %v2458
        %v4137 = vadd.f32 %v4121, 1e-05
        %v4138 = vadd.f32 %v4122, 1e-05
        %v4139 = vadd.f32 %v4123, 1e-05
        %v4140 = vadd.f32 %v4124, 1e-05
        %v4141 = vadd.f32 %v4125, 1e-05
        %v4142 = vadd.f32 %v4126, 1e-05
        %v4143 = vadd.f32 %v4127, 1e-05
        %v4144 = vadd.f32 %v4128, 1e-05
        %v4145 = vadd.f32 %v4129, 1e-05
        %v4146 = vadd.f32 %v4130, 1e-05
        %v4147 = vadd.f32 %v4131, 1e-05
        %v4148 = vadd.f32 %v4132, 1e-05
        %v4149 = vadd.f32 %v4133, 1e-05
        %v4150 = vadd.f32 %v4134, 1e-05
        %v4151 = vadd.f32 %v4135, 1e-05
        %v4152 = vadd.f32 %v4136, 1e-05
        %v4153 = vrsqrt.pop %v4137
        %v4154 = vrsqrt.pop %v4138
        %v4155 = vrsqrt.pop %v4139
        %v4156 = vrsqrt.pop %v4140
        %v4157 = vrsqrt.pop %v4141
        %v4158 = vrsqrt.pop %v4142
        %v4159 = vrsqrt.pop %v4143
        %v4160 = vrsqrt.pop %v4144
        %v4161 = vrsqrt.pop %v4145
        %v4162 = vrsqrt.pop %v4146
        %v4163 = vrsqrt.pop %v4147
        %v4164 = vrsqrt.pop %v4148
        %v4165 = vrsqrt.pop %v4149
        %v4166 = vrsqrt.pop %v4150
        %v4167 = vrsqrt.pop %v4151
        %v4168 = vrsqrt.pop %v4152
        %v4169 = vmul.f32 %v4057, %v4153
        %v4170 = vmul.f32 %v4058, %v4154
        %v4171 = vmul.f32 %v4059, %v4155
        %v4172 = vmul.f32 %v4060, %v4156
        %v4173 = vmul.f32 %v4061, %v4157
        %v4174 = vmul.f32 %v4062, %v4158
        %v4175 = vmul.f32 %v4063, %v4159
        %v4176 = vmul.f32 %v4064, %v4160
        %v4177 = vmul.f32 %v4065, %v4161
        %v4178 = vmul.f32 %v4066, %v4162
        %v4179 = vmul.f32 %v4067, %v4163
        %v4180 = vmul.f32 %v4068, %v4164
        %v4181 = vmul.f32 %v4069, %v4165
        %v4182 = vmul.f32 %v4070, %v4166
        %v4183 = vmul.f32 %v4071, %v4167
        %v4184 = vmul.f32 %v4072, %v4168
        %v4185 = vlaneseq
        %v4186 = vshrl.u32 %v4185, 7
        %v4187 = vsub.s32 5, %v4186
        %v4188 = vrot.slane %v527, %v4187
        %v4189 = vmul.f32 %v4169, %v4188
        %v4190 = vmul.f32 %v4170, %v4188
        %v4191 = vmul.f32 %v4171, %v4188
        %v4192 = vmul.f32 %v4172, %v4188
        %v4193 = vmul.f32 %v4173, %v4188
        %v4194 = vmul.f32 %v4174, %v4188
        %v4195 = vmul.f32 %v4175, %v4188
        %v4196 = vmul.f32 %v4176, %v4188
        %v4197 = vmul.f32 %v4177, %v4188
        %v4198 = vmul.f32 %v4178, %v4188
        %v4199 = vmul.f32 %v4179, %v4188
        %v4200 = vmul.f32 %v4180, %v4188
        %v4201 = vmul.f32 %v4181, %v4188
        %v4202 = vmul.f32 %v4182, %v4188
        %v4203 = vmul.f32 %v4183, %v4188
        %v4204 = vmul.f32 %v4184, %v4188
        %v4205 = vlaneseq
        %v4206 = vshrl.u32 %v4205, 7
        %v4207 = vsub.s32 6, %v4206
        %v4208 = vrot.slane %v527, %v4207
        %v4209 = vadd.f32 %v4189, %v4208
        %v4210 = vadd.f32 %v4190, %v4208
        %v4211 = vadd.f32 %v4191, %v4208
        %v4212 = vadd.f32 %v4192, %v4208
        %v4213 = vadd.f32 %v4193, %v4208
        %v4214 = vadd.f32 %v4194, %v4208
        %v4215 = vadd.f32 %v4195, %v4208
        %v4216 = vadd.f32 %v4196, %v4208
        %v4217 = vadd.f32 %v4197, %v4208
        %v4218 = vadd.f32 %v4198, %v4208
        %v4219 = vadd.f32 %v4199, %v4208
        %v4220 = vadd.f32 %v4200, %v4208
        %v4221 = vadd.f32 %v4201, %v4208
        %v4222 = vadd.f32 %v4202, %v4208
        %v4223 = vadd.f32 %v4203, %v4208
        %v4224 = vadd.f32 %v4204, %v4208
        %v4225 = vadd.f32 %v4209, %v2659
        %v4226 = vadd.f32 %v4210, %v2660
        %v4227 = vadd.f32 %v4211, %v2661
        %v4228 = vadd.f32 %v4212, %v2662
        %v4229 = vadd.f32 %v4213, %v2663
        %v4230 = vadd.f32 %v4214, %v2664
        %v4231 = vadd.f32 %v4215, %v2665
        %v4232 = vadd.f32 %v4216, %v2666
        %v4233 = vadd.f32 %v4217, %v2667
        %v4234 = vadd.f32 %v4218, %v2668
        %v4235 = vadd.f32 %v4219, %v2669
        %v4236 = vadd.f32 %v4220, %v2670
        %v4237 = vadd.f32 %v4221, %v2671
        %v4238 = vadd.f32 %v4222, %v2672
        %v4239 = vadd.f32 %v4223, %v2673
        %v4240 = vadd.f32 %v4224, %v2674
        %4241 = vst [vmem:[#allocation12] sm:$0xff] %v4225
        %4242 = vst [vmem:[#allocation12 + $0x8] sm:$0xff] %v4226
        %4243 = vst [vmem:[#allocation12 + $0x10] sm:$0xff] %v4227
        %4244 = vst [vmem:[#allocation12 + $0x18] sm:$0xff] %v4228
        %4245 = vst [vmem:[#allocation12 + $0x20] sm:$0xff] %v4229
        %4246 = vst [vmem:[#allocation12 + $0x28] sm:$0xff] %v4230
        %4247 = vst [vmem:[#allocation12 + $0x30] sm:$0xff] %v4231
        %4248 = vst [vmem:[#allocation12 + $0x38] sm:$0xff] %v4232
        %4249 = vst [vmem:[#allocation12 + $0x40] sm:$0xff] %v4233
        %4250 = vst [vmem:[#allocation12 + $0x48] sm:$0xff] %v4234
        %4251 = vst [vmem:[#allocation12 + $0x50] sm:$0xff] %v4235
        %4252 = vst [vmem:[#allocation12 + $0x58] sm:$0xff] %v4236
        %4253 = vst [vmem:[#allocation12 + $0x60] sm:$0xff] %v4237
        %4254 = vst [vmem:[#allocation12 + $0x68] sm:$0xff] %v4238
        %4255 = vst [vmem:[#allocation12 + $0x70] sm:$0xff] %v4239
        %4256 = vst [vmem:[#allocation12 + $0x78] sm:$0xff] %v4240
        // Predicated region
        $region81: #{tpu_custom_call.1} parent=47 // pred_check
          %p4257 = pneg %p206
        $region82: #{tpu_custom_call.1} parent=47 // pred_check_branch
          %4259 = sbr.rel (%p4257) target = $region84
        $region83: #{tpu_custom_call.1} parent=47 // pred_region
          %s4261 = ssub.s32 2048, 2048
          %4262 = vsyncadd [#allocation4], %s4261
          %s4263 = sshll.u32 [#allocation12], 4
          %s4264 = int_to_ptr.vmem [resolvable:$true] %s4263
          %4269 = dma.vmem_to_hbm [thread:$0]  %s4264, 2048, %s7, [#allocation4], 128, 128, 8
        $region84: #{tpu_custom_call.1} parent=47 // pred_fallthru
          _
        // Predicated region
        $region85: #{tpu_custom_call.1} parent=47 // pred_check
          %p4270 = pneg %p206
        $region86: #{tpu_custom_call.1} parent=47 // pred_check_branch
          %4272 = sbr.rel (%p4270) target = $region88
        $region87: #{tpu_custom_call.1} parent=47 // pred_region
          %4273 = dma.done [#allocation4], 2048
        $region88: #{tpu_custom_call.1} parent=47 // pred_fallthru
          _
      $region48: #{tpu_custom_call.1} parent=5 // pred_fallthru
        _
      %p4274 = scmp.le.s32.totalorder 2, %s16
      // Predicated region
      $region89: #{tpu_custom_call.1} parent=5 // pred_check
        %p4275 = pneg %p4274
      $region90: #{tpu_custom_call.1} parent=5 // pred_check_branch
        %4277 = sbr.rel (%p4275) target = $region92
      $region91: #{tpu_custom_call.1} parent=5 // pred_region
        %s4278 = ssub.s32 %s16, 2
      $region92: #{tpu_custom_call.1} parent=5 // pred_fallthru
        _
    $region6: #{tpu_custom_call.1} parent=1 // loop_footer
      %s20 = sadd.s32 1, %s16
    $region7: #{tpu_custom_call.1} parent=1 // loop_footer_branch
      %15 = sbr.rel target = $region3
    $region8: #{tpu_custom_call.1} parent=1 // loop_exit
      _
    %4279 = vsyncpa [#allocation3], 1
    %s4280 = scalar_lea.sflag [#allocation3], 1
    %4281 = vsyncpa %s4280, 1
    %4282 = vsyncpa [#allocation6], 1
    %4283 = vsyncpa [#allocation4], 1
    %s4284 = scalar_lea.sflag [#allocation4], 1
    %4285 = vsyncpa %s4284, 1

</llo_original>
